<compile_context>
chip_gen: v6e
topology: v6e:2x2x1
jax: 0.10.0
libtpu: 0.0.40
codegen_flags: <defaults>
</compile_context>

<pallas_src>
import jax
import jax.numpy as jnp
from jax.experimental import pallas as pl
from jax.experimental.pallas import tpu as pltpu


# Logical layer dims of the torch model (in_features, out_features).
_LAYER_DIMS = [(784, 1024), (1024, 512), (512, 256), (256, 128), (128, 10)]
_NOUT_PAD = 128    # 10 padded to 128 so the output store is lane-dense
_TILE_M_MAX = 512  # keeps footprint well under 32 MiB VMEM on v5e/v6e/v7x


def _round_up(x, m):
    return (x + m - 1) // m * m


def _choose_tiling(B, tile_m_max=_TILE_M_MAX):
    """Return (tile_m, padded_batch).

    Batch rows are aligned to 16 (bf16 sublane packing). Small batches use a
    single exact tile (latency there is weight-DMA bound; splitting only adds
    per-step overhead). Larger batches pick the candidate tile that minimizes
    padded rows, preferring >=2 grid steps so v7x's two TensorCores both get
    work under dimension_semantics=("parallel",).
    """
    m16 = _round_up(B, 16)
    if m16 <= 256:
        return m16, m16
    cands = sorted({t for t in (128, 256, 512) if t <= tile_m_max})

    def score(t):
        b_pad = _round_up(m16, t)
        steps = b_pad // t
        return (b_pad, 0 if steps >= 2 else 1, -t)

    tile = min(cands, key=score)
    return tile, _round_up(m16, tile)


def mlp_kernel(x_ref,
               w1_ref, b1_ref,
               w23_ref, b23_ref,
               w45_ref, b45_ref,
               out_ref):
    """Fused (folded) 3-matmul MLP on one (tile_m, 784) batch tile.

    Weights live fully in VMEM for the whole kernel; matmuls run on the MXU
    in bf16 with f32 accumulation; bias-add / ReLU run in f32 on the VPU.
    """
    wdt = w1_ref.dtype
    x = x_ref[...].astype(wdt)

    # Linear(784->1024) -> ReLU
    h = jnp.dot(x, w1_ref[...], preferred_element_type=jnp.float32) + b1_ref[...]
    h = jnp.maximum(h, 0.0)

    # Folded Linear(1024->512) @ Linear(512->256) -> ReLU
    h = jnp.dot(h.astype(wdt), w23_ref[...],
                preferred_element_type=jnp.float32) + b23_ref[...]
    h = jnp.maximum(h, 0.0)

    # Folded Linear(256->128) @ Linear(128->10), N zero-padded to 128 lanes
    y = jnp.dot(h.astype(wdt), w45_ref[...],
                preferred_element_type=jnp.float32) + b45_ref[...]
    out_ref[...] = y.astype(out_ref.dtype)


def init_params(key):
    """Deterministic synthetic init; biases kept 2D (1, out) for TPU layout."""
    params = {}
    for idx, (fin, fout) in enumerate(_LAYER_DIMS, start=1):
        key, kw, kb = jax.random.split(key, 3)
        scale = 1.0 / jnp.sqrt(jnp.float32(fin))
        params[f"w{idx}"] = jax.random.normal(kw, (fin, fout), jnp.float32) * scale
        params[f"b{idx}"] = jax.random.normal(kb, (1, fout), jnp.float32) * scale
    return params


def prepare_params(params, weight_dtype=jnp.bfloat16):
    """Fold the ReLU-free layer pairs, pad the classifier, cast to bf16.

    - W23 = w2 @ w3, b23 = b2 @ w3 + b3 (no ReLU between layers 2 and 3)
    - W45 = w4 @ w5, b45 = b4 @ w5 + b5 (no ReLU between layers 4 and 5)
    - folding done in f32, products cast to `weight_dtype` afterwards
    - W45/b45 zero-padded on N: 10 -> 128 (lane-dense output store)
    - biases stay f32
    """
    f32 = jnp.float32
    w1 = params["w1"].astype(f32)
    b1 = params["b1"].astype(f32)
    w23 = params["w2"].astype(f32) @ params["w3"].astype(f32)          # (1024, 256)
    b23 = params["b2"].astype(f32) @ params["w3"].astype(f32) + params["b3"].astype(f32)
    w45 = params["w4"].astype(f32) @ params["w5"].astype(f32)          # (256, 10)
    b45 = params["b4"].astype(f32) @ params["w5"].astype(f32) + params["b5"].astype(f32)

    w45p = jnp.zeros((256, _NOUT_PAD), f32).at[:, :10].set(w45)
    b45p = jnp.zeros((1, _NOUT_PAD), f32).at[:, :10].set(b45)

    return {
        "w1": w1.astype(weight_dtype), "b1": b1,
        "w23": w23.astype(weight_dtype), "b23": b23,
        "w45": w45p.astype(weight_dtype), "b45": b45p,
    }


def simple_model_forward(x, prepped, *, tile_m_max=_TILE_M_MAX):
    """x: (B, 1, 28, 28) or (B, 784). prepped: output of prepare_params()."""
    x2d = x.reshape(-1, 784).astype(jnp.float32)
    B = x2d.shape[0]

    tile_m, b_pad = _choose_tiling(B, tile_m_max)
    if b_pad != B:
        x_in = jnp.zeros((b_pad, 784), x2d.dtype).at[:B, :].set(x2d)
    else:
        x_in = x2d

    grid = (b_pad // tile_m,)

    def vmem_full():
        # Whole array resident in VMEM for the kernel's lifetime; no blocking,
        # no double buffering (index never changes across the grid).
        return pl.BlockSpec(memory_space=pltpu.MemorySpace.VMEM)

    weight_args = (prepped["w1"], prepped["b1"],
                   prepped["w23"], prepped["b23"],
                   prepped["w45"], prepped["b45"])

    flops = 2 * b_pad * (784 * 1024 + 1024 * 256 + 256 * _NOUT_PAD)
    bytes_accessed = (int(x_in.size) * x_in.dtype.itemsize
                      + sum(int(a.size) * a.dtype.itemsize for a in weight_args)
                      + b_pad * _NOUT_PAD * 4)

    grid_spec = pltpu.PrefetchScalarGridSpec(
        num_scalar_prefetch=0,
        grid=grid,
        in_specs=[
            # x tile: full 784 last dim (== array extent, so no 128-multiple
            # requirement), cast to bf16 inside the kernel.
            pl.BlockSpec((tile_m, 784), lambda i: (i, 0)),
            vmem_full(), vmem_full(),   # w1,  b1
            vmem_full(), vmem_full(),   # w23, b23
            vmem_full(), vmem_full(),   # w45, b45
        ],
        out_specs=pl.BlockSpec((tile_m, _NOUT_PAD), lambda i: (i, 0)),
    )

    out_padded = pl.pallas_call(
        mlp_kernel,
        out_shape=jax.ShapeDtypeStruct((b_pad, _NOUT_PAD), jnp.float32),
        grid_spec=grid_spec,
        compiler_params=pltpu.CompilerParams(
            dimension_semantics=("parallel",),
            # ~2.3 MiB bf16 weights (single copy) + double-buffered f32 x/out
            # tiles + f32 activation scratch: well under 32 MiB at tile_m<=512.
            vmem_limit_bytes=32 << 20,
        ),
        cost_estimate=pl.CostEstimate(
            flops=int(flops), transcendentals=0,
            bytes_accessed=int(bytes_accessed)),
    )(x_in, *weight_args)

    return out_padded[:B, :10]


def reference_forward(x, params):
    h = x.reshape(-1, 784)
    h = jnp.maximum(h @ params["w1"] + params["b1"], 0.0)
    h = h @ params["w2"] + params["b2"]
    h = jnp.maximum(h @ params["w3"] + params["b3"], 0.0)
    h = h @ params["w4"] + params["b4"]
    return h @ params["w5"] + params["b5"]


if __name__ == "__main__":
    key = jax.random.PRNGKey(0)
    key, kx = jax.random.split(key)
    # small MNIST-like batch: (B=8, C=1, H=28, W=28)
    x = jax.random.normal(kx, (8, 1, 28, 28), jnp.float32)
    params = init_params(key)
    prepped = prepare_params(params)          # folded + padded bf16 layout

    out = simple_model_forward(x, prepped)
    out = jax.block_until_ready(out)

    ref = reference_forward(x, params)        # f32 reference (unfolded, unpadded)
    assert out.shape == (8, 10)
    max_err = float(jnp.max(jnp.abs(out - ref)))
    # bf16 weights/activations (incl. folded products) vs the f32 reference.
    assert jnp.allclose(out, ref, atol=5e-2, rtol=5e-2), (
        f"mismatch vs JAX reference (max abs err={max_err})")
    print("KERNEL_OK")
</pallas_src>

<mosaic_0001>
module attributes {stable_mosaic.version = 11 : i64} {
  func.func @mlp_kernel(%arg0: i32, %arg1: memref<16x784xf32, #tpu.memory_space<vmem>>, %arg2: memref<784x1024xbf16, #tpu.memory_space<vmem>>, %arg3: memref<1x1024xf32, #tpu.memory_space<vmem>>, %arg4: memref<1024x256xbf16, #tpu.memory_space<vmem>>, %arg5: memref<1x256xf32, #tpu.memory_space<vmem>>, %arg6: memref<256x128xbf16, #tpu.memory_space<vmem>>, %arg7: memref<1x128xf32, #tpu.memory_space<vmem>>, %arg8: memref<16x128xf32, #tpu.memory_space<vmem>>) attributes {dimension_semantics = [#tpu.dimension_semantics<parallel>], iteration_bounds = array<i64: 1>, scalar_prefetch = 0 : i64, scratch_operands = 0 : i64, tpu.core_type = #tpu.core_type<tc>, window_params = [{transform_indices = @transform_0, window_bounds = array<i64: 16, 784>}, {pipeline_mode = #tpu.pipeline_mode<synchronous>, transform_indices = @transform_1, window_bounds = array<i64: 784, 1024>}, {pipeline_mode = #tpu.pipeline_mode<synchronous>, transform_indices = @transform_2, window_bounds = array<i64: 1, 1024>}, {pipeline_mode = #tpu.pipeline_mode<synchronous>, transform_indices = @transform_3, window_bounds = array<i64: 1024, 256>}, {pipeline_mode = #tpu.pipeline_mode<synchronous>, transform_indices = @transform_4, window_bounds = array<i64: 1, 256>}, {pipeline_mode = #tpu.pipeline_mode<synchronous>, transform_indices = @transform_5, window_bounds = array<i64: 256, 128>}, {pipeline_mode = #tpu.pipeline_mode<synchronous>, transform_indices = @transform_6, window_bounds = array<i64: 1, 128>}, {transform_indices = @transform_7, window_bounds = array<i64: 16, 128>}]} {
    %c0 = arith.constant 0 : index
    %c0_0 = arith.constant 0 : index
    %0 = vector.load %arg1[%c0, %c0_0] : memref<16x784xf32, #tpu.memory_space<vmem>>, vector<16x784xf32>
    %1 = arith.truncf %0 : vector<16x784xf32> to vector<16x784xbf16>
    %c0_1 = arith.constant 0 : index
    %c0_2 = arith.constant 0 : index
    %2 = vector.load %arg2[%c0_1, %c0_2] : memref<784x1024xbf16, #tpu.memory_space<vmem>>, vector<784x1024xbf16>
    %cst = arith.constant dense<0.000000e+00> : vector<16x1024xf32>
    %3 = tpu.matmul %1, %2, %cst {dimension_numbers = #tpu.dot_dimension_numbers<[1], [0], [0], [1], [0, 0, 1, 1], [], []>} : vector<16x784xbf16>, vector<784x1024xbf16>, vector<16x1024xf32> -> vector<16x1024xf32>
    %c0_3 = arith.constant 0 : index
    %c0_4 = arith.constant 0 : index
    %4 = vector.load %arg3[%c0_3, %c0_4] : memref<1x1024xf32, #tpu.memory_space<vmem>>, vector<1x1024xf32>
    %5 = vector.broadcast %4 : vector<1x1024xf32> to vector<16x1024xf32>
    %6 = arith.addf %3, %5 : vector<16x1024xf32>
    %cst_5 = arith.constant 0.000000e+00 : f32
    %7 = vector.broadcast %cst_5 : f32 to vector<16x1024xf32>
    %8 = arith.maximumf %6, %7 : vector<16x1024xf32>
    %9 = arith.truncf %8 : vector<16x1024xf32> to vector<16x1024xbf16>
    %c0_6 = arith.constant 0 : index
    %c0_7 = arith.constant 0 : index
    %10 = vector.load %arg4[%c0_6, %c0_7] : memref<1024x256xbf16, #tpu.memory_space<vmem>>, vector<1024x256xbf16>
    %cst_8 = arith.constant dense<0.000000e+00> : vector<16x256xf32>
    %11 = tpu.matmul %9, %10, %cst_8 {dimension_numbers = #tpu.dot_dimension_numbers<[1], [0], [0], [1], [0, 0, 1, 1], [], []>} : vector<16x1024xbf16>, vector<1024x256xbf16>, vector<16x256xf32> -> vector<16x256xf32>
    %c0_9 = arith.constant 0 : index
    %c0_10 = arith.constant 0 : index
    %12 = vector.load %arg5[%c0_9, %c0_10] : memref<1x256xf32, #tpu.memory_space<vmem>>, vector<1x256xf32>
    %13 = vector.broadcast %12 : vector<1x256xf32> to vector<16x256xf32>
    %14 = arith.addf %11, %13 : vector<16x256xf32>
    %cst_11 = arith.constant 0.000000e+00 : f32
    %15 = vector.broadcast %cst_11 : f32 to vector<16x256xf32>
    %16 = arith.maximumf %14, %15 : vector<16x256xf32>
    %17 = arith.truncf %16 : vector<16x256xf32> to vector<16x256xbf16>
    %c0_12 = arith.constant 0 : index
    %c0_13 = arith.constant 0 : index
    %18 = vector.load %arg6[%c0_12, %c0_13] : memref<256x128xbf16, #tpu.memory_space<vmem>>, vector<256x128xbf16>
    %cst_14 = arith.constant dense<0.000000e+00> : vector<16x128xf32>
    %19 = tpu.matmul %17, %18, %cst_14 {dimension_numbers = #tpu.dot_dimension_numbers<[1], [0], [0], [1], [0, 0, 1, 1], [], []>} : vector<16x256xbf16>, vector<256x128xbf16>, vector<16x128xf32> -> vector<16x128xf32>
    %c0_15 = arith.constant 0 : index
    %c0_16 = arith.constant 0 : index
    %20 = vector.load %arg7[%c0_15, %c0_16] : memref<1x128xf32, #tpu.memory_space<vmem>>, vector<1x128xf32>
    %21 = vector.broadcast %20 : vector<1x128xf32> to vector<16x128xf32>
    %22 = arith.addf %19, %21 : vector<16x128xf32>
    %c0_17 = arith.constant 0 : index
    %c0_18 = arith.constant 0 : index
    %23 = vector.load %arg8[%c0_17, %c0_18] : memref<16x128xf32, #tpu.memory_space<vmem>>, vector<16x128xf32>
    tpu.vector_store %arg8[%c0_17, %c0_18], %22 {strides = array<i32>} : memref<16x128xf32, #tpu.memory_space<vmem>>, vector<16x128xf32>,
    return
  }
  func.func @transform_0(%arg0: i32) -> (i32, i32) {
    %c0_i32 = arith.constant 0 : i32
    %c0_i32_0 = arith.constant 0 : i32
    return %arg0, %c0_i32 : i32, i32
  }
  func.func @transform_1(%arg0: i32) -> (i32, i32) {
    %c0_i32 = arith.constant 0 : i32
    %c0_i32_0 = arith.constant 0 : i32
    %c0_i32_1 = arith.constant 0 : i32
    return %c0_i32, %c0_i32_0 : i32, i32
  }
  func.func @transform_2(%arg0: i32) -> (i32, i32) {
    %c0_i32 = arith.constant 0 : i32
    %c0_i32_0 = arith.constant 0 : i32
    %c0_i32_1 = arith.constant 0 : i32
    return %c0_i32, %c0_i32_0 : i32, i32
  }
  func.func @transform_3(%arg0: i32) -> (i32, i32) {
    %c0_i32 = arith.constant 0 : i32
    %c0_i32_0 = arith.constant 0 : i32
    %c0_i32_1 = arith.constant 0 : i32
    return %c0_i32, %c0_i32_0 : i32, i32
  }
  func.func @transform_4(%arg0: i32) -> (i32, i32) {
    %c0_i32 = arith.constant 0 : i32
    %c0_i32_0 = arith.constant 0 : i32
    %c0_i32_1 = arith.constant 0 : i32
    return %c0_i32, %c0_i32_0 : i32, i32
  }
  func.func @transform_5(%arg0: i32) -> (i32, i32) {
    %c0_i32 = arith.constant 0 : i32
    %c0_i32_0 = arith.constant 0 : i32
    %c0_i32_1 = arith.constant 0 : i32
    return %c0_i32, %c0_i32_0 : i32, i32
  }
  func.func @transform_6(%arg0: i32) -> (i32, i32) {
    %c0_i32 = arith.constant 0 : i32
    %c0_i32_0 = arith.constant 0 : i32
    %c0_i32_1 = arith.constant 0 : i32
    return %c0_i32, %c0_i32_0 : i32, i32
  }
  func.func @transform_7(%arg0: i32) -> (i32, i32) {
    %c0_i32 = arith.constant 0 : i32
    %c0_i32_0 = arith.constant 0 : i32
    return %arg0, %c0_i32 : i32, i32
  }
}

</mosaic_0001>

<llo_original>
// kernel: tpu_custom_call.1
$region0: #{tpu_custom_call.1}
  #allocation0 [shape = 'u32[]', space=smem, size = 0x4, offset = 0x4, fixed_abs, tag = 'smem constant byte address 0x4 - core index']
  #allocation1 [shape = 'u32[144,128]{1,0:T(1,128)}', space=vmem, size = 0x12000, scoped, tag = 'internal scratch']
  %s0 = inlined_call_operand.hbm [shape: f32[16,784], index: 0, kind: input, shape index: {}]
  %s1 = inlined_call_operand.hbm [shape: bf16[784,1024], index: 1, kind: input, shape index: {}]
  %s2 = inlined_call_operand.hbm [shape: f32[1,1024], index: 2, kind: input, shape index: {}]
  %s3 = inlined_call_operand.hbm [shape: bf16[1024,256], index: 3, kind: input, shape index: {}]
  %s4 = inlined_call_operand.hbm [shape: f32[1,256], index: 4, kind: input, shape index: {}]
  %s5 = inlined_call_operand.hbm [shape: bf16[256,128], index: 5, kind: input, shape index: {}]
  %s6 = inlined_call_operand.hbm [shape: f32[1,128], index: 6, kind: input, shape index: {}]
  %s7 = inlined_call_operand.hbm [shape: f32[16,128], index: 7, kind: output, shape index: {}]
  %s8 = sld [smem:[#allocation0]]
  $region66: #{tpu_custom_call.1} parent=0
    _
  %s10 = ssub.s32 1, %s8
  %s11 = scalar_select 0, %s10, %s8
  $region1: #{tpu_custom_call.1} parent=0
    #allocation2 [shape = 'u8[57344]{0}', space=vmem, size = 0xe000, scoped, tag = 'input window, operand 0, single buffered']
    #allocation3 [shape = 's32[1]{0}', space=sflag, size = 0x4, scoped, tag = 'scoped memory for tpu_custom_call.1']
    #allocation4 [shape = 's32[1]{0}', space=sflag, size = 0x4, scoped, tag = 'scoped memory for tpu_custom_call.1']
    #allocation5 [shape = 'u8[1605632]{0}', space=vmem, size = 0x188000, scoped, tag = 'input window, operand 1, single buffered']
    #allocation6 [shape = 's32[1]{0}', space=sflag, size = 0x4, scoped, tag = 'scoped memory for tpu_custom_call.1']
    #allocation7 [shape = 'u8[4096]{0}', space=vmem, size = 0x1000, scoped, tag = 'input window, operand 2, single buffered']
    #allocation8 [shape = 'u8[524288]{0}', space=vmem, size = 0x80000, scoped, tag = 'input window, operand 3, single buffered']
    #allocation9 [shape = 's32[1]{0}', space=sflag, size = 0x4, scoped, tag = 'scoped memory for tpu_custom_call.1']
    #allocation10 [shape = 'u8[1024]{0}', space=vmem, size = 0x400, scoped, tag = 'input window, operand 4, single buffered']
    #allocation11 [shape = 'u8[65536]{0}', space=vmem, size = 0x10000, scoped, tag = 'input window, operand 5, single buffered']
    #allocation12 [shape = 's32[1]{0}', space=sflag, size = 0x4, scoped, tag = 'scoped memory for tpu_custom_call.1']
    #allocation13 [shape = 'u8[512]{0}', space=vmem, size = 0x400, scoped, tag = 'input window, operand 6, single buffered']
    #allocation14 [shape = 'u8[8192]{0}', space=vmem, size = 0x2000, scoped, tag = 'output window, operand 0, single buffered']
    %12 = vsyncpa [#allocation3], 0
    %13 = vsyncpa [#allocation6], 0
    %14 = vsyncpa [#allocation9], 0
    %15 = vsyncpa [#allocation12], 0
    %16 = vsyncpa [#allocation4], 0
    // Predicated region
    $region2: #{tpu_custom_call.1} parent=1 // pred_check
      _
    $region3: #{tpu_custom_call.1} parent=1 // pred_check_branch
      %18 = sbr.rel (0) target = $region5
    $region4: #{tpu_custom_call.1} parent=1 // pred_region
      %s20 = ssub.s32 1792, 1792
      %21 = vsyncadd [#allocation3], %s20
      %s22 = sshll.u32 [#allocation2], 4
      %s23 = int_to_ptr.vmem [resolvable:$true] %s22
      %28 = dma.hbm_to_vmem [thread:$0]  %s0, 1792, %s23, [#allocation3], 896, 896, 56
    $region5: #{tpu_custom_call.1} parent=1 // pred_fallthru
      _
    // Predicated region
    $region6: #{tpu_custom_call.1} parent=1 // pred_check
      _
    $region7: #{tpu_custom_call.1} parent=1 // pred_check_branch
      %30 = sbr.rel (0) target = $region9
    $region8: #{tpu_custom_call.1} parent=1 // pred_region
      %s32 = ssub.s32 50176, 50176
      %33 = vsyncadd [#allocation6], %s32
      %s34 = sshll.u32 [#allocation5], 4
      %s35 = int_to_ptr.vmem [resolvable:$true] %s34
      %40 = dma.hbm_to_vmem [thread:$0]  %s1, 50176, %s35, [#allocation6], 512, 512, 32
    $region9: #{tpu_custom_call.1} parent=1 // pred_fallthru
      _
    // Predicated region
    $region10: #{tpu_custom_call.1} parent=1 // pred_check
      _
    $region11: #{tpu_custom_call.1} parent=1 // pred_check_branch
      %42 = sbr.rel (0) target = $region13
    $region12: #{tpu_custom_call.1} parent=1 // pred_region
      %s44 = ssub.s32 128, 128
      %45 = vsyncadd [#allocation6], %s44
      %s47 = sshll.u32 [#allocation7], 4
      %s48 = int_to_ptr.vmem [resolvable:$true] %s47
      %50 = dma.hbm_to_vmem [thread:$0]  %s2, 128, %s48, [#allocation6]
    $region13: #{tpu_custom_call.1} parent=1 // pred_fallthru
      _
    // Predicated region
    $region14: #{tpu_custom_call.1} parent=1 // pred_check
      _
    $region15: #{tpu_custom_call.1} parent=1 // pred_check_branch
      %52 = sbr.rel (0) target = $region17
    $region16: #{tpu_custom_call.1} parent=1 // pred_region
      %s54 = ssub.s32 16384, 16384
      %55 = vsyncadd [#allocation9], %s54
      %s56 = sshll.u32 [#allocation8], 4
      %s57 = int_to_ptr.vmem [resolvable:$true] %s56
      %62 = dma.hbm_to_vmem [thread:$0]  %s3, 16384, %s57, [#allocation9], 128, 128, 8
    $region17: #{tpu_custom_call.1} parent=1 // pred_fallthru
      _
    // Predicated region
    $region18: #{tpu_custom_call.1} parent=1 // pred_check
      _
    $region19: #{tpu_custom_call.1} parent=1 // pred_check_branch
      %64 = sbr.rel (0) target = $region21
    $region20: #{tpu_custom_call.1} parent=1 // pred_region
      %s66 = ssub.s32 32, 32
      %67 = vsyncadd [#allocation9], %s66
      %s69 = sshll.u32 [#allocation10], 4
      %s70 = int_to_ptr.vmem [resolvable:$true] %s69
      %72 = dma.hbm_to_vmem [thread:$0]  %s4, 32, %s70, [#allocation9]
    $region21: #{tpu_custom_call.1} parent=1 // pred_fallthru
      _
    // Predicated region
    $region22: #{tpu_custom_call.1} parent=1 // pred_check
      _
    $region23: #{tpu_custom_call.1} parent=1 // pred_check_branch
      %74 = sbr.rel (0) target = $region25
    $region24: #{tpu_custom_call.1} parent=1 // pred_region
      %s76 = ssub.s32 2048, 2048
      %77 = vsyncadd [#allocation12], %s76
      %s78 = sshll.u32 [#allocation11], 4
      %s79 = int_to_ptr.vmem [resolvable:$true] %s78
      %84 = dma.hbm_to_vmem [thread:$0]  %s5, 2048, %s79, [#allocation12], 64, 64, 4
    $region25: #{tpu_custom_call.1} parent=1 // pred_fallthru
      _
    // Predicated region
    $region26: #{tpu_custom_call.1} parent=1 // pred_check
      _
    $region27: #{tpu_custom_call.1} parent=1 // pred_check_branch
      %86 = sbr.rel (0) target = $region29
    $region28: #{tpu_custom_call.1} parent=1 // pred_region
      %s88 = ssub.s32 16, 16
      %89 = vsyncadd [#allocation12], %s88
      %s91 = sshll.u32 [#allocation13], 4
      %s92 = int_to_ptr.vmem [resolvable:$true] %s91
      %94 = dma.hbm_to_vmem [thread:$0]  %s6, 16, %s92, [#allocation12]
    $region29: #{tpu_custom_call.1} parent=1 // pred_fallthru
      _
    // Predicated region
    $region30: #{tpu_custom_call.1} parent=1 // pred_check
      _
    $region31: #{tpu_custom_call.1} parent=1 // pred_check_branch
      %96 = sbr.rel (0) target = $region33
    $region32: #{tpu_custom_call.1} parent=1 // pred_region
      %97 = dma.done [#allocation3], 1792
    $region33: #{tpu_custom_call.1} parent=1 // pred_fallthru
      _
    // Predicated region
    $region34: #{tpu_custom_call.1} parent=1 // pred_check
      _
    $region35: #{tpu_custom_call.1} parent=1 // pred_check_branch
      %99 = sbr.rel (0) target = $region37
    $region36: #{tpu_custom_call.1} parent=1 // pred_region
      %100 = dma.done [#allocation6], 50176
    $region37: #{tpu_custom_call.1} parent=1 // pred_fallthru
      _
    // Predicated region
    $region38: #{tpu_custom_call.1} parent=1 // pred_check
      _
    $region39: #{tpu_custom_call.1} parent=1 // pred_check_branch
      %102 = sbr.rel (0) target = $region41
    $region40: #{tpu_custom_call.1} parent=1 // pred_region
      %103 = dma.done [#allocation6], 128
    $region41: #{tpu_custom_call.1} parent=1 // pred_fallthru
      _
    // Predicated region
    $region42: #{tpu_custom_call.1} parent=1 // pred_check
      _
    $region43: #{tpu_custom_call.1} parent=1 // pred_check_branch
      %105 = sbr.rel (0) target = $region45
    $region44: #{tpu_custom_call.1} parent=1 // pred_region
      %106 = dma.done [#allocation9], 16384
    $region45: #{tpu_custom_call.1} parent=1 // pred_fallthru
      _
    // Predicated region
    $region46: #{tpu_custom_call.1} parent=1 // pred_check
      _
    $region47: #{tpu_custom_call.1} parent=1 // pred_check_branch
      %108 = sbr.rel (0) target = $region49
    $region48: #{tpu_custom_call.1} parent=1 // pred_region
      %109 = dma.done [#allocation9], 32
    $region49: #{tpu_custom_call.1} parent=1 // pred_fallthru
      _
    // Predicated region
    $region50: #{tpu_custom_call.1} parent=1 // pred_check
      _
    $region51: #{tpu_custom_call.1} parent=1 // pred_check_branch
      %111 = sbr.rel (0) target = $region53
    $region52: #{tpu_custom_call.1} parent=1 // pred_region
      %112 = dma.done [#allocation12], 2048
    $region53: #{tpu_custom_call.1} parent=1 // pred_fallthru
      _
    // Predicated region
    $region54: #{tpu_custom_call.1} parent=1 // pred_check
      _
    $region55: #{tpu_custom_call.1} parent=1 // pred_check_branch
      %114 = sbr.rel (0) target = $region57
    $region56: #{tpu_custom_call.1} parent=1 // pred_region
      %115 = dma.done [#allocation12], 16
    $region57: #{tpu_custom_call.1} parent=1 // pred_fallthru
      _
    %v117 = vld [vmem:[#allocation2] sm:$0xff]
    %v118 = vld [vmem:[#allocation2 + $0x8] sm:$0xff]
    %v119 = vld [vmem:[#allocation2 + $0x10] sm:$0xff]
    %v120 = vld [vmem:[#allocation2 + $0x18] sm:$0xff]
    %v121 = vld [vmem:[#allocation2 + $0x20] sm:$0xff]
    %v122 = vld [vmem:[#allocation2 + $0x28] sm:$0xff]
    %v123 = vld [vmem:[#allocation2 + $0x30] sm:$0xff]
    %v124 = vld [vmem:[#allocation2 + $0x38] sm:$0xff]
    %v125 = vld [vmem:[#allocation2 + $0x40] sm:$0xff]
    %v126 = vld [vmem:[#allocation2 + $0x48] sm:$0xff]
    %v127 = vld [vmem:[#allocation2 + $0x50] sm:$0xff]
    %v128 = vld [vmem:[#allocation2 + $0x58] sm:$0xff]
    %v129 = vld [vmem:[#allocation2 + $0x60] sm:$0xff]
    %v130 = vld [vmem:[#allocation2 + $0x68] sm:$0xff]
    %v131 = vpack.c.bf16 %v124, %v117
    %v132 = vpack.c.bf16 %v125, %v118
    %v133 = vpack.c.bf16 %v126, %v119
    %v134 = vpack.c.bf16 %v127, %v120
    %v135 = vpack.c.bf16 %v128, %v121
    %v136 = vpack.c.bf16 %v129, %v122
    %v137 = vpack.c.bf16 %v130, %v123
    %v138 = vld [vmem:[#allocation5] sm:$0xff]
    %v139 = vld [vmem:[#allocation5 + $0x8] sm:$0xff]
    %v140 = vld [vmem:[#allocation5 + $0x10] sm:$0xff]
    %v141 = vld [vmem:[#allocation5 + $0x18] sm:$0xff]
    %v142 = vld [vmem:[#allocation5 + $0x20] sm:$0xff]
    %v143 = vld [vmem:[#allocation5 + $0x28] sm:$0xff]
    %v144 = vld [vmem:[#allocation5 + $0x30] sm:$0xff]
    %v145 = vld [vmem:[#allocation5 + $0x38] sm:$0xff]
    %v146 = vld [vmem:[#allocation5 + $0x40] sm:$0xff]
    %v147 = vld [vmem:[#allocation5 + $0x48] sm:$0xff]
    %v148 = vld [vmem:[#allocation5 + $0x50] sm:$0xff]
    %v149 = vld [vmem:[#allocation5 + $0x58] sm:$0xff]
    %v150 = vld [vmem:[#allocation5 + $0x60] sm:$0xff]
    %v151 = vld [vmem:[#allocation5 + $0x68] sm:$0xff]
    %v152 = vld [vmem:[#allocation5 + $0x70] sm:$0xff]
    %v153 = vld [vmem:[#allocation5 + $0x78] sm:$0xff]
    %v154 = vld [vmem:[#allocation5 + $0x80] sm:$0xff]
    %v155 = vld [vmem:[#allocation5 + $0x88] sm:$0xff]
    %v156 = vld [vmem:[#allocation5 + $0x90] sm:$0xff]
    %v157 = vld [vmem:[#allocation5 + $0x98] sm:$0xff]
    %v158 = vld [vmem:[#allocation5 + $0xa0] sm:$0xff]
    %v159 = vld [vmem:[#allocation5 + $0xa8] sm:$0xff]
    %v160 = vld [vmem:[#allocation5 + $0xb0] sm:$0xff]
    %v161 = vld [vmem:[#allocation5 + $0xb8] sm:$0xff]
    %v162 = vld [vmem:[#allocation5 + $0xc0] sm:$0xff]
    %v163 = vld [vmem:[#allocation5 + $0xc8] sm:$0xff]
    %v164 = vld [vmem:[#allocation5 + $0xd0] sm:$0xff]
    %v165 = vld [vmem:[#allocation5 + $0xd8] sm:$0xff]
    %v166 = vld [vmem:[#allocation5 + $0xe0] sm:$0xff]
    %v167 = vld [vmem:[#allocation5 + $0xe8] sm:$0xff]
    %v168 = vld [vmem:[#allocation5 + $0xf0] sm:$0xff]
    %v169 = vld [vmem:[#allocation5 + $0xf8] sm:$0xff]
    %v170 = vld [vmem:[#allocation5 + $0x100] sm:$0xff]
    %v171 = vld [vmem:[#allocation5 + $0x108] sm:$0xff]
    %v172 = vld [vmem:[#allocation5 + $0x110] sm:$0xff]
    %v173 = vld [vmem:[#allocation5 + $0x118] sm:$0xff]
    %v174 = vld [vmem:[#allocation5 + $0x120] sm:$0xff]
    %v175 = vld [vmem:[#allocation5 + $0x128] sm:$0xff]
    %v176 = vld [vmem:[#allocation5 + $0x130] sm:$0xff]
    %v177 = vld [vmem:[#allocation5 + $0x138] sm:$0xff]
    %v178 = vld [vmem:[#allocation5 + $0x140] sm:$0xff]
    %v179 = vld [vmem:[#allocation5 + $0x148] sm:$0xff]
    %v180 = vld [vmem:[#allocation5 + $0x150] sm:$0xff]
    %v181 = vld [vmem:[#allocation5 + $0x158] sm:$0xff]
    %v182 = vld [vmem:[#allocation5 + $0x160] sm:$0xff]
    %v183 = vld [vmem:[#allocation5 + $0x168] sm:$0xff]
    %v184 = vld [vmem:[#allocation5 + $0x170] sm:$0xff]
    %v185 = vld [vmem:[#allocation5 + $0x178] sm:$0xff]
    %v186 = vld [vmem:[#allocation5 + $0x180] sm:$0xff]
    %v187 = vld [vmem:[#allocation5 + $0x188] sm:$0xff]
    %v188 = vld [vmem:[#allocation5 + $0x190] sm:$0xff]
    %v189 = vld [vmem:[#allocation5 + $0x198] sm:$0xff]
    %v190 = vld [vmem:[#allocation5 + $0x1a0] sm:$0xff]
    %v191 = vld [vmem:[#allocation5 + $0x1a8] sm:$0xff]
    %v192 = vld [vmem:[#allocation5 + $0x1b0] sm:$0xff]
    %v193 = vld [vmem:[#allocation5 + $0x1b8] sm:$0xff]
    %v194 = vld [vmem:[#allocation5 + $0x1c0] sm:$0xff]
    %v195 = vld [vmem:[#allocation5 + $0x1c8] sm:$0xff]
    %v196 = vld [vmem:[#allocation5 + $0x1d0] sm:$0xff]
    %v197 = vld [vmem:[#allocation5 + $0x1d8] sm:$0xff]
    %v198 = vld [vmem:[#allocation5 + $0x1e0] sm:$0xff]
    %v199 = vld [vmem:[#allocation5 + $0x1e8] sm:$0xff]
    %v200 = vld [vmem:[#allocation5 + $0x1f0] sm:$0xff]
    %v201 = vld [vmem:[#allocation5 + $0x1f8] sm:$0xff]
    %v202 = vld [vmem:[#allocation5 + $0x200] sm:$0xff]
    %v203 = vld [vmem:[#allocation5 + $0x208] sm:$0xff]
    %v204 = vld [vmem:[#allocation5 + $0x210] sm:$0xff]
    %v205 = vld [vmem:[#allocation5 + $0x218] sm:$0xff]
    %v206 = vld [vmem:[#allocation5 + $0x220] sm:$0xff]
    %v207 = vld [vmem:[#allocation5 + $0x228] sm:$0xff]
    %v208 = vld [vmem:[#allocation5 + $0x230] sm:$0xff]
    %v209 = vld [vmem:[#allocation5 + $0x238] sm:$0xff]
    %v210 = vld [vmem:[#allocation5 + $0x240] sm:$0xff]
    %v211 = vld [vmem:[#allocation5 + $0x248] sm:$0xff]
    %v212 = vld [vmem:[#allocation5 + $0x250] sm:$0xff]
    %v213 = vld [vmem:[#allocation5 + $0x258] sm:$0xff]
    %v214 = vld [vmem:[#allocation5 + $0x260] sm:$0xff]
    %v215 = vld [vmem:[#allocation5 + $0x268] sm:$0xff]
    %v216 = vld [vmem:[#allocation5 + $0x270] sm:$0xff]
    %v217 = vld [vmem:[#allocation5 + $0x278] sm:$0xff]
    %v218 = vld [vmem:[#allocation5 + $0x280] sm:$0xff]
    %v219 = vld [vmem:[#allocation5 + $0x288] sm:$0xff]
    %v220 = vld [vmem:[#allocation5 + $0x290] sm:$0xff]
    %v221 = vld [vmem:[#allocation5 + $0x298] sm:$0xff]
    %v222 = vld [vmem:[#allocation5 + $0x2a0] sm:$0xff]
    %v223 = vld [vmem:[#allocation5 + $0x2a8] sm:$0xff]
    %v224 = vld [vmem:[#allocation5 + $0x2b0] sm:$0xff]
    %v225 = vld [vmem:[#allocation5 + $0x2b8] sm:$0xff]
    %v226 = vld [vmem:[#allocation5 + $0x2c0] sm:$0xff]
    %v227 = vld [vmem:[#allocation5 + $0x2c8] sm:$0xff]
    %v228 = vld [vmem:[#allocation5 + $0x2d0] sm:$0xff]
    %v229 = vld [vmem:[#allocation5 + $0x2d8] sm:$0xff]
    %v230 = vld [vmem:[#allocation5 + $0x2e0] sm:$0xff]
    %v231 = vld [vmem:[#allocation5 + $0x2e8] sm:$0xff]
    %v232 = vld [vmem:[#allocation5 + $0x2f0] sm:$0xff]
    %v233 = vld [vmem:[#allocation5 + $0x2f8] sm:$0xff]
    %v234 = vld [vmem:[#allocation5 + $0x300] sm:$0xff]
    %v235 = vld [vmem:[#allocation5 + $0x308] sm:$0xff]
    %v236 = vld [vmem:[#allocation5 + $0x310] sm:$0xff]
    %v237 = vld [vmem:[#allocation5 + $0x318] sm:$0xff]
    %v238 = vld [vmem:[#allocation5 + $0x320] sm:$0xff]
    %v239 = vld [vmem:[#allocation5 + $0x328] sm:$0xff]
    %v240 = vld [vmem:[#allocation5 + $0x330] sm:$0xff]
    %v241 = vld [vmem:[#allocation5 + $0x338] sm:$0xff]
    %v242 = vld [vmem:[#allocation5 + $0x340] sm:$0xff]
    %v243 = vld [vmem:[#allocation5 + $0x348] sm:$0xff]
    %v244 = vld [vmem:[#allocation5 + $0x350] sm:$0xff]
    %v245 = vld [vmem:[#allocation5 + $0x358] sm:$0xff]
    %v246 = vld [vmem:[#allocation5 + $0x360] sm:$0xff]
    %v247 = vld [vmem:[#allocation5 + $0x368] sm:$0xff]
    %v248 = vld [vmem:[#allocation5 + $0x370] sm:$0xff]
    %v249 = vld [vmem:[#allocation5 + $0x378] sm:$0xff]
    %v250 = vld [vmem:[#allocation5 + $0x380] sm:$0xff]
    %v251 = vld [vmem:[#allocation5 + $0x388] sm:$0xff]
    %v252 = vld [vmem:[#allocation5 + $0x390] sm:$0xff]
    %v253 = vld [vmem:[#allocation5 + $0x398] sm:$0xff]
    %v254 = vld [vmem:[#allocation5 + $0x3a0] sm:$0xff]
    %v255 = vld [vmem:[#allocation5 + $0x3a8] sm:$0xff]
    %v256 = vld [vmem:[#allocation5 + $0x3b0] sm:$0xff]
    %v257 = vld [vmem:[#allocation5 + $0x3b8] sm:$0xff]
    %v258 = vld [vmem:[#allocation5 + $0x3c0] sm:$0xff]
    %v259 = vld [vmem:[#allocation5 + $0x3c8] sm:$0xff]
    %v260 = vld [vmem:[#allocation5 + $0x3d0] sm:$0xff]
    %v261 = vld [vmem:[#allocation5 + $0x3d8] sm:$0xff]
    %v262 = vld [vmem:[#allocation5 + $0x3e0] sm:$0xff]
    %v263 = vld [vmem:[#allocation5 + $0x3e8] sm:$0xff]
    %v264 = vld [vmem:[#allocation5 + $0x3f0] sm:$0xff]
    %v265 = vld [vmem:[#allocation5 + $0x3f8] sm:$0xff]
    %v266 = vld [vmem:[#allocation5 + $0x400] sm:$0xff]
    %v267 = vld [vmem:[#allocation5 + $0x408] sm:$0xff]
    %v268 = vld [vmem:[#allocation5 + $0x410] sm:$0xff]
    %v269 = vld [vmem:[#allocation5 + $0x418] sm:$0xff]
    %v270 = vld [vmem:[#allocation5 + $0x420] sm:$0xff]
    %v271 = vld [vmem:[#allocation5 + $0x428] sm:$0xff]
    %v272 = vld [vmem:[#allocation5 + $0x430] sm:$0xff]
    %v273 = vld [vmem:[#allocation5 + $0x438] sm:$0xff]
    %v274 = vld [vmem:[#allocation5 + $0x440] sm:$0xff]
    %v275 = vld [vmem:[#allocation5 + $0x448] sm:$0xff]
    %v276 = vld [vmem:[#allocation5 + $0x450] sm:$0xff]
    %v277 = vld [vmem:[#allocation5 + $0x458] sm:$0xff]
    %v278 = vld [vmem:[#allocation5 + $0x460] sm:$0xff]
    %v279 = vld [vmem:[#allocation5 + $0x468] sm:$0xff]
    %v280 = vld [vmem:[#allocation5 + $0x470] sm:$0xff]
    %v281 = vld [vmem:[#allocation5 + $0x478] sm:$0xff]
    %v282 = vld [vmem:[#allocation5 + $0x480] sm:$0xff]
    %v283 = vld [vmem:[#allocation5 + $0x488] sm:$0xff]
    %v284 = vld [vmem:[#allocation5 + $0x490] sm:$0xff]
    %v285 = vld [vmem:[#allocation5 + $0x498] sm:$0xff]
    %v286 = vld [vmem:[#allocation5 + $0x4a0] sm:$0xff]
    %v287 = vld [vmem:[#allocation5 + $0x4a8] sm:$0xff]
    %v288 = vld [vmem:[#allocation5 + $0x4b0] sm:$0xff]
    %v289 = vld [vmem:[#allocation5 + $0x4b8] sm:$0xff]
    %v290 = vld [vmem:[#allocation5 + $0x4c0] sm:$0xff]
    %v291 = vld [vmem:[#allocation5 + $0x4c8] sm:$0xff]
    %v292 = vld [vmem:[#allocation5 + $0x4d0] sm:$0xff]
    %v293 = vld [vmem:[#allocation5 + $0x4d8] sm:$0xff]
    %v294 = vld [vmem:[#allocation5 + $0x4e0] sm:$0xff]
    %v295 = vld [vmem:[#allocation5 + $0x4e8] sm:$0xff]
    %v296 = vld [vmem:[#allocation5 + $0x4f0] sm:$0xff]
    %v297 = vld [vmem:[#allocation5 + $0x4f8] sm:$0xff]
    %v298 = vld [vmem:[#allocation5 + $0x500] sm:$0xff]
    %v299 = vld [vmem:[#allocation5 + $0x508] sm:$0xff]
    %v300 = vld [vmem:[#allocation5 + $0x510] sm:$0xff]
    %v301 = vld [vmem:[#allocation5 + $0x518] sm:$0xff]
    %v302 = vld [vmem:[#allocation5 + $0x520] sm:$0xff]
    %v303 = vld [vmem:[#allocation5 + $0x528] sm:$0xff]
    %v304 = vld [vmem:[#allocation5 + $0x530] sm:$0xff]
    %v305 = vld [vmem:[#allocation5 + $0x538] sm:$0xff]
    %v306 = vld [vmem:[#allocation5 + $0x540] sm:$0xff]
    %v307 = vld [vmem:[#allocation5 + $0x548] sm:$0xff]
    %v308 = vld [vmem:[#allocation5 + $0x550] sm:$0xff]
    %v309 = vld [vmem:[#allocation5 + $0x558] sm:$0xff]
    %v310 = vld [vmem:[#allocation5 + $0x560] sm:$0xff]
    %v311 = vld [vmem:[#allocation5 + $0x568] sm:$0xff]
    %v312 = vld [vmem:[#allocation5 + $0x570] sm:$0xff]
    %v313 = vld [vmem:[#allocation5 + $0x578] sm:$0xff]
    %v314 = vld [vmem:[#allocation5 + $0x580] sm:$0xff]
    %v315 = vld [vmem:[#allocation5 + $0x588] sm:$0xff]
    %v316 = vld [vmem:[#allocation5 + $0x590] sm:$0xff]
    %v317 = vld [vmem:[#allocation5 + $0x598] sm:$0xff]
    %v318 = vld [vmem:[#allocation5 + $0x5a0] sm:$0xff]
    %v319 = vld [vmem:[#allocation5 + $0x5a8] sm:$0xff]
    %v320 = vld [vmem:[#allocation5 + $0x5b0] sm:$0xff]
    %v321 = vld [vmem:[#allocation5 + $0x5b8] sm:$0xff]
    %v322 = vld [vmem:[#allocation5 + $0x5c0] sm:$0xff]
    %v323 = vld [vmem:[#allocation5 + $0x5c8] sm:$0xff]
    %v324 = vld [vmem:[#allocation5 + $0x5d0] sm:$0xff]
    %v325 = vld [vmem:[#allocation5 + $0x5d8] sm:$0xff]
    %v326 = vld [vmem:[#allocation5 + $0x5e0] sm:$0xff]
    %v327 = vld [vmem:[#allocation5 + $0x5e8] sm:$0xff]
    %v328 = vld [vmem:[#allocation5 + $0x5f0] sm:$0xff]
    %v329 = vld [vmem:[#allocation5 + $0x5f8] sm:$0xff]
    %v330 = vld [vmem:[#allocation5 + $0x600] sm:$0xff]
    %v331 = vld [vmem:[#allocation5 + $0x608] sm:$0xff]
    %v332 = vld [vmem:[#allocation5 + $0x610] sm:$0xff]
    %v333 = vld [vmem:[#allocation5 + $0x618] sm:$0xff]
    %v334 = vld [vmem:[#allocation5 + $0x620] sm:$0xff]
    %v335 = vld [vmem:[#allocation5 + $0x628] sm:$0xff]
    %v336 = vld [vmem:[#allocation5 + $0x630] sm:$0xff]
    %v337 = vld [vmem:[#allocation5 + $0x638] sm:$0xff]
    %v338 = vld [vmem:[#allocation5 + $0x640] sm:$0xff]
    %v339 = vld [vmem:[#allocation5 + $0x648] sm:$0xff]
    %v340 = vld [vmem:[#allocation5 + $0x650] sm:$0xff]
    %v341 = vld [vmem:[#allocation5 + $0x658] sm:$0xff]
    %v342 = vld [vmem:[#allocation5 + $0x660] sm:$0xff]
    %v343 = vld [vmem:[#allocation5 + $0x668] sm:$0xff]
    %v344 = vld [vmem:[#allocation5 + $0x670] sm:$0xff]
    %v345 = vld [vmem:[#allocation5 + $0x678] sm:$0xff]
    %v346 = vld [vmem:[#allocation5 + $0x680] sm:$0xff]
    %v347 = vld [vmem:[#allocation5 + $0x688] sm:$0xff]
    %v348 = vld [vmem:[#allocation5 + $0x690] sm:$0xff]
    %v349 = vld [vmem:[#allocation5 + $0x698] sm:$0xff]
    %v350 = vld [vmem:[#allocation5 + $0x6a0] sm:$0xff]
    %v351 = vld [vmem:[#allocation5 + $0x6a8] sm:$0xff]
    %v352 = vld [vmem:[#allocation5 + $0x6b0] sm:$0xff]
    %v353 = vld [vmem:[#allocation5 + $0x6b8] sm:$0xff]
    %v354 = vld [vmem:[#allocation5 + $0x6c0] sm:$0xff]
    %v355 = vld [vmem:[#allocation5 + $0x6c8] sm:$0xff]
    %v356 = vld [vmem:[#allocation5 + $0x6d0] sm:$0xff]
    %v357 = vld [vmem:[#allocation5 + $0x6d8] sm:$0xff]
    %v358 = vld [vmem:[#allocation5 + $0x6e0] sm:$0xff]
    %v359 = vld [vmem:[#allocation5 + $0x6e8] sm:$0xff]
    %v360 = vld [vmem:[#allocation5 + $0x6f0] sm:$0xff]
    %v361 = vld [vmem:[#allocation5 + $0x6f8] sm:$0xff]
    %v362 = vld [vmem:[#allocation5 + $0x700] sm:$0xff]
    %v363 = vld [vmem:[#allocation5 + $0x708] sm:$0xff]
    %v364 = vld [vmem:[#allocation5 + $0x710] sm:$0xff]
    %v365 = vld [vmem:[#allocation5 + $0x718] sm:$0xff]
    %v366 = vld [vmem:[#allocation5 + $0x720] sm:$0xff]
    %v367 = vld [vmem:[#allocation5 + $0x728] sm:$0xff]
    %v368 = vld [vmem:[#allocation5 + $0x730] sm:$0xff]
    %v369 = vld [vmem:[#allocation5 + $0x738] sm:$0xff]
    %v370 = vld [vmem:[#allocation5 + $0x740] sm:$0xff]
    %v371 = vld [vmem:[#allocation5 + $0x748] sm:$0xff]
    %v372 = vld [vmem:[#allocation5 + $0x750] sm:$0xff]
    %v373 = vld [vmem:[#allocation5 + $0x758] sm:$0xff]
    %v374 = vld [vmem:[#allocation5 + $0x760] sm:$0xff]
    %v375 = vld [vmem:[#allocation5 + $0x768] sm:$0xff]
    %v376 = vld [vmem:[#allocation5 + $0x770] sm:$0xff]
    %v377 = vld [vmem:[#allocation5 + $0x778] sm:$0xff]
    %v378 = vld [vmem:[#allocation5 + $0x780] sm:$0xff]
    %v379 = vld [vmem:[#allocation5 + $0x788] sm:$0xff]
    %v380 = vld [vmem:[#allocation5 + $0x790] sm:$0xff]
    %v381 = vld [vmem:[#allocation5 + $0x798] sm:$0xff]
    %v382 = vld [vmem:[#allocation5 + $0x7a0] sm:$0xff]
    %v383 = vld [vmem:[#allocation5 + $0x7a8] sm:$0xff]
    %v384 = vld [vmem:[#allocation5 + $0x7b0] sm:$0xff]
    %v385 = vld [vmem:[#allocation5 + $0x7b8] sm:$0xff]
    %v386 = vld [vmem:[#allocation5 + $0x7c0] sm:$0xff]
    %v387 = vld [vmem:[#allocation5 + $0x7c8] sm:$0xff]
    %v388 = vld [vmem:[#allocation5 + $0x7d0] sm:$0xff]
    %v389 = vld [vmem:[#allocation5 + $0x7d8] sm:$0xff]
    %v390 = vld [vmem:[#allocation5 + $0x7e0] sm:$0xff]
    %v391 = vld [vmem:[#allocation5 + $0x7e8] sm:$0xff]
    %v392 = vld [vmem:[#allocation5 + $0x7f0] sm:$0xff]
    %v393 = vld [vmem:[#allocation5 + $0x7f8] sm:$0xff]
    %v394 = vld [vmem:[#allocation5 + $0x800] sm:$0xff]
    %v395 = vld [vmem:[#allocation5 + $0x808] sm:$0xff]
    %v396 = vld [vmem:[#allocation5 + $0x810] sm:$0xff]
    %v397 = vld [vmem:[#allocation5 + $0x818] sm:$0xff]
    %v398 = vld [vmem:[#allocation5 + $0x820] sm:$0xff]
    %v399 = vld [vmem:[#allocation5 + $0x828] sm:$0xff]
    %v400 = vld [vmem:[#allocation5 + $0x830] sm:$0xff]
    %v401 = vld [vmem:[#allocation5 + $0x838] sm:$0xff]
    %v402 = vld [vmem:[#allocation5 + $0x840] sm:$0xff]
    %v403 = vld [vmem:[#allocation5 + $0x848] sm:$0xff]
    %v404 = vld [vmem:[#allocation5 + $0x850] sm:$0xff]
    %v405 = vld [vmem:[#allocation5 + $0x858] sm:$0xff]
    %v406 = vld [vmem:[#allocation5 + $0x860] sm:$0xff]
    %v407 = vld [vmem:[#allocation5 + $0x868] sm:$0xff]
    %v408 = vld [vmem:[#allocation5 + $0x870] sm:$0xff]
    %v409 = vld [vmem:[#allocation5 + $0x878] sm:$0xff]
    %v410 = vld [vmem:[#allocation5 + $0x880] sm:$0xff]
    %v411 = vld [vmem:[#allocation5 + $0x888] sm:$0xff]
    %v412 = vld [vmem:[#allocation5 + $0x890] sm:$0xff]
    %v413 = vld [vmem:[#allocation5 + $0x898] sm:$0xff]
    %v414 = vld [vmem:[#allocation5 + $0x8a0] sm:$0xff]
    %v415 = vld [vmem:[#allocation5 + $0x8a8] sm:$0xff]
    %v416 = vld [vmem:[#allocation5 + $0x8b0] sm:$0xff]
    %v417 = vld [vmem:[#allocation5 + $0x8b8] sm:$0xff]
    %v418 = vld [vmem:[#allocation5 + $0x8c0] sm:$0xff]
    %v419 = vld [vmem:[#allocation5 + $0x8c8] sm:$0xff]
    %v420 = vld [vmem:[#allocation5 + $0x8d0] sm:$0xff]
    %v421 = vld [vmem:[#allocation5 + $0x8d8] sm:$0xff]
    %v422 = vld [vmem:[#allocation5 + $0x8e0] sm:$0xff]
    %v423 = vld [vmem:[#allocation5 + $0x8e8] sm:$0xff]
    %v424 = vld [vmem:[#allocation5 + $0x8f0] sm:$0xff]
    %v425 = vld [vmem:[#allocation5 + $0x8f8] sm:$0xff]
    %v426 = vld [vmem:[#allocation5 + $0x900] sm:$0xff]
    %v427 = vld [vmem:[#allocation5 + $0x908] sm:$0xff]
    %v428 = vld [vmem:[#allocation5 + $0x910] sm:$0xff]
    %v429 = vld [vmem:[#allocation5 + $0x918] sm:$0xff]
    %v430 = vld [vmem:[#allocation5 + $0x920] sm:$0xff]
    %v431 = vld [vmem:[#allocation5 + $0x928] sm:$0xff]
    %v432 = vld [vmem:[#allocation5 + $0x930] sm:$0xff]
    %v433 = vld [vmem:[#allocation5 + $0x938] sm:$0xff]
    %v434 = vld [vmem:[#allocation5 + $0x940] sm:$0xff]
    %v435 = vld [vmem:[#allocation5 + $0x948] sm:$0xff]
    %v436 = vld [vmem:[#allocation5 + $0x950] sm:$0xff]
    %v437 = vld [vmem:[#allocation5 + $0x958] sm:$0xff]
    %v438 = vld [vmem:[#allocation5 + $0x960] sm:$0xff]
    %v439 = vld [vmem:[#allocation5 + $0x968] sm:$0xff]
    %v440 = vld [vmem:[#allocation5 + $0x970] sm:$0xff]
    %v441 = vld [vmem:[#allocation5 + $0x978] sm:$0xff]
    %v442 = vld [vmem:[#allocation5 + $0x980] sm:$0xff]
    %v443 = vld [vmem:[#allocation5 + $0x988] sm:$0xff]
    %v444 = vld [vmem:[#allocation5 + $0x990] sm:$0xff]
    %v445 = vld [vmem:[#allocation5 + $0x998] sm:$0xff]
    %v446 = vld [vmem:[#allocation5 + $0x9a0] sm:$0xff]
    %v447 = vld [vmem:[#allocation5 + $0x9a8] sm:$0xff]
    %v448 = vld [vmem:[#allocation5 + $0x9b0] sm:$0xff]
    %v449 = vld [vmem:[#allocation5 + $0x9b8] sm:$0xff]
    %v450 = vld [vmem:[#allocation5 + $0x9c0] sm:$0xff]
    %v451 = vld [vmem:[#allocation5 + $0x9c8] sm:$0xff]
    %v452 = vld [vmem:[#allocation5 + $0x9d0] sm:$0xff]
    %v453 = vld [vmem:[#allocation5 + $0x9d8] sm:$0xff]
    %v454 = vld [vmem:[#allocation5 + $0x9e0] sm:$0xff]
    %v455 = vld [vmem:[#allocation5 + $0x9e8] sm:$0xff]
    %v456 = vld [vmem:[#allocation5 + $0x9f0] sm:$0xff]
    %v457 = vld [vmem:[#allocation5 + $0x9f8] sm:$0xff]
    %v458 = vld [vmem:[#allocation5 + $0xa00] sm:$0xff]
    %v459 = vld [vmem:[#allocation5 + $0xa08] sm:$0xff]
    %v460 = vld [vmem:[#allocation5 + $0xa10] sm:$0xff]
    %v461 = vld [vmem:[#allocation5 + $0xa18] sm:$0xff]
    %v462 = vld [vmem:[#allocation5 + $0xa20] sm:$0xff]
    %v463 = vld [vmem:[#allocation5 + $0xa28] sm:$0xff]
    %v464 = vld [vmem:[#allocation5 + $0xa30] sm:$0xff]
    %v465 = vld [vmem:[#allocation5 + $0xa38] sm:$0xff]
    %v466 = vld [vmem:[#allocation5 + $0xa40] sm:$0xff]
    %v467 = vld [vmem:[#allocation5 + $0xa48] sm:$0xff]
    %v468 = vld [vmem:[#allocation5 + $0xa50] sm:$0xff]
    %v469 = vld [vmem:[#allocation5 + $0xa58] sm:$0xff]
    %v470 = vld [vmem:[#allocation5 + $0xa60] sm:$0xff]
    %v471 = vld [vmem:[#allocation5 + $0xa68] sm:$0xff]
    %v472 = vld [vmem:[#allocation5 + $0xa70] sm:$0xff]
    %v473 = vld [vmem:[#allocation5 + $0xa78] sm:$0xff]
    %v474 = vld [vmem:[#allocation5 + $0xa80] sm:$0xff]
    %v475 = vld [vmem:[#allocation5 + $0xa88] sm:$0xff]
    %v476 = vld [vmem:[#allocation5 + $0xa90] sm:$0xff]
    %v477 = vld [vmem:[#allocation5 + $0xa98] sm:$0xff]
    %v478 = vld [vmem:[#allocation5 + $0xaa0] sm:$0xff]
    %v479 = vld [vmem:[#allocation5 + $0xaa8] sm:$0xff]
    %v480 = vld [vmem:[#allocation5 + $0xab0] sm:$0xff]
    %v481 = vld [vmem:[#allocation5 + $0xab8] sm:$0xff]
    %v482 = vld [vmem:[#allocation5 + $0xac0] sm:$0xff]
    %v483 = vld [vmem:[#allocation5 + $0xac8] sm:$0xff]
    %v484 = vld [vmem:[#allocation5 + $0xad0] sm:$0xff]
    %v485 = vld [vmem:[#allocation5 + $0xad8] sm:$0xff]
    %v486 = vld [vmem:[#allocation5 + $0xae0] sm:$0xff]
    %v487 = vld [vmem:[#allocation5 + $0xae8] sm:$0xff]
    %v488 = vld [vmem:[#allocation5 + $0xaf0] sm:$0xff]
    %v489 = vld [vmem:[#allocation5 + $0xaf8] sm:$0xff]
    %v490 = vld [vmem:[#allocation5 + $0xb00] sm:$0xff]
    %v491 = vld [vmem:[#allocation5 + $0xb08] sm:$0xff]
    %v492 = vld [vmem:[#allocation5 + $0xb10] sm:$0xff]
    %v493 = vld [vmem:[#allocation5 + $0xb18] sm:$0xff]
    %v494 = vld [vmem:[#allocation5 + $0xb20] sm:$0xff]
    %v495 = vld [vmem:[#allocation5 + $0xb28] sm:$0xff]
    %v496 = vld [vmem:[#allocation5 + $0xb30] sm:$0xff]
    %v497 = vld [vmem:[#allocation5 + $0xb38] sm:$0xff]
    %v498 = vld [vmem:[#allocation5 + $0xb40] sm:$0xff]
    %v499 = vld [vmem:[#allocation5 + $0xb48] sm:$0xff]
    %v500 = vld [vmem:[#allocation5 + $0xb50] sm:$0xff]
    %v501 = vld [vmem:[#allocation5 + $0xb58] sm:$0xff]
    %v502 = vld [vmem:[#allocation5 + $0xb60] sm:$0xff]
    %v503 = vld [vmem:[#allocation5 + $0xb68] sm:$0xff]
    %v504 = vld [vmem:[#allocation5 + $0xb70] sm:$0xff]
    %v505 = vld [vmem:[#allocation5 + $0xb78] sm:$0xff]
    %v506 = vld [vmem:[#allocation5 + $0xb80] sm:$0xff]
    %v507 = vld [vmem:[#allocation5 + $0xb88] sm:$0xff]
    %v508 = vld [vmem:[#allocation5 + $0xb90] sm:$0xff]
    %v509 = vld [vmem:[#allocation5 + $0xb98] sm:$0xff]
    %v510 = vld [vmem:[#allocation5 + $0xba0] sm:$0xff]
    %v511 = vld [vmem:[#allocation5 + $0xba8] sm:$0xff]
    %v512 = vld [vmem:[#allocation5 + $0xbb0] sm:$0xff]
    %v513 = vld [vmem:[#allocation5 + $0xbb8] sm:$0xff]
    %v514 = vld [vmem:[#allocation5 + $0xbc0] sm:$0xff]
    %v515 = vld [vmem:[#allocation5 + $0xbc8] sm:$0xff]
    %v516 = vld [vmem:[#allocation5 + $0xbd0] sm:$0xff]
    %v517 = vld [vmem:[#allocation5 + $0xbd8] sm:$0xff]
    %v518 = vld [vmem:[#allocation5 + $0xbe0] sm:$0xff]
    %v519 = vld [vmem:[#allocation5 + $0xbe8] sm:$0xff]
    %v520 = vld [vmem:[#allocation5 + $0xbf0] sm:$0xff]
    %v521 = vld [vmem:[#allocation5 + $0xbf8] sm:$0xff]
    %v522 = vld [vmem:[#allocation5 + $0xc00] sm:$0xff]
    %v523 = vld [vmem:[#allocation5 + $0xc08] sm:$0xff]
    %v524 = vld [vmem:[#allocation5 + $0xc10] sm:$0xff]
    %v525 = vld [vmem:[#allocation5 + $0xc18] sm:$0xff]
    %v526 = vld [vmem:[#allocation5 + $0xc20] sm:$0xff]
    %v527 = vld [vmem:[#allocation5 + $0xc28] sm:$0xff]
    %v528 = vld [vmem:[#allocation5 + $0xc30] sm:$0xff]
    %v529 = vld [vmem:[#allocation5 + $0xc38] sm:$0xff]
    %v530 = vld [vmem:[#allocation7] sm:$0xff]
    %v532 = vlaneseq
    %v533 = vshrl.u32 %v532, 7
    %v534 = vsub.s32 0, %v533
    %v535 = vrot.slane %v530, %v534
    %v536 = vlaneseq
    %v537 = vshrl.u32 %v536, 7
    %v538 = vsub.s32 1, %v537
    %v539 = vrot.slane %v530, %v538
    %v540 = vlaneseq
    %v541 = vshrl.u32 %v540, 7
    %v542 = vsub.s32 2, %v541
    %v543 = vrot.slane %v530, %v542
    %v544 = vlaneseq
    %v545 = vshrl.u32 %v544, 7
    %v546 = vsub.s32 3, %v545
    %v547 = vrot.slane %v530, %v546
    %v548 = vlaneseq
    %v549 = vshrl.u32 %v548, 7
    %v550 = vsub.s32 4, %v549
    %v551 = vrot.slane %v530, %v550
    %v552 = vlaneseq
    %v553 = vshrl.u32 %v552, 7
    %v554 = vsub.s32 5, %v553
    %v555 = vrot.slane %v530, %v554
    %v556 = vlaneseq
    %v557 = vshrl.u32 %v556, 7
    %v558 = vsub.s32 6, %v557
    %v559 = vrot.slane %v530, %v558
    %v560 = vlaneseq
    %v561 = vshrl.u32 %v560, 7
    %v562 = vsub.s32 7, %v561
    %v563 = vrot.slane %v530, %v562
    %v964 = vunpack.c.l.b16 %v138
    %v965 = vunpack.c.h.b16 %v138
    %v966 = vunpack.c.l.b16 %v139
    %v967 = vunpack.c.h.b16 %v139
    %v968 = vunpack.c.l.b16 %v140
    %v969 = vunpack.c.h.b16 %v140
    %v970 = vunpack.c.l.b16 %v141
    %v971 = vunpack.c.h.b16 %v141
    %v972 = vunpack.c.l.b16 %v142
    %v973 = vunpack.c.h.b16 %v142
    %v974 = vunpack.c.l.b16 %v143
    %v975 = vunpack.c.h.b16 %v143
    %v976 = vunpack.c.l.b16 %v144
    %v977 = vunpack.c.h.b16 %v144
    %v978 = vunpack.c.l.b16 %v145
    %v979 = vunpack.c.h.b16 %v145
    %v980 = vunpack.c.l.b16 %v146
    %v981 = vunpack.c.h.b16 %v146
    %v982 = vunpack.c.l.b16 %v147
    %v983 = vunpack.c.h.b16 %v147
    %v984 = vunpack.c.l.b16 %v148
    %v985 = vunpack.c.h.b16 %v148
    %v986 = vunpack.c.l.b16 %v149
    %v987 = vunpack.c.h.b16 %v149
    %v988 = vunpack.c.l.b16 %v150
    %v989 = vunpack.c.h.b16 %v150
    %v990 = vunpack.c.l.b16 %v151
    %v991 = vunpack.c.h.b16 %v151
    %v992 = vunpack.c.l.b16 %v152
    %v993 = vunpack.c.h.b16 %v152
    %v994 = vunpack.c.l.b16 %v153
    %v995 = vunpack.c.h.b16 %v153
    %v996 = vunpack.c.l.b16 %v154
    %v997 = vunpack.c.h.b16 %v154
    %v998 = vunpack.c.l.b16 %v155
    %v999 = vunpack.c.h.b16 %v155
    %v1000 = vunpack.c.l.b16 %v156
    %v1001 = vunpack.c.h.b16 %v156
    %v1002 = vunpack.c.l.b16 %v157
    %v1003 = vunpack.c.h.b16 %v157
    %v1004 = vunpack.c.l.b16 %v158
    %v1005 = vunpack.c.h.b16 %v158
    %v1006 = vunpack.c.l.b16 %v159
    %v1007 = vunpack.c.h.b16 %v159
    %v1008 = vunpack.c.l.b16 %v160
    %v1009 = vunpack.c.h.b16 %v160
    %v1010 = vunpack.c.l.b16 %v161
    %v1011 = vunpack.c.h.b16 %v161
    %v1012 = vunpack.c.l.b16 %v162
    %v1013 = vunpack.c.h.b16 %v162
    %v1014 = vunpack.c.l.b16 %v163
    %v1015 = vunpack.c.h.b16 %v163
    %v1016 = vunpack.c.l.b16 %v164
    %v1017 = vunpack.c.h.b16 %v164
    %v1018 = vunpack.c.l.b16 %v165
    %v1019 = vunpack.c.h.b16 %v165
    %v1020 = vunpack.c.l.b16 %v166
    %v1021 = vunpack.c.h.b16 %v166
    %v1022 = vunpack.c.l.b16 %v167
    %v1023 = vunpack.c.h.b16 %v167
    %v1024 = vunpack.c.l.b16 %v168
    %v1025 = vunpack.c.h.b16 %v168
    %v1026 = vunpack.c.l.b16 %v169
    %v1027 = vunpack.c.h.b16 %v169
    %v1028 = vunpack.c.l.b16 %v170
    %v1029 = vunpack.c.h.b16 %v170
    %v1030 = vunpack.c.l.b16 %v171
    %v1031 = vunpack.c.h.b16 %v171
    %v1032 = vunpack.c.l.b16 %v172
    %v1033 = vunpack.c.h.b16 %v172
    %v1034 = vunpack.c.l.b16 %v173
    %v1035 = vunpack.c.h.b16 %v173
    %v1036 = vunpack.c.l.b16 %v174
    %v1037 = vunpack.c.h.b16 %v174
    %v1038 = vunpack.c.l.b16 %v175
    %v1039 = vunpack.c.h.b16 %v175
    %v1040 = vunpack.c.l.b16 %v176
    %v1041 = vunpack.c.h.b16 %v176
    %v1042 = vunpack.c.l.b16 %v177
    %v1043 = vunpack.c.h.b16 %v177
    %v1044 = vunpack.c.l.b16 %v178
    %v1045 = vunpack.c.h.b16 %v178
    %v1046 = vunpack.c.l.b16 %v179
    %v1047 = vunpack.c.h.b16 %v179
    %v1048 = vunpack.c.l.b16 %v180
    %v1049 = vunpack.c.h.b16 %v180
    %v1050 = vunpack.c.l.b16 %v181
    %v1051 = vunpack.c.h.b16 %v181
    %v1052 = vunpack.c.l.b16 %v182
    %v1053 = vunpack.c.h.b16 %v182
    %v1054 = vunpack.c.l.b16 %v183
    %v1055 = vunpack.c.h.b16 %v183
    %v1056 = vunpack.c.l.b16 %v184
    %v1057 = vunpack.c.h.b16 %v184
    %v1058 = vunpack.c.l.b16 %v185
    %v1059 = vunpack.c.h.b16 %v185
    %v1060 = vunpack.c.l.b16 %v186
    %v1061 = vunpack.c.h.b16 %v186
    %v1062 = vunpack.c.l.b16 %v187
    %v1063 = vunpack.c.h.b16 %v187
    %v1064 = vunpack.c.l.b16 %v188
    %v1065 = vunpack.c.h.b16 %v188
    %v1066 = vunpack.c.l.b16 %v189
    %v1067 = vunpack.c.h.b16 %v189
    %v1068 = vunpack.c.l.b16 %v190
    %v1069 = vunpack.c.h.b16 %v190
    %v1070 = vunpack.c.l.b16 %v191
    %v1071 = vunpack.c.h.b16 %v191
    %v1072 = vunpack.c.l.b16 %v192
    %v1073 = vunpack.c.h.b16 %v192
    %v1074 = vunpack.c.l.b16 %v193
    %v1075 = vunpack.c.h.b16 %v193
    %v1076 = vunpack.c.l.b16 %v194
    %v1077 = vunpack.c.h.b16 %v194
    %v1078 = vunpack.c.l.b16 %v195
    %v1079 = vunpack.c.h.b16 %v195
    %v1080 = vunpack.c.l.b16 %v196
    %v1081 = vunpack.c.h.b16 %v196
    %v1082 = vunpack.c.l.b16 %v197
    %v1083 = vunpack.c.h.b16 %v197
    %v1084 = vunpack.c.l.b16 %v198
    %v1085 = vunpack.c.h.b16 %v198
    %v1086 = vunpack.c.l.b16 %v199
    %v1087 = vunpack.c.h.b16 %v199
    %v1088 = vunpack.c.l.b16 %v200
    %v1089 = vunpack.c.h.b16 %v200
    %v1090 = vunpack.c.l.b16 %v201
    %v1091 = vunpack.c.h.b16 %v201
    %v1092 = vunpack.c.l.b16 %v202
    %v1093 = vunpack.c.h.b16 %v202
    %v1094 = vunpack.c.l.b16 %v203
    %v1095 = vunpack.c.h.b16 %v203
    %v1096 = vunpack.c.l.b16 %v204
    %v1097 = vunpack.c.h.b16 %v204
    %v1098 = vunpack.c.l.b16 %v205
    %v1099 = vunpack.c.h.b16 %v205
    %v1100 = vunpack.c.l.b16 %v206
    %v1101 = vunpack.c.h.b16 %v206
    %v1102 = vunpack.c.l.b16 %v207
    %v1103 = vunpack.c.h.b16 %v207
    %v1104 = vunpack.c.l.b16 %v208
    %v1105 = vunpack.c.h.b16 %v208
    %v1106 = vunpack.c.l.b16 %v209
    %v1107 = vunpack.c.h.b16 %v209
    %v1108 = vunpack.c.l.b16 %v210
    %v1109 = vunpack.c.h.b16 %v210
    %v1110 = vunpack.c.l.b16 %v211
    %v1111 = vunpack.c.h.b16 %v211
    %v1112 = vunpack.c.l.b16 %v212
    %v1113 = vunpack.c.h.b16 %v212
    %v1114 = vunpack.c.l.b16 %v213
    %v1115 = vunpack.c.h.b16 %v213
    %v1116 = vunpack.c.l.b16 %v214
    %v1117 = vunpack.c.h.b16 %v214
    %v1118 = vunpack.c.l.b16 %v215
    %v1119 = vunpack.c.h.b16 %v215
    %v1120 = vunpack.c.l.b16 %v216
    %v1121 = vunpack.c.h.b16 %v216
    %v1122 = vunpack.c.l.b16 %v217
    %v1123 = vunpack.c.h.b16 %v217
    %v1124 = vunpack.c.l.b16 %v218
    %v1125 = vunpack.c.h.b16 %v218
    %v1126 = vunpack.c.l.b16 %v219
    %v1127 = vunpack.c.h.b16 %v219
    %v1128 = vunpack.c.l.b16 %v220
    %v1129 = vunpack.c.h.b16 %v220
    %v1130 = vunpack.c.l.b16 %v221
    %v1131 = vunpack.c.h.b16 %v221
    %v1132 = vunpack.c.l.b16 %v222
    %v1133 = vunpack.c.h.b16 %v222
    %v1134 = vunpack.c.l.b16 %v223
    %v1135 = vunpack.c.h.b16 %v223
    %v1136 = vunpack.c.l.b16 %v224
    %v1137 = vunpack.c.h.b16 %v224
    %v1138 = vunpack.c.l.b16 %v225
    %v1139 = vunpack.c.h.b16 %v225
    %v1140 = vunpack.c.l.b16 %v226
    %v1141 = vunpack.c.h.b16 %v226
    %v1142 = vunpack.c.l.b16 %v227
    %v1143 = vunpack.c.h.b16 %v227
    %v1144 = vunpack.c.l.b16 %v228
    %v1145 = vunpack.c.h.b16 %v228
    %v1146 = vunpack.c.l.b16 %v229
    %v1147 = vunpack.c.h.b16 %v229
    %v1148 = vunpack.c.l.b16 %v230
    %v1149 = vunpack.c.h.b16 %v230
    %v1150 = vunpack.c.l.b16 %v231
    %v1151 = vunpack.c.h.b16 %v231
    %v1152 = vunpack.c.l.b16 %v232
    %v1153 = vunpack.c.h.b16 %v232
    %v1154 = vunpack.c.l.b16 %v233
    %v1155 = vunpack.c.h.b16 %v233
    %v1156 = vunpack.c.l.b16 %v234
    %v1157 = vunpack.c.h.b16 %v234
    %v1158 = vunpack.c.l.b16 %v235
    %v1159 = vunpack.c.h.b16 %v235
    %v1160 = vunpack.c.l.b16 %v236
    %v1161 = vunpack.c.h.b16 %v236
    %v1162 = vunpack.c.l.b16 %v237
    %v1163 = vunpack.c.h.b16 %v237
    %v1164 = vunpack.c.l.b16 %v238
    %v1165 = vunpack.c.h.b16 %v238
    %v1166 = vunpack.c.l.b16 %v239
    %v1167 = vunpack.c.h.b16 %v239
    %v1168 = vunpack.c.l.b16 %v240
    %v1169 = vunpack.c.h.b16 %v240
    %v1170 = vunpack.c.l.b16 %v241
    %v1171 = vunpack.c.h.b16 %v241
    %v1172 = vunpack.c.l.b16 %v242
    %v1173 = vunpack.c.h.b16 %v242
    %v1174 = vunpack.c.l.b16 %v243
    %v1175 = vunpack.c.h.b16 %v243
    %v1176 = vunpack.c.l.b16 %v244
    %v1177 = vunpack.c.h.b16 %v244
    %v1178 = vunpack.c.l.b16 %v245
    %v1179 = vunpack.c.h.b16 %v245
    %v1180 = vunpack.c.l.b16 %v246
    %v1181 = vunpack.c.h.b16 %v246
    %v1182 = vunpack.c.l.b16 %v247
    %v1183 = vunpack.c.h.b16 %v247
    %v1184 = vunpack.c.l.b16 %v248
    %v1185 = vunpack.c.h.b16 %v248
    %v1186 = vunpack.c.l.b16 %v249
    %v1187 = vunpack.c.h.b16 %v249
    %v1188 = vunpack.c.l.b16 %v250
    %v1189 = vunpack.c.h.b16 %v250
    %v1190 = vunpack.c.l.b16 %v251
    %v1191 = vunpack.c.h.b16 %v251
    %v1192 = vunpack.c.l.b16 %v252
    %v1193 = vunpack.c.h.b16 %v252
    %v1194 = vunpack.c.l.b16 %v253
    %v1195 = vunpack.c.h.b16 %v253
    %v1196 = vunpack.c.l.b16 %v254
    %v1197 = vunpack.c.h.b16 %v254
    %v1198 = vunpack.c.l.b16 %v255
    %v1199 = vunpack.c.h.b16 %v255
    %v1200 = vunpack.c.l.b16 %v256
    %v1201 = vunpack.c.h.b16 %v256
    %v1202 = vunpack.c.l.b16 %v257
    %v1203 = vunpack.c.h.b16 %v257
    %v1204 = vunpack.c.l.b16 %v258
    %v1205 = vunpack.c.h.b16 %v258
    %v1206 = vunpack.c.l.b16 %v259
    %v1207 = vunpack.c.h.b16 %v259
    %v1208 = vunpack.c.l.b16 %v260
    %v1209 = vunpack.c.h.b16 %v260
    %v1210 = vunpack.c.l.b16 %v261
    %v1211 = vunpack.c.h.b16 %v261
    %v1212 = vunpack.c.l.b16 %v262
    %v1213 = vunpack.c.h.b16 %v262
    %v1214 = vunpack.c.l.b16 %v263
    %v1215 = vunpack.c.h.b16 %v263
    %v1216 = vunpack.c.l.b16 %v264
    %v1217 = vunpack.c.h.b16 %v264
    %v1218 = vunpack.c.l.b16 %v265
    %v1219 = vunpack.c.h.b16 %v265
    %v1220 = vunpack.c.l.b16 %v266
    %v1221 = vunpack.c.h.b16 %v266
    %v1222 = vunpack.c.l.b16 %v267
    %v1223 = vunpack.c.h.b16 %v267
    %v1224 = vunpack.c.l.b16 %v268
    %v1225 = vunpack.c.h.b16 %v268
    %v1226 = vunpack.c.l.b16 %v269
    %v1227 = vunpack.c.h.b16 %v269
    %v1228 = vunpack.c.l.b16 %v270
    %v1229 = vunpack.c.h.b16 %v270
    %v1230 = vunpack.c.l.b16 %v271
    %v1231 = vunpack.c.h.b16 %v271
    %v1232 = vunpack.c.l.b16 %v272
    %v1233 = vunpack.c.h.b16 %v272
    %v1234 = vunpack.c.l.b16 %v273
    %v1235 = vunpack.c.h.b16 %v273
    %v1236 = vunpack.c.l.b16 %v274
    %v1237 = vunpack.c.h.b16 %v274
    %v1238 = vunpack.c.l.b16 %v275
    %v1239 = vunpack.c.h.b16 %v275
    %v1240 = vunpack.c.l.b16 %v276
    %v1241 = vunpack.c.h.b16 %v276
    %v1242 = vunpack.c.l.b16 %v277
    %v1243 = vunpack.c.h.b16 %v277
    %v1244 = vunpack.c.l.b16 %v278
    %v1245 = vunpack.c.h.b16 %v278
    %v1246 = vunpack.c.l.b16 %v279
    %v1247 = vunpack.c.h.b16 %v279
    %v1248 = vunpack.c.l.b16 %v280
    %v1249 = vunpack.c.h.b16 %v280
    %v1250 = vunpack.c.l.b16 %v281
    %v1251 = vunpack.c.h.b16 %v281
    %v1252 = vunpack.c.l.b16 %v282
    %v1253 = vunpack.c.h.b16 %v282
    %v1254 = vunpack.c.l.b16 %v283
    %v1255 = vunpack.c.h.b16 %v283
    %v1256 = vunpack.c.l.b16 %v284
    %v1257 = vunpack.c.h.b16 %v284
    %v1258 = vunpack.c.l.b16 %v285
    %v1259 = vunpack.c.h.b16 %v285
    %v1260 = vunpack.c.l.b16 %v286
    %v1261 = vunpack.c.h.b16 %v286
    %v1262 = vunpack.c.l.b16 %v287
    %v1263 = vunpack.c.h.b16 %v287
    %v1264 = vunpack.c.l.b16 %v288
    %v1265 = vunpack.c.h.b16 %v288
    %v1266 = vunpack.c.l.b16 %v289
    %v1267 = vunpack.c.h.b16 %v289
    %v1268 = vunpack.c.l.b16 %v290
    %v1269 = vunpack.c.h.b16 %v290
    %v1270 = vunpack.c.l.b16 %v291
    %v1271 = vunpack.c.h.b16 %v291
    %v1272 = vunpack.c.l.b16 %v292
    %v1273 = vunpack.c.h.b16 %v292
    %v1274 = vunpack.c.l.b16 %v293
    %v1275 = vunpack.c.h.b16 %v293
    %v1276 = vunpack.c.l.b16 %v294
    %v1277 = vunpack.c.h.b16 %v294
    %v1278 = vunpack.c.l.b16 %v295
    %v1279 = vunpack.c.h.b16 %v295
    %v1280 = vunpack.c.l.b16 %v296
    %v1281 = vunpack.c.h.b16 %v296
    %v1282 = vunpack.c.l.b16 %v297
    %v1283 = vunpack.c.h.b16 %v297
    %v1284 = vunpack.c.l.b16 %v298
    %v1285 = vunpack.c.h.b16 %v298
    %v1286 = vunpack.c.l.b16 %v299
    %v1287 = vunpack.c.h.b16 %v299
    %v1288 = vunpack.c.l.b16 %v300
    %v1289 = vunpack.c.h.b16 %v300
    %v1290 = vunpack.c.l.b16 %v301
    %v1291 = vunpack.c.h.b16 %v301
    %v1292 = vunpack.c.l.b16 %v302
    %v1293 = vunpack.c.h.b16 %v302
    %v1294 = vunpack.c.l.b16 %v303
    %v1295 = vunpack.c.h.b16 %v303
    %v1296 = vunpack.c.l.b16 %v304
    %v1297 = vunpack.c.h.b16 %v304
    %v1298 = vunpack.c.l.b16 %v305
    %v1299 = vunpack.c.h.b16 %v305
    %v1300 = vunpack.c.l.b16 %v306
    %v1301 = vunpack.c.h.b16 %v306
    %v1302 = vunpack.c.l.b16 %v307
    %v1303 = vunpack.c.h.b16 %v307
    %v1304 = vunpack.c.l.b16 %v308
    %v1305 = vunpack.c.h.b16 %v308
    %v1306 = vunpack.c.l.b16 %v309
    %v1307 = vunpack.c.h.b16 %v309
    %v1308 = vunpack.c.l.b16 %v310
    %v1309 = vunpack.c.h.b16 %v310
    %v1310 = vunpack.c.l.b16 %v311
    %v1311 = vunpack.c.h.b16 %v311
    %v1312 = vunpack.c.l.b16 %v312
    %v1313 = vunpack.c.h.b16 %v312
    %v1314 = vunpack.c.l.b16 %v313
    %v1315 = vunpack.c.h.b16 %v313
    %v1316 = vunpack.c.l.b16 %v314
    %v1317 = vunpack.c.h.b16 %v314
    %v1318 = vunpack.c.l.b16 %v315
    %v1319 = vunpack.c.h.b16 %v315
    %v1320 = vunpack.c.l.b16 %v316
    %v1321 = vunpack.c.h.b16 %v316
    %v1322 = vunpack.c.l.b16 %v317
    %v1323 = vunpack.c.h.b16 %v317
    %v1324 = vunpack.c.l.b16 %v318
    %v1325 = vunpack.c.h.b16 %v318
    %v1326 = vunpack.c.l.b16 %v319
    %v1327 = vunpack.c.h.b16 %v319
    %v1328 = vunpack.c.l.b16 %v320
    %v1329 = vunpack.c.h.b16 %v320
    %v1330 = vunpack.c.l.b16 %v321
    %v1331 = vunpack.c.h.b16 %v321
    %v1332 = vunpack.c.l.b16 %v322
    %v1333 = vunpack.c.h.b16 %v322
    %v1334 = vunpack.c.l.b16 %v323
    %v1335 = vunpack.c.h.b16 %v323
    %v1336 = vunpack.c.l.b16 %v324
    %v1337 = vunpack.c.h.b16 %v324
    %v1338 = vunpack.c.l.b16 %v325
    %v1339 = vunpack.c.h.b16 %v325
    %v1340 = vunpack.c.l.b16 %v326
    %v1341 = vunpack.c.h.b16 %v326
    %v1342 = vunpack.c.l.b16 %v327
    %v1343 = vunpack.c.h.b16 %v327
    %v1344 = vunpack.c.l.b16 %v328
    %v1345 = vunpack.c.h.b16 %v328
    %v1346 = vunpack.c.l.b16 %v329
    %v1347 = vunpack.c.h.b16 %v329
    %v1348 = vunpack.c.l.b16 %v330
    %v1349 = vunpack.c.h.b16 %v330
    %v1350 = vunpack.c.l.b16 %v331
    %v1351 = vunpack.c.h.b16 %v331
    %v1352 = vunpack.c.l.b16 %v332
    %v1353 = vunpack.c.h.b16 %v332
    %v1354 = vunpack.c.l.b16 %v333
    %v1355 = vunpack.c.h.b16 %v333
    %v1356 = vunpack.c.l.b16 %v334
    %v1357 = vunpack.c.h.b16 %v334
    %v1358 = vunpack.c.l.b16 %v335
    %v1359 = vunpack.c.h.b16 %v335
    %v1360 = vunpack.c.l.b16 %v336
    %v1361 = vunpack.c.h.b16 %v336
    %v1362 = vunpack.c.l.b16 %v337
    %v1363 = vunpack.c.h.b16 %v337
    %v1364 = vunpack.c.l.b16 %v338
    %v1365 = vunpack.c.h.b16 %v338
    %v1366 = vunpack.c.l.b16 %v339
    %v1367 = vunpack.c.h.b16 %v339
    %v1368 = vunpack.c.l.b16 %v340
    %v1369 = vunpack.c.h.b16 %v340
    %v1370 = vunpack.c.l.b16 %v341
    %v1371 = vunpack.c.h.b16 %v341
    %v1372 = vunpack.c.l.b16 %v342
    %v1373 = vunpack.c.h.b16 %v342
    %v1374 = vunpack.c.l.b16 %v343
    %v1375 = vunpack.c.h.b16 %v343
    %v1376 = vunpack.c.l.b16 %v344
    %v1377 = vunpack.c.h.b16 %v344
    %v1378 = vunpack.c.l.b16 %v345
    %v1379 = vunpack.c.h.b16 %v345
    %v1380 = vunpack.c.l.b16 %v346
    %v1381 = vunpack.c.h.b16 %v346
    %v1382 = vunpack.c.l.b16 %v347
    %v1383 = vunpack.c.h.b16 %v347
    %v1384 = vunpack.c.l.b16 %v348
    %v1385 = vunpack.c.h.b16 %v348
    %v1386 = vunpack.c.l.b16 %v349
    %v1387 = vunpack.c.h.b16 %v349
    %v1388 = vunpack.c.l.b16 %v350
    %v1389 = vunpack.c.h.b16 %v350
    %v1390 = vunpack.c.l.b16 %v351
    %v1391 = vunpack.c.h.b16 %v351
    %v1392 = vunpack.c.l.b16 %v352
    %v1393 = vunpack.c.h.b16 %v352
    %v1394 = vunpack.c.l.b16 %v353
    %v1395 = vunpack.c.h.b16 %v353
    %v1396 = vunpack.c.l.b16 %v354
    %v1397 = vunpack.c.h.b16 %v354
    %v1398 = vunpack.c.l.b16 %v355
    %v1399 = vunpack.c.h.b16 %v355
    %v1400 = vunpack.c.l.b16 %v356
    %v1401 = vunpack.c.h.b16 %v356
    %v1402 = vunpack.c.l.b16 %v357
    %v1403 = vunpack.c.h.b16 %v357
    %v1404 = vunpack.c.l.b16 %v358
    %v1405 = vunpack.c.h.b16 %v358
    %v1406 = vunpack.c.l.b16 %v359
    %v1407 = vunpack.c.h.b16 %v359
    %v1408 = vunpack.c.l.b16 %v360
    %v1409 = vunpack.c.h.b16 %v360
    %v1410 = vunpack.c.l.b16 %v361
    %v1411 = vunpack.c.h.b16 %v361
    %v1412 = vunpack.c.l.b16 %v362
    %v1413 = vunpack.c.h.b16 %v362
    %v1414 = vunpack.c.l.b16 %v363
    %v1415 = vunpack.c.h.b16 %v363
    %v1416 = vunpack.c.l.b16 %v364
    %v1417 = vunpack.c.h.b16 %v364
    %v1418 = vunpack.c.l.b16 %v365
    %v1419 = vunpack.c.h.b16 %v365
    %v1420 = vunpack.c.l.b16 %v366
    %v1421 = vunpack.c.h.b16 %v366
    %v1422 = vunpack.c.l.b16 %v367
    %v1423 = vunpack.c.h.b16 %v367
    %v1424 = vunpack.c.l.b16 %v368
    %v1425 = vunpack.c.h.b16 %v368
    %v1426 = vunpack.c.l.b16 %v369
    %v1427 = vunpack.c.h.b16 %v369
    %v1428 = vunpack.c.l.b16 %v370
    %v1429 = vunpack.c.h.b16 %v370
    %v1430 = vunpack.c.l.b16 %v371
    %v1431 = vunpack.c.h.b16 %v371
    %v1432 = vunpack.c.l.b16 %v372
    %v1433 = vunpack.c.h.b16 %v372
    %v1434 = vunpack.c.l.b16 %v373
    %v1435 = vunpack.c.h.b16 %v373
    %v1436 = vunpack.c.l.b16 %v374
    %v1437 = vunpack.c.h.b16 %v374
    %v1438 = vunpack.c.l.b16 %v375
    %v1439 = vunpack.c.h.b16 %v375
    %v1440 = vunpack.c.l.b16 %v376
    %v1441 = vunpack.c.h.b16 %v376
    %v1442 = vunpack.c.l.b16 %v377
    %v1443 = vunpack.c.h.b16 %v377
    %v1444 = vunpack.c.l.b16 %v378
    %v1445 = vunpack.c.h.b16 %v378
    %v1446 = vunpack.c.l.b16 %v379
    %v1447 = vunpack.c.h.b16 %v379
    %v1448 = vunpack.c.l.b16 %v380
    %v1449 = vunpack.c.h.b16 %v380
    %v1450 = vunpack.c.l.b16 %v381
    %v1451 = vunpack.c.h.b16 %v381
    %v1452 = vunpack.c.l.b16 %v382
    %v1453 = vunpack.c.h.b16 %v382
    %v1454 = vunpack.c.l.b16 %v383
    %v1455 = vunpack.c.h.b16 %v383
    %v1456 = vunpack.c.l.b16 %v384
    %v1457 = vunpack.c.h.b16 %v384
    %v1458 = vunpack.c.l.b16 %v385
    %v1459 = vunpack.c.h.b16 %v385
    %v1460 = vunpack.c.l.b16 %v386
    %v1461 = vunpack.c.h.b16 %v386
    %v1462 = vunpack.c.l.b16 %v387
    %v1463 = vunpack.c.h.b16 %v387
    %v1464 = vunpack.c.l.b16 %v388
    %v1465 = vunpack.c.h.b16 %v388
    %v1466 = vunpack.c.l.b16 %v389
    %v1467 = vunpack.c.h.b16 %v389
    %v1468 = vunpack.c.l.b16 %v390
    %v1469 = vunpack.c.h.b16 %v390
    %v1470 = vunpack.c.l.b16 %v391
    %v1471 = vunpack.c.h.b16 %v391
    %v1472 = vunpack.c.l.b16 %v392
    %v1473 = vunpack.c.h.b16 %v392
    %v1474 = vunpack.c.l.b16 %v393
    %v1475 = vunpack.c.h.b16 %v393
    %v1476 = vunpack.c.l.b16 %v394
    %v1477 = vunpack.c.h.b16 %v394
    %v1478 = vunpack.c.l.b16 %v395
    %v1479 = vunpack.c.h.b16 %v395
    %v1480 = vunpack.c.l.b16 %v396
    %v1481 = vunpack.c.h.b16 %v396
    %v1482 = vunpack.c.l.b16 %v397
    %v1483 = vunpack.c.h.b16 %v397
    %v1484 = vunpack.c.l.b16 %v398
    %v1485 = vunpack.c.h.b16 %v398
    %v1486 = vunpack.c.l.b16 %v399
    %v1487 = vunpack.c.h.b16 %v399
    %v1488 = vunpack.c.l.b16 %v400
    %v1489 = vunpack.c.h.b16 %v400
    %v1490 = vunpack.c.l.b16 %v401
    %v1491 = vunpack.c.h.b16 %v401
    %v1492 = vunpack.c.l.b16 %v402
    %v1493 = vunpack.c.h.b16 %v402
    %v1494 = vunpack.c.l.b16 %v403
    %v1495 = vunpack.c.h.b16 %v403
    %v1496 = vunpack.c.l.b16 %v404
    %v1497 = vunpack.c.h.b16 %v404
    %v1498 = vunpack.c.l.b16 %v405
    %v1499 = vunpack.c.h.b16 %v405
    %v1500 = vunpack.c.l.b16 %v406
    %v1501 = vunpack.c.h.b16 %v406
    %v1502 = vunpack.c.l.b16 %v407
    %v1503 = vunpack.c.h.b16 %v407
    %v1504 = vunpack.c.l.b16 %v408
    %v1505 = vunpack.c.h.b16 %v408
    %v1506 = vunpack.c.l.b16 %v409
    %v1507 = vunpack.c.h.b16 %v409
    %v1508 = vunpack.c.l.b16 %v410
    %v1509 = vunpack.c.h.b16 %v410
    %v1510 = vunpack.c.l.b16 %v411
    %v1511 = vunpack.c.h.b16 %v411
    %v1512 = vunpack.c.l.b16 %v412
    %v1513 = vunpack.c.h.b16 %v412
    %v1514 = vunpack.c.l.b16 %v413
    %v1515 = vunpack.c.h.b16 %v413
    %v1516 = vunpack.c.l.b16 %v414
    %v1517 = vunpack.c.h.b16 %v414
    %v1518 = vunpack.c.l.b16 %v415
    %v1519 = vunpack.c.h.b16 %v415
    %v1520 = vunpack.c.l.b16 %v416
    %v1521 = vunpack.c.h.b16 %v416
    %v1522 = vunpack.c.l.b16 %v417
    %v1523 = vunpack.c.h.b16 %v417
    %v1524 = vunpack.c.l.b16 %v418
    %v1525 = vunpack.c.h.b16 %v418
    %v1526 = vunpack.c.l.b16 %v419
    %v1527 = vunpack.c.h.b16 %v419
    %v1528 = vunpack.c.l.b16 %v420
    %v1529 = vunpack.c.h.b16 %v420
    %v1530 = vunpack.c.l.b16 %v421
    %v1531 = vunpack.c.h.b16 %v421
    %v1532 = vunpack.c.l.b16 %v422
    %v1533 = vunpack.c.h.b16 %v422
    %v1534 = vunpack.c.l.b16 %v423
    %v1535 = vunpack.c.h.b16 %v423
    %v1536 = vunpack.c.l.b16 %v424
    %v1537 = vunpack.c.h.b16 %v424
    %v1538 = vunpack.c.l.b16 %v425
    %v1539 = vunpack.c.h.b16 %v425
    %v1540 = vunpack.c.l.b16 %v426
    %v1541 = vunpack.c.h.b16 %v426
    %v1542 = vunpack.c.l.b16 %v427
    %v1543 = vunpack.c.h.b16 %v427
    %v1544 = vunpack.c.l.b16 %v428
    %v1545 = vunpack.c.h.b16 %v428
    %v1546 = vunpack.c.l.b16 %v429
    %v1547 = vunpack.c.h.b16 %v429
    %v1548 = vunpack.c.l.b16 %v430
    %v1549 = vunpack.c.h.b16 %v430
    %v1550 = vunpack.c.l.b16 %v431
    %v1551 = vunpack.c.h.b16 %v431
    %v1552 = vunpack.c.l.b16 %v432
    %v1553 = vunpack.c.h.b16 %v432
    %v1554 = vunpack.c.l.b16 %v433
    %v1555 = vunpack.c.h.b16 %v433
    %v1556 = vunpack.c.l.b16 %v434
    %v1557 = vunpack.c.h.b16 %v434
    %v1558 = vunpack.c.l.b16 %v435
    %v1559 = vunpack.c.h.b16 %v435
    %v1560 = vunpack.c.l.b16 %v436
    %v1561 = vunpack.c.h.b16 %v436
    %v1562 = vunpack.c.l.b16 %v437
    %v1563 = vunpack.c.h.b16 %v437
    %v1564 = vunpack.c.l.b16 %v438
    %v1565 = vunpack.c.h.b16 %v438
    %v1566 = vunpack.c.l.b16 %v439
    %v1567 = vunpack.c.h.b16 %v439
    %v1568 = vunpack.c.l.b16 %v440
    %v1569 = vunpack.c.h.b16 %v440
    %v1570 = vunpack.c.l.b16 %v441
    %v1571 = vunpack.c.h.b16 %v441
    %v1572 = vunpack.c.l.b16 %v442
    %v1573 = vunpack.c.h.b16 %v442
    %v1574 = vunpack.c.l.b16 %v443
    %v1575 = vunpack.c.h.b16 %v443
    %v1576 = vunpack.c.l.b16 %v444
    %v1577 = vunpack.c.h.b16 %v444
    %v1578 = vunpack.c.l.b16 %v445
    %v1579 = vunpack.c.h.b16 %v445
    %v1580 = vunpack.c.l.b16 %v446
    %v1581 = vunpack.c.h.b16 %v446
    %v1582 = vunpack.c.l.b16 %v447
    %v1583 = vunpack.c.h.b16 %v447
    %v1584 = vunpack.c.l.b16 %v448
    %v1585 = vunpack.c.h.b16 %v448
    %v1586 = vunpack.c.l.b16 %v449
    %v1587 = vunpack.c.h.b16 %v449
    %v1588 = vunpack.c.l.b16 %v450
    %v1589 = vunpack.c.h.b16 %v450
    %v1590 = vunpack.c.l.b16 %v451
    %v1591 = vunpack.c.h.b16 %v451
    %v1592 = vunpack.c.l.b16 %v452
    %v1593 = vunpack.c.h.b16 %v452
    %v1594 = vunpack.c.l.b16 %v453
    %v1595 = vunpack.c.h.b16 %v453
    %v1596 = vunpack.c.l.b16 %v454
    %v1597 = vunpack.c.h.b16 %v454
    %v1598 = vunpack.c.l.b16 %v455
    %v1599 = vunpack.c.h.b16 %v455
    %v1600 = vunpack.c.l.b16 %v456
    %v1601 = vunpack.c.h.b16 %v456
    %v1602 = vunpack.c.l.b16 %v457
    %v1603 = vunpack.c.h.b16 %v457
    %v1604 = vunpack.c.l.b16 %v458
    %v1605 = vunpack.c.h.b16 %v458
    %v1606 = vunpack.c.l.b16 %v459
    %v1607 = vunpack.c.h.b16 %v459
    %v1608 = vunpack.c.l.b16 %v460
    %v1609 = vunpack.c.h.b16 %v460
    %v1610 = vunpack.c.l.b16 %v461
    %v1611 = vunpack.c.h.b16 %v461
    %v1612 = vunpack.c.l.b16 %v462
    %v1613 = vunpack.c.h.b16 %v462
    %v1614 = vunpack.c.l.b16 %v463
    %v1615 = vunpack.c.h.b16 %v463
    %v1616 = vunpack.c.l.b16 %v464
    %v1617 = vunpack.c.h.b16 %v464
    %v1618 = vunpack.c.l.b16 %v465
    %v1619 = vunpack.c.h.b16 %v465
    %v1620 = vunpack.c.l.b16 %v466
    %v1621 = vunpack.c.h.b16 %v466
    %v1622 = vunpack.c.l.b16 %v467
    %v1623 = vunpack.c.h.b16 %v467
    %v1624 = vunpack.c.l.b16 %v468
    %v1625 = vunpack.c.h.b16 %v468
    %v1626 = vunpack.c.l.b16 %v469
    %v1627 = vunpack.c.h.b16 %v469
    %v1628 = vunpack.c.l.b16 %v470
    %v1629 = vunpack.c.h.b16 %v470
    %v1630 = vunpack.c.l.b16 %v471
    %v1631 = vunpack.c.h.b16 %v471
    %v1632 = vunpack.c.l.b16 %v472
    %v1633 = vunpack.c.h.b16 %v472
    %v1634 = vunpack.c.l.b16 %v473
    %v1635 = vunpack.c.h.b16 %v473
    %v1636 = vunpack.c.l.b16 %v474
    %v1637 = vunpack.c.h.b16 %v474
    %v1638 = vunpack.c.l.b16 %v475
    %v1639 = vunpack.c.h.b16 %v475
    %v1640 = vunpack.c.l.b16 %v476
    %v1641 = vunpack.c.h.b16 %v476
    %v1642 = vunpack.c.l.b16 %v477
    %v1643 = vunpack.c.h.b16 %v477
    %v1644 = vunpack.c.l.b16 %v478
    %v1645 = vunpack.c.h.b16 %v478
    %v1646 = vunpack.c.l.b16 %v479
    %v1647 = vunpack.c.h.b16 %v479
    %v1648 = vunpack.c.l.b16 %v480
    %v1649 = vunpack.c.h.b16 %v480
    %v1650 = vunpack.c.l.b16 %v481
    %v1651 = vunpack.c.h.b16 %v481
    %v1652 = vunpack.c.l.b16 %v482
    %v1653 = vunpack.c.h.b16 %v482
    %v1654 = vunpack.c.l.b16 %v483
    %v1655 = vunpack.c.h.b16 %v483
    %v1656 = vunpack.c.l.b16 %v484
    %v1657 = vunpack.c.h.b16 %v484
    %v1658 = vunpack.c.l.b16 %v485
    %v1659 = vunpack.c.h.b16 %v485
    %v1660 = vunpack.c.l.b16 %v486
    %v1661 = vunpack.c.h.b16 %v486
    %v1662 = vunpack.c.l.b16 %v487
    %v1663 = vunpack.c.h.b16 %v487
    %v1664 = vunpack.c.l.b16 %v488
    %v1665 = vunpack.c.h.b16 %v488
    %v1666 = vunpack.c.l.b16 %v489
    %v1667 = vunpack.c.h.b16 %v489
    %v1668 = vunpack.c.l.b16 %v490
    %v1669 = vunpack.c.h.b16 %v490
    %v1670 = vunpack.c.l.b16 %v491
    %v1671 = vunpack.c.h.b16 %v491
    %v1672 = vunpack.c.l.b16 %v492
    %v1673 = vunpack.c.h.b16 %v492
    %v1674 = vunpack.c.l.b16 %v493
    %v1675 = vunpack.c.h.b16 %v493
    %v1676 = vunpack.c.l.b16 %v494
    %v1677 = vunpack.c.h.b16 %v494
    %v1678 = vunpack.c.l.b16 %v495
    %v1679 = vunpack.c.h.b16 %v495
    %v1680 = vunpack.c.l.b16 %v496
    %v1681 = vunpack.c.h.b16 %v496
    %v1682 = vunpack.c.l.b16 %v497
    %v1683 = vunpack.c.h.b16 %v497
    %v1684 = vunpack.c.l.b16 %v498
    %v1685 = vunpack.c.h.b16 %v498
    %v1686 = vunpack.c.l.b16 %v499
    %v1687 = vunpack.c.h.b16 %v499
    %v1688 = vunpack.c.l.b16 %v500
    %v1689 = vunpack.c.h.b16 %v500
    %v1690 = vunpack.c.l.b16 %v501
    %v1691 = vunpack.c.h.b16 %v501
    %v1692 = vunpack.c.l.b16 %v502
    %v1693 = vunpack.c.h.b16 %v502
    %v1694 = vunpack.c.l.b16 %v503
    %v1695 = vunpack.c.h.b16 %v503
    %v1696 = vunpack.c.l.b16 %v504
    %v1697 = vunpack.c.h.b16 %v504
    %v1698 = vunpack.c.l.b16 %v505
    %v1699 = vunpack.c.h.b16 %v505
    %v1700 = vunpack.c.l.b16 %v506
    %v1701 = vunpack.c.h.b16 %v506
    %v1702 = vunpack.c.l.b16 %v507
    %v1703 = vunpack.c.h.b16 %v507
    %v1704 = vunpack.c.l.b16 %v508
    %v1705 = vunpack.c.h.b16 %v508
    %v1706 = vunpack.c.l.b16 %v509
    %v1707 = vunpack.c.h.b16 %v509
    %v1708 = vunpack.c.l.b16 %v510
    %v1709 = vunpack.c.h.b16 %v510
    %v1710 = vunpack.c.l.b16 %v511
    %v1711 = vunpack.c.h.b16 %v511
    %v1712 = vunpack.c.l.b16 %v512
    %v1713 = vunpack.c.h.b16 %v512
    %v1714 = vunpack.c.l.b16 %v513
    %v1715 = vunpack.c.h.b16 %v513
    %v1716 = vunpack.c.l.b16 %v514
    %v1717 = vunpack.c.h.b16 %v514
    %v1718 = vunpack.c.l.b16 %v515
    %v1719 = vunpack.c.h.b16 %v515
    %v1720 = vunpack.c.l.b16 %v516
    %v1721 = vunpack.c.h.b16 %v516
    %v1722 = vunpack.c.l.b16 %v517
    %v1723 = vunpack.c.h.b16 %v517
    %v1724 = vunpack.c.l.b16 %v518
    %v1725 = vunpack.c.h.b16 %v518
    %v1726 = vunpack.c.l.b16 %v519
    %v1727 = vunpack.c.h.b16 %v519
    %v1728 = vunpack.c.l.b16 %v520
    %v1729 = vunpack.c.h.b16 %v520
    %v1730 = vunpack.c.l.b16 %v521
    %v1731 = vunpack.c.h.b16 %v521
    %v1732 = vunpack.c.l.b16 %v522
    %v1733 = vunpack.c.h.b16 %v522
    %v1734 = vunpack.c.l.b16 %v523
    %v1735 = vunpack.c.h.b16 %v523
    %v1736 = vunpack.c.l.b16 %v524
    %v1737 = vunpack.c.h.b16 %v524
    %v1738 = vunpack.c.l.b16 %v525
    %v1739 = vunpack.c.h.b16 %v525
    %v1740 = vunpack.c.l.b16 %v526
    %v1741 = vunpack.c.h.b16 %v526
    %v1742 = vunpack.c.l.b16 %v527
    %v1743 = vunpack.c.h.b16 %v527
    %v1744 = vunpack.c.l.b16 %v528
    %v1745 = vunpack.c.h.b16 %v528
    %v1746 = vunpack.c.l.b16 %v529
    %v1747 = vunpack.c.h.b16 %v529
    %v1748 = vpack.c.b16 %v972, %v964
    %v1749 = vpack.c.b16 %v973, %v965
    %v1750 = vpack.c.b16 %v974, %v966
    %v1751 = vpack.c.b16 %v975, %v967
    %v1752 = vpack.c.b16 %v976, %v968
    %v1753 = vpack.c.b16 %v977, %v969
    %v1754 = vpack.c.b16 %v978, %v970
    %v1755 = vpack.c.b16 %v979, %v971
    %v1756 = vpack.c.b16 %v988, %v980
    %v1757 = vpack.c.b16 %v989, %v981
    %v1758 = vpack.c.b16 %v990, %v982
    %v1759 = vpack.c.b16 %v991, %v983
    %v1760 = vpack.c.b16 %v992, %v984
    %v1761 = vpack.c.b16 %v993, %v985
    %v1762 = vpack.c.b16 %v994, %v986
    %v1763 = vpack.c.b16 %v995, %v987
    %v1764 = vpack.c.b16 %v1004, %v996
    %v1765 = vpack.c.b16 %v1005, %v997
    %v1766 = vpack.c.b16 %v1006, %v998
    %v1767 = vpack.c.b16 %v1007, %v999
    %v1768 = vpack.c.b16 %v1008, %v1000
    %v1769 = vpack.c.b16 %v1009, %v1001
    %v1770 = vpack.c.b16 %v1010, %v1002
    %v1771 = vpack.c.b16 %v1011, %v1003
    %v1772 = vpack.c.b16 %v1020, %v1012
    %v1773 = vpack.c.b16 %v1021, %v1013
    %v1774 = vpack.c.b16 %v1022, %v1014
    %v1775 = vpack.c.b16 %v1023, %v1015
    %v1776 = vpack.c.b16 %v1024, %v1016
    %v1777 = vpack.c.b16 %v1025, %v1017
    %v1778 = vpack.c.b16 %v1026, %v1018
    %v1779 = vpack.c.b16 %v1027, %v1019
    %v1780 = vpack.c.b16 %v1036, %v1028
    %v1781 = vpack.c.b16 %v1037, %v1029
    %v1782 = vpack.c.b16 %v1038, %v1030
    %v1783 = vpack.c.b16 %v1039, %v1031
    %v1784 = vpack.c.b16 %v1040, %v1032
    %v1785 = vpack.c.b16 %v1041, %v1033
    %v1786 = vpack.c.b16 %v1042, %v1034
    %v1787 = vpack.c.b16 %v1043, %v1035
    %v1788 = vpack.c.b16 %v1052, %v1044
    %v1789 = vpack.c.b16 %v1053, %v1045
    %v1790 = vpack.c.b16 %v1054, %v1046
    %v1791 = vpack.c.b16 %v1055, %v1047
    %v1792 = vpack.c.b16 %v1056, %v1048
    %v1793 = vpack.c.b16 %v1057, %v1049
    %v1794 = vpack.c.b16 %v1058, %v1050
    %v1795 = vpack.c.b16 %v1059, %v1051
    %v1796 = vpack.c.b16 %v1068, %v1060
    %v1797 = vpack.c.b16 %v1069, %v1061
    %v1798 = vpack.c.b16 %v1070, %v1062
    %v1799 = vpack.c.b16 %v1071, %v1063
    %v1800 = vpack.c.b16 %v1072, %v1064
    %v1801 = vpack.c.b16 %v1073, %v1065
    %v1802 = vpack.c.b16 %v1074, %v1066
    %v1803 = vpack.c.b16 %v1075, %v1067
    %v1804 = vpack.c.b16 %v1084, %v1076
    %v1805 = vpack.c.b16 %v1085, %v1077
    %v1806 = vpack.c.b16 %v1086, %v1078
    %v1807 = vpack.c.b16 %v1087, %v1079
    %v1808 = vpack.c.b16 %v1088, %v1080
    %v1809 = vpack.c.b16 %v1089, %v1081
    %v1810 = vpack.c.b16 %v1090, %v1082
    %v1811 = vpack.c.b16 %v1091, %v1083
    %v1812 = vpack.c.b16 %v1100, %v1092
    %v1813 = vpack.c.b16 %v1101, %v1093
    %v1814 = vpack.c.b16 %v1102, %v1094
    %v1815 = vpack.c.b16 %v1103, %v1095
    %v1816 = vpack.c.b16 %v1104, %v1096
    %v1817 = vpack.c.b16 %v1105, %v1097
    %v1818 = vpack.c.b16 %v1106, %v1098
    %v1819 = vpack.c.b16 %v1107, %v1099
    %v1820 = vpack.c.b16 %v1116, %v1108
    %v1821 = vpack.c.b16 %v1117, %v1109
    %v1822 = vpack.c.b16 %v1118, %v1110
    %v1823 = vpack.c.b16 %v1119, %v1111
    %v1824 = vpack.c.b16 %v1120, %v1112
    %v1825 = vpack.c.b16 %v1121, %v1113
    %v1826 = vpack.c.b16 %v1122, %v1114
    %v1827 = vpack.c.b16 %v1123, %v1115
    %v1828 = vpack.c.b16 %v1132, %v1124
    %v1829 = vpack.c.b16 %v1133, %v1125
    %v1830 = vpack.c.b16 %v1134, %v1126
    %v1831 = vpack.c.b16 %v1135, %v1127
    %v1832 = vpack.c.b16 %v1136, %v1128
    %v1833 = vpack.c.b16 %v1137, %v1129
    %v1834 = vpack.c.b16 %v1138, %v1130
    %v1835 = vpack.c.b16 %v1139, %v1131
    %v1836 = vpack.c.b16 %v1148, %v1140
    %v1837 = vpack.c.b16 %v1149, %v1141
    %v1838 = vpack.c.b16 %v1150, %v1142
    %v1839 = vpack.c.b16 %v1151, %v1143
    %v1840 = vpack.c.b16 %v1152, %v1144
    %v1841 = vpack.c.b16 %v1153, %v1145
    %v1842 = vpack.c.b16 %v1154, %v1146
    %v1843 = vpack.c.b16 %v1155, %v1147
    %v1844 = vpack.c.b16 %v1164, %v1156
    %v1845 = vpack.c.b16 %v1165, %v1157
    %v1846 = vpack.c.b16 %v1166, %v1158
    %v1847 = vpack.c.b16 %v1167, %v1159
    %v1848 = vpack.c.b16 %v1168, %v1160
    %v1849 = vpack.c.b16 %v1169, %v1161
    %v1850 = vpack.c.b16 %v1170, %v1162
    %v1851 = vpack.c.b16 %v1171, %v1163
    %v1852 = vpack.c.b16 %v1180, %v1172
    %v1853 = vpack.c.b16 %v1181, %v1173
    %v1854 = vpack.c.b16 %v1182, %v1174
    %v1855 = vpack.c.b16 %v1183, %v1175
    %v1856 = vpack.c.b16 %v1184, %v1176
    %v1857 = vpack.c.b16 %v1185, %v1177
    %v1858 = vpack.c.b16 %v1186, %v1178
    %v1859 = vpack.c.b16 %v1187, %v1179
    %v1860 = vpack.c.b16 %v1196, %v1188
    %v1861 = vpack.c.b16 %v1197, %v1189
    %v1862 = vpack.c.b16 %v1198, %v1190
    %v1863 = vpack.c.b16 %v1199, %v1191
    %v1864 = vpack.c.b16 %v1200, %v1192
    %v1865 = vpack.c.b16 %v1201, %v1193
    %v1866 = vpack.c.b16 %v1202, %v1194
    %v1867 = vpack.c.b16 %v1203, %v1195
    %v1868 = vpack.c.b16 %v1212, %v1204
    %v1869 = vpack.c.b16 %v1213, %v1205
    %v1870 = vpack.c.b16 %v1214, %v1206
    %v1871 = vpack.c.b16 %v1215, %v1207
    %v1872 = vpack.c.b16 %v1216, %v1208
    %v1873 = vpack.c.b16 %v1217, %v1209
    %v1874 = vpack.c.b16 %v1218, %v1210
    %v1875 = vpack.c.b16 %v1219, %v1211
    %v1876 = vpack.c.b16 %v1228, %v1220
    %v1877 = vpack.c.b16 %v1229, %v1221
    %v1878 = vpack.c.b16 %v1230, %v1222
    %v1879 = vpack.c.b16 %v1231, %v1223
    %v1880 = vpack.c.b16 %v1232, %v1224
    %v1881 = vpack.c.b16 %v1233, %v1225
    %v1882 = vpack.c.b16 %v1234, %v1226
    %v1883 = vpack.c.b16 %v1235, %v1227
    %v1884 = vpack.c.b16 %v1244, %v1236
    %v1885 = vpack.c.b16 %v1245, %v1237
    %v1886 = vpack.c.b16 %v1246, %v1238
    %v1887 = vpack.c.b16 %v1247, %v1239
    %v1888 = vpack.c.b16 %v1248, %v1240
    %v1889 = vpack.c.b16 %v1249, %v1241
    %v1890 = vpack.c.b16 %v1250, %v1242
    %v1891 = vpack.c.b16 %v1251, %v1243
    %v1892 = vpack.c.b16 %v1260, %v1252
    %v1893 = vpack.c.b16 %v1261, %v1253
    %v1894 = vpack.c.b16 %v1262, %v1254
    %v1895 = vpack.c.b16 %v1263, %v1255
    %v1896 = vpack.c.b16 %v1264, %v1256
    %v1897 = vpack.c.b16 %v1265, %v1257
    %v1898 = vpack.c.b16 %v1266, %v1258
    %v1899 = vpack.c.b16 %v1267, %v1259
    %v1900 = vpack.c.b16 %v1276, %v1268
    %v1901 = vpack.c.b16 %v1277, %v1269
    %v1902 = vpack.c.b16 %v1278, %v1270
    %v1903 = vpack.c.b16 %v1279, %v1271
    %v1904 = vpack.c.b16 %v1280, %v1272
    %v1905 = vpack.c.b16 %v1281, %v1273
    %v1906 = vpack.c.b16 %v1282, %v1274
    %v1907 = vpack.c.b16 %v1283, %v1275
    %v1908 = vpack.c.b16 %v1292, %v1284
    %v1909 = vpack.c.b16 %v1293, %v1285
    %v1910 = vpack.c.b16 %v1294, %v1286
    %v1911 = vpack.c.b16 %v1295, %v1287
    %v1912 = vpack.c.b16 %v1296, %v1288
    %v1913 = vpack.c.b16 %v1297, %v1289
    %v1914 = vpack.c.b16 %v1298, %v1290
    %v1915 = vpack.c.b16 %v1299, %v1291
    %v1916 = vpack.c.b16 %v1308, %v1300
    %v1917 = vpack.c.b16 %v1309, %v1301
    %v1918 = vpack.c.b16 %v1310, %v1302
    %v1919 = vpack.c.b16 %v1311, %v1303
    %v1920 = vpack.c.b16 %v1312, %v1304
    %v1921 = vpack.c.b16 %v1313, %v1305
    %v1922 = vpack.c.b16 %v1314, %v1306
    %v1923 = vpack.c.b16 %v1315, %v1307
    %v1924 = vpack.c.b16 %v1324, %v1316
    %v1925 = vpack.c.b16 %v1325, %v1317
    %v1926 = vpack.c.b16 %v1326, %v1318
    %v1927 = vpack.c.b16 %v1327, %v1319
    %v1928 = vpack.c.b16 %v1328, %v1320
    %v1929 = vpack.c.b16 %v1329, %v1321
    %v1930 = vpack.c.b16 %v1330, %v1322
    %v1931 = vpack.c.b16 %v1331, %v1323
    %v1932 = vpack.c.b16 %v1340, %v1332
    %v1933 = vpack.c.b16 %v1341, %v1333
    %v1934 = vpack.c.b16 %v1342, %v1334
    %v1935 = vpack.c.b16 %v1343, %v1335
    %v1936 = vpack.c.b16 %v1344, %v1336
    %v1937 = vpack.c.b16 %v1345, %v1337
    %v1938 = vpack.c.b16 %v1346, %v1338
    %v1939 = vpack.c.b16 %v1347, %v1339
    %v1940 = vpack.c.b16 %v1356, %v1348
    %v1941 = vpack.c.b16 %v1357, %v1349
    %v1942 = vpack.c.b16 %v1358, %v1350
    %v1943 = vpack.c.b16 %v1359, %v1351
    %v1944 = vpack.c.b16 %v1360, %v1352
    %v1945 = vpack.c.b16 %v1361, %v1353
    %v1946 = vpack.c.b16 %v1362, %v1354
    %v1947 = vpack.c.b16 %v1363, %v1355
    %v1948 = vpack.c.b16 %v1372, %v1364
    %v1949 = vpack.c.b16 %v1373, %v1365
    %v1950 = vpack.c.b16 %v1374, %v1366
    %v1951 = vpack.c.b16 %v1375, %v1367
    %v1952 = vpack.c.b16 %v1376, %v1368
    %v1953 = vpack.c.b16 %v1377, %v1369
    %v1954 = vpack.c.b16 %v1378, %v1370
    %v1955 = vpack.c.b16 %v1379, %v1371
    %v1956 = vpack.c.b16 %v1388, %v1380
    %v1957 = vpack.c.b16 %v1389, %v1381
    %v1958 = vpack.c.b16 %v1390, %v1382
    %v1959 = vpack.c.b16 %v1391, %v1383
    %v1960 = vpack.c.b16 %v1392, %v1384
    %v1961 = vpack.c.b16 %v1393, %v1385
    %v1962 = vpack.c.b16 %v1394, %v1386
    %v1963 = vpack.c.b16 %v1395, %v1387
    %v1964 = vpack.c.b16 %v1404, %v1396
    %v1965 = vpack.c.b16 %v1405, %v1397
    %v1966 = vpack.c.b16 %v1406, %v1398
    %v1967 = vpack.c.b16 %v1407, %v1399
    %v1968 = vpack.c.b16 %v1408, %v1400
    %v1969 = vpack.c.b16 %v1409, %v1401
    %v1970 = vpack.c.b16 %v1410, %v1402
    %v1971 = vpack.c.b16 %v1411, %v1403
    %v1972 = vpack.c.b16 %v1420, %v1412
    %v1973 = vpack.c.b16 %v1421, %v1413
    %v1974 = vpack.c.b16 %v1422, %v1414
    %v1975 = vpack.c.b16 %v1423, %v1415
    %v1976 = vpack.c.b16 %v1424, %v1416
    %v1977 = vpack.c.b16 %v1425, %v1417
    %v1978 = vpack.c.b16 %v1426, %v1418
    %v1979 = vpack.c.b16 %v1427, %v1419
    %v1980 = vpack.c.b16 %v1436, %v1428
    %v1981 = vpack.c.b16 %v1437, %v1429
    %v1982 = vpack.c.b16 %v1438, %v1430
    %v1983 = vpack.c.b16 %v1439, %v1431
    %v1984 = vpack.c.b16 %v1440, %v1432
    %v1985 = vpack.c.b16 %v1441, %v1433
    %v1986 = vpack.c.b16 %v1442, %v1434
    %v1987 = vpack.c.b16 %v1443, %v1435
    %v1988 = vpack.c.b16 %v1452, %v1444
    %v1989 = vpack.c.b16 %v1453, %v1445
    %v1990 = vpack.c.b16 %v1454, %v1446
    %v1991 = vpack.c.b16 %v1455, %v1447
    %v1992 = vpack.c.b16 %v1456, %v1448
    %v1993 = vpack.c.b16 %v1457, %v1449
    %v1994 = vpack.c.b16 %v1458, %v1450
    %v1995 = vpack.c.b16 %v1459, %v1451
    %v1996 = vpack.c.b16 %v1468, %v1460
    %v1997 = vpack.c.b16 %v1469, %v1461
    %v1998 = vpack.c.b16 %v1470, %v1462
    %v1999 = vpack.c.b16 %v1471, %v1463
    %v2000 = vpack.c.b16 %v1472, %v1464
    %v2001 = vpack.c.b16 %v1473, %v1465
    %v2002 = vpack.c.b16 %v1474, %v1466
    %v2003 = vpack.c.b16 %v1475, %v1467
    %v2004 = vpack.c.b16 %v1484, %v1476
    %v2005 = vpack.c.b16 %v1485, %v1477
    %v2006 = vpack.c.b16 %v1486, %v1478
    %v2007 = vpack.c.b16 %v1487, %v1479
    %v2008 = vpack.c.b16 %v1488, %v1480
    %v2009 = vpack.c.b16 %v1489, %v1481
    %v2010 = vpack.c.b16 %v1490, %v1482
    %v2011 = vpack.c.b16 %v1491, %v1483
    %v2012 = vpack.c.b16 %v1500, %v1492
    %v2013 = vpack.c.b16 %v1501, %v1493
    %v2014 = vpack.c.b16 %v1502, %v1494
    %v2015 = vpack.c.b16 %v1503, %v1495
    %v2016 = vpack.c.b16 %v1504, %v1496
    %v2017 = vpack.c.b16 %v1505, %v1497
    %v2018 = vpack.c.b16 %v1506, %v1498
    %v2019 = vpack.c.b16 %v1507, %v1499
    %v2020 = vpack.c.b16 %v1516, %v1508
    %v2021 = vpack.c.b16 %v1517, %v1509
    %v2022 = vpack.c.b16 %v1518, %v1510
    %v2023 = vpack.c.b16 %v1519, %v1511
    %v2024 = vpack.c.b16 %v1520, %v1512
    %v2025 = vpack.c.b16 %v1521, %v1513
    %v2026 = vpack.c.b16 %v1522, %v1514
    %v2027 = vpack.c.b16 %v1523, %v1515
    %v2028 = vpack.c.b16 %v1532, %v1524
    %v2029 = vpack.c.b16 %v1533, %v1525
    %v2030 = vpack.c.b16 %v1534, %v1526
    %v2031 = vpack.c.b16 %v1535, %v1527
    %v2032 = vpack.c.b16 %v1536, %v1528
    %v2033 = vpack.c.b16 %v1537, %v1529
    %v2034 = vpack.c.b16 %v1538, %v1530
    %v2035 = vpack.c.b16 %v1539, %v1531
    %v2036 = vpack.c.b16 %v1548, %v1540
    %v2037 = vpack.c.b16 %v1549, %v1541
    %v2038 = vpack.c.b16 %v1550, %v1542
    %v2039 = vpack.c.b16 %v1551, %v1543
    %v2040 = vpack.c.b16 %v1552, %v1544
    %v2041 = vpack.c.b16 %v1553, %v1545
    %v2042 = vpack.c.b16 %v1554, %v1546
    %v2043 = vpack.c.b16 %v1555, %v1547
    %v2044 = vpack.c.b16 %v1564, %v1556
    %v2045 = vpack.c.b16 %v1565, %v1557
    %v2046 = vpack.c.b16 %v1566, %v1558
    %v2047 = vpack.c.b16 %v1567, %v1559
    %v2048 = vpack.c.b16 %v1568, %v1560
    %v2049 = vpack.c.b16 %v1569, %v1561
    %v2050 = vpack.c.b16 %v1570, %v1562
    %v2051 = vpack.c.b16 %v1571, %v1563
    %v2052 = vpack.c.b16 %v1580, %v1572
    %v2053 = vpack.c.b16 %v1581, %v1573
    %v2054 = vpack.c.b16 %v1582, %v1574
    %v2055 = vpack.c.b16 %v1583, %v1575
    %v2056 = vpack.c.b16 %v1584, %v1576
    %v2057 = vpack.c.b16 %v1585, %v1577
    %v2058 = vpack.c.b16 %v1586, %v1578
    %v2059 = vpack.c.b16 %v1587, %v1579
    %v2060 = vpack.c.b16 %v1596, %v1588
    %v2061 = vpack.c.b16 %v1597, %v1589
    %v2062 = vpack.c.b16 %v1598, %v1590
    %v2063 = vpack.c.b16 %v1599, %v1591
    %v2064 = vpack.c.b16 %v1600, %v1592
    %v2065 = vpack.c.b16 %v1601, %v1593
    %v2066 = vpack.c.b16 %v1602, %v1594
    %v2067 = vpack.c.b16 %v1603, %v1595
    %v2068 = vpack.c.b16 %v1612, %v1604
    %v2069 = vpack.c.b16 %v1613, %v1605
    %v2070 = vpack.c.b16 %v1614, %v1606
    %v2071 = vpack.c.b16 %v1615, %v1607
    %v2072 = vpack.c.b16 %v1616, %v1608
    %v2073 = vpack.c.b16 %v1617, %v1609
    %v2074 = vpack.c.b16 %v1618, %v1610
    %v2075 = vpack.c.b16 %v1619, %v1611
    %v2076 = vpack.c.b16 %v1628, %v1620
    %v2077 = vpack.c.b16 %v1629, %v1621
    %v2078 = vpack.c.b16 %v1630, %v1622
    %v2079 = vpack.c.b16 %v1631, %v1623
    %v2080 = vpack.c.b16 %v1632, %v1624
    %v2081 = vpack.c.b16 %v1633, %v1625
    %v2082 = vpack.c.b16 %v1634, %v1626
    %v2083 = vpack.c.b16 %v1635, %v1627
    %v2084 = vpack.c.b16 %v1644, %v1636
    %v2085 = vpack.c.b16 %v1645, %v1637
    %v2086 = vpack.c.b16 %v1646, %v1638
    %v2087 = vpack.c.b16 %v1647, %v1639
    %v2088 = vpack.c.b16 %v1648, %v1640
    %v2089 = vpack.c.b16 %v1649, %v1641
    %v2090 = vpack.c.b16 %v1650, %v1642
    %v2091 = vpack.c.b16 %v1651, %v1643
    %v2092 = vpack.c.b16 %v1660, %v1652
    %v2093 = vpack.c.b16 %v1661, %v1653
    %v2094 = vpack.c.b16 %v1662, %v1654
    %v2095 = vpack.c.b16 %v1663, %v1655
    %v2096 = vpack.c.b16 %v1664, %v1656
    %v2097 = vpack.c.b16 %v1665, %v1657
    %v2098 = vpack.c.b16 %v1666, %v1658
    %v2099 = vpack.c.b16 %v1667, %v1659
    %v2100 = vpack.c.b16 %v1676, %v1668
    %v2101 = vpack.c.b16 %v1677, %v1669
    %v2102 = vpack.c.b16 %v1678, %v1670
    %v2103 = vpack.c.b16 %v1679, %v1671
    %v2104 = vpack.c.b16 %v1680, %v1672
    %v2105 = vpack.c.b16 %v1681, %v1673
    %v2106 = vpack.c.b16 %v1682, %v1674
    %v2107 = vpack.c.b16 %v1683, %v1675
    %v2108 = vpack.c.b16 %v1692, %v1684
    %v2109 = vpack.c.b16 %v1693, %v1685
    %v2110 = vpack.c.b16 %v1694, %v1686
    %v2111 = vpack.c.b16 %v1695, %v1687
    %v2112 = vpack.c.b16 %v1696, %v1688
    %v2113 = vpack.c.b16 %v1697, %v1689
    %v2114 = vpack.c.b16 %v1698, %v1690
    %v2115 = vpack.c.b16 %v1699, %v1691
    %v2116 = vpack.c.b16 %v1708, %v1700
    %v2117 = vpack.c.b16 %v1709, %v1701
    %v2118 = vpack.c.b16 %v1710, %v1702
    %v2119 = vpack.c.b16 %v1711, %v1703
    %v2120 = vpack.c.b16 %v1712, %v1704
    %v2121 = vpack.c.b16 %v1713, %v1705
    %v2122 = vpack.c.b16 %v1714, %v1706
    %v2123 = vpack.c.b16 %v1715, %v1707
    %v2124 = vpack.c.b16 %v1724, %v1716
    %v2125 = vpack.c.b16 %v1725, %v1717
    %v2126 = vpack.c.b16 %v1726, %v1718
    %v2127 = vpack.c.b16 %v1727, %v1719
    %v2128 = vpack.c.b16 %v1728, %v1720
    %v2129 = vpack.c.b16 %v1729, %v1721
    %v2130 = vpack.c.b16 %v1730, %v1722
    %v2131 = vpack.c.b16 %v1731, %v1723
    %v2132 = vpack.c.b16 %v1740, %v1732
    %v2133 = vpack.c.b16 %v1741, %v1733
    %v2134 = vpack.c.b16 %v1742, %v1734
    %v2135 = vpack.c.b16 %v1743, %v1735
    %v2136 = vpack.c.b16 %v1744, %v1736
    %v2137 = vpack.c.b16 %v1745, %v1737
    %v2138 = vpack.c.b16 %v1746, %v1738
    %v2139 = vpack.c.b16 %v1747, %v1739
    %vm2532 = vcmask 130048
    %v2534 = vsel %vm2532, %v137, 0
    %2536 = vmatprep.subr.bf16.mxu0 %v1805
    %2537 = vmatpush1.bf16.msra.mxu0 %v1804
    %2538 = vmatprep.subr.bf16.mxu0 %v1797
    %2539 = vmatpush1.bf16.msra.mxu0 %v1796
    %2540 = vmatprep.subr.bf16.mxu0 %v1789
    %2541 = vmatpush1.bf16.msra.mxu0 %v1788
    %2542 = vmatprep.subr.bf16.mxu0 %v1781
    %2543 = vmatpush1.bf16.msra.mxu0 %v1780
    %2544 = vmatprep.subr.bf16.mxu0 %v1773
    %2545 = vmatpush1.bf16.msra.mxu0 %v1772
    %2546 = vmatprep.subr.bf16.mxu0 %v1765
    %2547 = vmatpush1.bf16.msra.mxu0 %v1764
    %2548 = vmatprep.subr.bf16.mxu0 %v1757
    %2549 = vmatpush1.bf16.msra.mxu0 %v1756
    %2550 = vmatprep.subr.bf16.mxu0 %v1749
    %2551 = vmatpush1.bf16.msra.mxu0 %v1748
    %2552 = vmatprep.subr.bf16.mxu0 %v1869
    %2553 = vmatpush2.bf16.msra.mxu0 %v1868
    %2554 = vmatprep.subr.bf16.mxu0 %v1861
    %2555 = vmatpush2.bf16.msra.mxu0 %v1860
    %2556 = vmatprep.subr.bf16.mxu0 %v1853
    %2557 = vmatpush2.bf16.msra.mxu0 %v1852
    %2558 = vmatprep.subr.bf16.mxu0 %v1845
    %2559 = vmatpush2.bf16.msra.mxu0 %v1844
    %2560 = vmatprep.subr.bf16.mxu0 %v1837
    %2561 = vmatpush2.bf16.msra.mxu0 %v1836
    %2562 = vmatprep.subr.bf16.mxu0 %v1829
    %2563 = vmatpush2.bf16.msra.mxu0 %v1828
    %2564 = vmatprep.subr.bf16.mxu0 %v1821
    %2565 = vmatpush2.bf16.msra.mxu0 %v1820
    %2566 = vmatprep.subr.bf16.mxu0 %v1813
    %2567 = vmatpush2.bf16.msra.mxu0 %v1812
    %2568 = vmatprep.mubr.bf16.mxu0 %v132
    %2569 = vmatmul.mubr.bf16.gmra.mxu0 %v131
    %v2570 = vpop.f32.mrf.mxu0
    %v2571 = vadd.f32 %v535, %v2570
    %v2572 = vpop.f32.mrf.mxu0
    %v2573 = vadd.f32 %v539, %v2572
    %v2574 = vpop.f32.mrf.mxu0
    %v2575 = vadd.f32 %v535, %v2574
    %v2576 = vpop.f32.mrf.mxu0
    %v2577 = vadd.f32 %v539, %v2576
    %2578 = vdwg.mxu0
    %2579 = vmatprep.subr.bf16.mxu0 %v1933
    %2580 = vmatpush1.bf16.msra.mxu0 %v1932
    %2581 = vmatprep.subr.bf16.mxu0 %v1925
    %2582 = vmatpush1.bf16.msra.mxu0 %v1924
    %2583 = vmatprep.subr.bf16.mxu0 %v1917
    %2584 = vmatpush1.bf16.msra.mxu0 %v1916
    %2585 = vmatprep.subr.bf16.mxu0 %v1909
    %2586 = vmatpush1.bf16.msra.mxu0 %v1908
    %2587 = vmatprep.subr.bf16.mxu0 %v1901
    %2588 = vmatpush1.bf16.msra.mxu0 %v1900
    %2589 = vmatprep.subr.bf16.mxu0 %v1893
    %2590 = vmatpush1.bf16.msra.mxu0 %v1892
    %2591 = vmatprep.subr.bf16.mxu0 %v1885
    %2592 = vmatpush1.bf16.msra.mxu0 %v1884
    %2593 = vmatprep.subr.bf16.mxu0 %v1877
    %2594 = vmatpush1.bf16.msra.mxu0 %v1876
    %2595 = vmatprep.subr.bf16.mxu0 %v1997
    %2596 = vmatpush2.bf16.msra.mxu0 %v1996
    %2597 = vmatprep.subr.bf16.mxu0 %v1989
    %2598 = vmatpush2.bf16.msra.mxu0 %v1988
    %2599 = vmatprep.subr.bf16.mxu0 %v1981
    %2600 = vmatpush2.bf16.msra.mxu0 %v1980
    %2601 = vmatprep.subr.bf16.mxu0 %v1973
    %2602 = vmatpush2.bf16.msra.mxu0 %v1972
    %2603 = vmatprep.subr.bf16.mxu0 %v1965
    %2604 = vmatpush2.bf16.msra.mxu0 %v1964
    %2605 = vmatprep.subr.bf16.mxu0 %v1957
    %2606 = vmatpush2.bf16.msra.mxu0 %v1956
    %2607 = vmatprep.subr.bf16.mxu0 %v1949
    %2608 = vmatpush2.bf16.msra.mxu0 %v1948
    %2609 = vmatprep.subr.bf16.mxu0 %v1941
    %2610 = vmatpush2.bf16.msra.mxu0 %v1940
    %2611 = vmatprep.mubr.bf16.mxu0 %v134
    %2612 = vmatmul.mubr.bf16.gmra.mxu0 %v133
    %v2613 = vpop.f32.mrf.mxu0
    %v2614 = vadd.f32 %v2571, %v2613
    %v2615 = vpop.f32.mrf.mxu0
    %v2616 = vadd.f32 %v2573, %v2615
    %v2617 = vpop.f32.mrf.mxu0
    %v2618 = vadd.f32 %v2575, %v2617
    %v2619 = vpop.f32.mrf.mxu0
    %v2620 = vadd.f32 %v2577, %v2619
    %2621 = vdwg.mxu0
    %2622 = vmatprep.subr.bf16.mxu0 %v2061
    %2623 = vmatpush1.bf16.msra.mxu0 %v2060
    %2624 = vmatprep.subr.bf16.mxu0 %v2053
    %2625 = vmatpush1.bf16.msra.mxu0 %v2052
    %2626 = vmatprep.subr.bf16.mxu0 %v2045
    %2627 = vmatpush1.bf16.msra.mxu0 %v2044
    %2628 = vmatprep.subr.bf16.mxu0 %v2037
    %2629 = vmatpush1.bf16.msra.mxu0 %v2036
    %2630 = vmatprep.subr.bf16.mxu0 %v2029
    %2631 = vmatpush1.bf16.msra.mxu0 %v2028
    %2632 = vmatprep.subr.bf16.mxu0 %v2021
    %2633 = vmatpush1.bf16.msra.mxu0 %v2020
    %2634 = vmatprep.subr.bf16.mxu0 %v2013
    %2635 = vmatpush1.bf16.msra.mxu0 %v2012
    %2636 = vmatprep.subr.bf16.mxu0 %v2005
    %2637 = vmatpush1.bf16.msra.mxu0 %v2004
    %2638 = vmatprep.subr.bf16.mxu0 %v2125
    %2639 = vmatpush2.bf16.msra.mxu0 %v2124
    %2640 = vmatprep.subr.bf16.mxu0 %v2117
    %2641 = vmatpush2.bf16.msra.mxu0 %v2116
    %2642 = vmatprep.subr.bf16.mxu0 %v2109
    %2643 = vmatpush2.bf16.msra.mxu0 %v2108
    %2644 = vmatprep.subr.bf16.mxu0 %v2101
    %2645 = vmatpush2.bf16.msra.mxu0 %v2100
    %2646 = vmatprep.subr.bf16.mxu0 %v2093
    %2647 = vmatpush2.bf16.msra.mxu0 %v2092
    %2648 = vmatprep.subr.bf16.mxu0 %v2085
    %2649 = vmatpush2.bf16.msra.mxu0 %v2084
    %2650 = vmatprep.subr.bf16.mxu0 %v2077
    %2651 = vmatpush2.bf16.msra.mxu0 %v2076
    %2652 = vmatprep.subr.bf16.mxu0 %v2069
    %2653 = vmatpush2.bf16.msra.mxu0 %v2068
    %2654 = vmatprep.mubr.bf16.mxu0 %v136
    %2655 = vmatmul.mubr.bf16.gmra.mxu0 %v135
    %v2656 = vpop.f32.mrf.mxu0
    %v2657 = vadd.f32 %v2614, %v2656
    %v2658 = vpop.f32.mrf.mxu0
    %v2659 = vadd.f32 %v2616, %v2658
    %v2660 = vpop.f32.mrf.mxu0
    %v2661 = vadd.f32 %v2618, %v2660
    %v2662 = vpop.f32.mrf.mxu0
    %v2663 = vadd.f32 %v2620, %v2662
    %2664 = vdwg.mxu0
    %2665 = vmatprep.subr.bf16.mxu0 0
    %2666 = vmatpush1.bf16.msra.mxu0 0
    %2667 = vmatprep.subr.bf16.mxu0 0
    %2668 = vmatpush1.bf16.msra.mxu0 0
    %2669 = vmatprep.subr.bf16.mxu0 0
    %2670 = vmatpush1.bf16.msra.mxu0 0
    %2671 = vmatprep.subr.bf16.mxu0 0
    %2672 = vmatpush1.bf16.msra.mxu0 0
    %2673 = vmatprep.subr.bf16.mxu0 0
    %2674 = vmatpush1.bf16.msra.mxu0 0
    %2675 = vmatprep.subr.bf16.mxu0 0
    %2676 = vmatpush1.bf16.msra.mxu0 0
    %2677 = vmatprep.subr.bf16.mxu0 0
    %2678 = vmatpush1.bf16.msra.mxu0 0
    %2679 = vmatprep.subr.bf16.mxu0 %v2133
    %2680 = vmatpush1.bf16.msra.mxu0 %v2132
    %2681 = vmatprep.subr.bf16.mxu0 0
    %2682 = vmatpush2.bf16.msra.mxu0 0
    %2683 = vmatprep.subr.bf16.mxu0 0
    %2684 = vmatpush2.bf16.msra.mxu0 0
    %2685 = vmatprep.subr.bf16.mxu0 0
    %2686 = vmatpush2.bf16.msra.mxu0 0
    %2687 = vmatprep.subr.bf16.mxu0 0
    %2688 = vmatpush2.bf16.msra.mxu0 0
    %2689 = vmatprep.subr.bf16.mxu0 0
    %2690 = vmatpush2.bf16.msra.mxu0 0
    %2691 = vmatprep.subr.bf16.mxu0 0
    %2692 = vmatpush2.bf16.msra.mxu0 0
    %2693 = vmatprep.subr.bf16.mxu0 0
    %2694 = vmatpush2.bf16.msra.mxu0 0
    %2695 = vmatprep.subr.bf16.mxu0 0
    %2696 = vmatpush2.bf16.msra.mxu0 0
    %2697 = vmatprep.mubr.bf16.mxu0 0
    %2698 = vmatmul.mubr.bf16.gmra.mxu0 %v2534
    %v2699 = vpop.f32.mrf.mxu0
    %v2700 = vadd.f32 %v2657, %v2699
    %v2701 = vpop.f32.mrf.mxu0
    %v2702 = vadd.f32 %v2659, %v2701
    %v2703 = vpop.f32.mrf.mxu0
    %v2704 = vadd.f32 %v2661, %v2703
    %v2705 = vpop.f32.mrf.mxu0
    %v2706 = vadd.f32 %v2663, %v2705
    %2707 = vdwg.mxu0
    %2708 = vmatprep.subr.bf16.mxu0 %v1807
    %2709 = vmatpush1.bf16.msra.mxu0 %v1806
    %2710 = vmatprep.subr.bf16.mxu0 %v1799
    %2711 = vmatpush1.bf16.msra.mxu0 %v1798
    %2712 = vmatprep.subr.bf16.mxu0 %v1791
    %2713 = vmatpush1.bf16.msra.mxu0 %v1790
    %2714 = vmatprep.subr.bf16.mxu0 %v1783
    %2715 = vmatpush1.bf16.msra.mxu0 %v1782
    %2716 = vmatprep.subr.bf16.mxu0 %v1775
    %2717 = vmatpush1.bf16.msra.mxu0 %v1774
    %2718 = vmatprep.subr.bf16.mxu0 %v1767
    %2719 = vmatpush1.bf16.msra.mxu0 %v1766
    %2720 = vmatprep.subr.bf16.mxu0 %v1759
    %2721 = vmatpush1.bf16.msra.mxu0 %v1758
    %2722 = vmatprep.subr.bf16.mxu0 %v1751
    %2723 = vmatpush1.bf16.msra.mxu0 %v1750
    %2724 = vmatprep.subr.bf16.mxu0 %v1871
    %2725 = vmatpush2.bf16.msra.mxu0 %v1870
    %2726 = vmatprep.subr.bf16.mxu0 %v1863
    %2727 = vmatpush2.bf16.msra.mxu0 %v1862
    %2728 = vmatprep.subr.bf16.mxu0 %v1855
    %2729 = vmatpush2.bf16.msra.mxu0 %v1854
    %2730 = vmatprep.subr.bf16.mxu0 %v1847
    %2731 = vmatpush2.bf16.msra.mxu0 %v1846
    %2732 = vmatprep.subr.bf16.mxu0 %v1839
    %2733 = vmatpush2.bf16.msra.mxu0 %v1838
    %2734 = vmatprep.subr.bf16.mxu0 %v1831
    %2735 = vmatpush2.bf16.msra.mxu0 %v1830
    %2736 = vmatprep.subr.bf16.mxu0 %v1823
    %2737 = vmatpush2.bf16.msra.mxu0 %v1822
    %2738 = vmatprep.subr.bf16.mxu0 %v1815
    %2739 = vmatpush2.bf16.msra.mxu0 %v1814
    %2740 = vmatprep.mubr.bf16.mxu0 %v132
    %2741 = vmatmul.mubr.bf16.gmra.mxu0 %v131
    %v2742 = vpop.f32.mrf.mxu0
    %v2743 = vadd.f32 %v543, %v2742
    %v2744 = vpop.f32.mrf.mxu0
    %v2745 = vadd.f32 %v547, %v2744
    %v2746 = vpop.f32.mrf.mxu0
    %v2747 = vadd.f32 %v543, %v2746
    %v2748 = vpop.f32.mrf.mxu0
    %v2749 = vadd.f32 %v547, %v2748
    %2750 = vdwg.mxu0
    %2751 = vmatprep.subr.bf16.mxu0 %v1935
    %2752 = vmatpush1.bf16.msra.mxu0 %v1934
    %2753 = vmatprep.subr.bf16.mxu0 %v1927
    %2754 = vmatpush1.bf16.msra.mxu0 %v1926
    %2755 = vmatprep.subr.bf16.mxu0 %v1919
    %2756 = vmatpush1.bf16.msra.mxu0 %v1918
    %2757 = vmatprep.subr.bf16.mxu0 %v1911
    %2758 = vmatpush1.bf16.msra.mxu0 %v1910
    %2759 = vmatprep.subr.bf16.mxu0 %v1903
    %2760 = vmatpush1.bf16.msra.mxu0 %v1902
    %2761 = vmatprep.subr.bf16.mxu0 %v1895
    %2762 = vmatpush1.bf16.msra.mxu0 %v1894
    %2763 = vmatprep.subr.bf16.mxu0 %v1887
    %2764 = vmatpush1.bf16.msra.mxu0 %v1886
    %2765 = vmatprep.subr.bf16.mxu0 %v1879
    %2766 = vmatpush1.bf16.msra.mxu0 %v1878
    %2767 = vmatprep.subr.bf16.mxu0 %v1999
    %2768 = vmatpush2.bf16.msra.mxu0 %v1998
    %2769 = vmatprep.subr.bf16.mxu0 %v1991
    %2770 = vmatpush2.bf16.msra.mxu0 %v1990
    %2771 = vmatprep.subr.bf16.mxu0 %v1983
    %2772 = vmatpush2.bf16.msra.mxu0 %v1982
    %2773 = vmatprep.subr.bf16.mxu0 %v1975
    %2774 = vmatpush2.bf16.msra.mxu0 %v1974
    %2775 = vmatprep.subr.bf16.mxu0 %v1967
    %2776 = vmatpush2.bf16.msra.mxu0 %v1966
    %2777 = vmatprep.subr.bf16.mxu0 %v1959
    %2778 = vmatpush2.bf16.msra.mxu0 %v1958
    %2779 = vmatprep.subr.bf16.mxu0 %v1951
    %2780 = vmatpush2.bf16.msra.mxu0 %v1950
    %2781 = vmatprep.subr.bf16.mxu0 %v1943
    %2782 = vmatpush2.bf16.msra.mxu0 %v1942
    %2783 = vmatprep.mubr.bf16.mxu0 %v134
    %2784 = vmatmul.mubr.bf16.gmra.mxu0 %v133
    %v2785 = vpop.f32.mrf.mxu0
    %v2786 = vadd.f32 %v2743, %v2785
    %v2787 = vpop.f32.mrf.mxu0
    %v2788 = vadd.f32 %v2745, %v2787
    %v2789 = vpop.f32.mrf.mxu0
    %v2790 = vadd.f32 %v2747, %v2789
    %v2791 = vpop.f32.mrf.mxu0
    %v2792 = vadd.f32 %v2749, %v2791
    %2793 = vdwg.mxu0
    %2794 = vmatprep.subr.bf16.mxu0 %v2063
    %2795 = vmatpush1.bf16.msra.mxu0 %v2062
    %2796 = vmatprep.subr.bf16.mxu0 %v2055
    %2797 = vmatpush1.bf16.msra.mxu0 %v2054
    %2798 = vmatprep.subr.bf16.mxu0 %v2047
    %2799 = vmatpush1.bf16.msra.mxu0 %v2046
    %2800 = vmatprep.subr.bf16.mxu0 %v2039
    %2801 = vmatpush1.bf16.msra.mxu0 %v2038
    %2802 = vmatprep.subr.bf16.mxu0 %v2031
    %2803 = vmatpush1.bf16.msra.mxu0 %v2030
    %2804 = vmatprep.subr.bf16.mxu0 %v2023
    %2805 = vmatpush1.bf16.msra.mxu0 %v2022
    %2806 = vmatprep.subr.bf16.mxu0 %v2015
    %2807 = vmatpush1.bf16.msra.mxu0 %v2014
    %2808 = vmatprep.subr.bf16.mxu0 %v2007
    %2809 = vmatpush1.bf16.msra.mxu0 %v2006
    %2810 = vmatprep.subr.bf16.mxu0 %v2127
    %2811 = vmatpush2.bf16.msra.mxu0 %v2126
    %2812 = vmatprep.subr.bf16.mxu0 %v2119
    %2813 = vmatpush2.bf16.msra.mxu0 %v2118
    %2814 = vmatprep.subr.bf16.mxu0 %v2111
    %2815 = vmatpush2.bf16.msra.mxu0 %v2110
    %2816 = vmatprep.subr.bf16.mxu0 %v2103
    %2817 = vmatpush2.bf16.msra.mxu0 %v2102
    %2818 = vmatprep.subr.bf16.mxu0 %v2095
    %2819 = vmatpush2.bf16.msra.mxu0 %v2094
    %2820 = vmatprep.subr.bf16.mxu0 %v2087
    %2821 = vmatpush2.bf16.msra.mxu0 %v2086
    %2822 = vmatprep.subr.bf16.mxu0 %v2079
    %2823 = vmatpush2.bf16.msra.mxu0 %v2078
    %2824 = vmatprep.subr.bf16.mxu0 %v2071
    %2825 = vmatpush2.bf16.msra.mxu0 %v2070
    %2826 = vmatprep.mubr.bf16.mxu0 %v136
    %2827 = vmatmul.mubr.bf16.gmra.mxu0 %v135
    %v2828 = vpop.f32.mrf.mxu0
    %v2829 = vadd.f32 %v2786, %v2828
    %v2830 = vpop.f32.mrf.mxu0
    %v2831 = vadd.f32 %v2788, %v2830
    %v2832 = vpop.f32.mrf.mxu0
    %v2833 = vadd.f32 %v2790, %v2832
    %v2834 = vpop.f32.mrf.mxu0
    %v2835 = vadd.f32 %v2792, %v2834
    %2836 = vdwg.mxu0
    %2837 = vmatprep.subr.bf16.mxu0 0
    %2838 = vmatpush1.bf16.msra.mxu0 0
    %2839 = vmatprep.subr.bf16.mxu0 0
    %2840 = vmatpush1.bf16.msra.mxu0 0
    %2841 = vmatprep.subr.bf16.mxu0 0
    %2842 = vmatpush1.bf16.msra.mxu0 0
    %2843 = vmatprep.subr.bf16.mxu0 0
    %2844 = vmatpush1.bf16.msra.mxu0 0
    %2845 = vmatprep.subr.bf16.mxu0 0
    %2846 = vmatpush1.bf16.msra.mxu0 0
    %2847 = vmatprep.subr.bf16.mxu0 0
    %2848 = vmatpush1.bf16.msra.mxu0 0
    %2849 = vmatprep.subr.bf16.mxu0 0
    %2850 = vmatpush1.bf16.msra.mxu0 0
    %2851 = vmatprep.subr.bf16.mxu0 %v2135
    %2852 = vmatpush1.bf16.msra.mxu0 %v2134
    %2853 = vmatprep.subr.bf16.mxu0 0
    %2854 = vmatpush2.bf16.msra.mxu0 0
    %2855 = vmatprep.subr.bf16.mxu0 0
    %2856 = vmatpush2.bf16.msra.mxu0 0
    %2857 = vmatprep.subr.bf16.mxu0 0
    %2858 = vmatpush2.bf16.msra.mxu0 0
    %2859 = vmatprep.subr.bf16.mxu0 0
    %2860 = vmatpush2.bf16.msra.mxu0 0
    %2861 = vmatprep.subr.bf16.mxu0 0
    %2862 = vmatpush2.bf16.msra.mxu0 0
    %2863 = vmatprep.subr.bf16.mxu0 0
    %2864 = vmatpush2.bf16.msra.mxu0 0
    %2865 = vmatprep.subr.bf16.mxu0 0
    %2866 = vmatpush2.bf16.msra.mxu0 0
    %2867 = vmatprep.subr.bf16.mxu0 0
    %2868 = vmatpush2.bf16.msra.mxu0 0
    %2869 = vmatprep.mubr.bf16.mxu0 0
    %2870 = vmatmul.mubr.bf16.gmra.mxu0 %v2534
    %v2871 = vpop.f32.mrf.mxu0
    %v2872 = vadd.f32 %v2829, %v2871
    %v2873 = vpop.f32.mrf.mxu0
    %v2874 = vadd.f32 %v2831, %v2873
    %v2875 = vpop.f32.mrf.mxu0
    %v2876 = vadd.f32 %v2833, %v2875
    %v2877 = vpop.f32.mrf.mxu0
    %v2878 = vadd.f32 %v2835, %v2877
    %2879 = vdwg.mxu0
    %2880 = vmatprep.subr.bf16.mxu0 %v1809
    %2881 = vmatpush1.bf16.msra.mxu0 %v1808
    %2882 = vmatprep.subr.bf16.mxu0 %v1801
    %2883 = vmatpush1.bf16.msra.mxu0 %v1800
    %2884 = vmatprep.subr.bf16.mxu0 %v1793
    %2885 = vmatpush1.bf16.msra.mxu0 %v1792
    %2886 = vmatprep.subr.bf16.mxu0 %v1785
    %2887 = vmatpush1.bf16.msra.mxu0 %v1784
    %2888 = vmatprep.subr.bf16.mxu0 %v1777
    %2889 = vmatpush1.bf16.msra.mxu0 %v1776
    %2890 = vmatprep.subr.bf16.mxu0 %v1769
    %2891 = vmatpush1.bf16.msra.mxu0 %v1768
    %2892 = vmatprep.subr.bf16.mxu0 %v1761
    %2893 = vmatpush1.bf16.msra.mxu0 %v1760
    %2894 = vmatprep.subr.bf16.mxu0 %v1753
    %2895 = vmatpush1.bf16.msra.mxu0 %v1752
    %2896 = vmatprep.subr.bf16.mxu0 %v1873
    %2897 = vmatpush2.bf16.msra.mxu0 %v1872
    %2898 = vmatprep.subr.bf16.mxu0 %v1865
    %2899 = vmatpush2.bf16.msra.mxu0 %v1864
    %2900 = vmatprep.subr.bf16.mxu0 %v1857
    %2901 = vmatpush2.bf16.msra.mxu0 %v1856
    %2902 = vmatprep.subr.bf16.mxu0 %v1849
    %2903 = vmatpush2.bf16.msra.mxu0 %v1848
    %2904 = vmatprep.subr.bf16.mxu0 %v1841
    %2905 = vmatpush2.bf16.msra.mxu0 %v1840
    %2906 = vmatprep.subr.bf16.mxu0 %v1833
    %2907 = vmatpush2.bf16.msra.mxu0 %v1832
    %2908 = vmatprep.subr.bf16.mxu0 %v1825
    %2909 = vmatpush2.bf16.msra.mxu0 %v1824
    %2910 = vmatprep.subr.bf16.mxu0 %v1817
    %2911 = vmatpush2.bf16.msra.mxu0 %v1816
    %2912 = vmatprep.mubr.bf16.mxu0 %v132
    %2913 = vmatmul.mubr.bf16.gmra.mxu0 %v131
    %v2914 = vpop.f32.mrf.mxu0
    %v2915 = vadd.f32 %v551, %v2914
    %v2916 = vpop.f32.mrf.mxu0
    %v2917 = vadd.f32 %v555, %v2916
    %v2918 = vpop.f32.mrf.mxu0
    %v2919 = vadd.f32 %v551, %v2918
    %v2920 = vpop.f32.mrf.mxu0
    %v2921 = vadd.f32 %v555, %v2920
    %2922 = vdwg.mxu0
    %2923 = vmatprep.subr.bf16.mxu0 %v1937
    %2924 = vmatpush1.bf16.msra.mxu0 %v1936
    %2925 = vmatprep.subr.bf16.mxu0 %v1929
    %2926 = vmatpush1.bf16.msra.mxu0 %v1928
    %2927 = vmatprep.subr.bf16.mxu0 %v1921
    %2928 = vmatpush1.bf16.msra.mxu0 %v1920
    %2929 = vmatprep.subr.bf16.mxu0 %v1913
    %2930 = vmatpush1.bf16.msra.mxu0 %v1912
    %2931 = vmatprep.subr.bf16.mxu0 %v1905
    %2932 = vmatpush1.bf16.msra.mxu0 %v1904
    %2933 = vmatprep.subr.bf16.mxu0 %v1897
    %2934 = vmatpush1.bf16.msra.mxu0 %v1896
    %2935 = vmatprep.subr.bf16.mxu0 %v1889
    %2936 = vmatpush1.bf16.msra.mxu0 %v1888
    %2937 = vmatprep.subr.bf16.mxu0 %v1881
    %2938 = vmatpush1.bf16.msra.mxu0 %v1880
    %2939 = vmatprep.subr.bf16.mxu0 %v2001
    %2940 = vmatpush2.bf16.msra.mxu0 %v2000
    %2941 = vmatprep.subr.bf16.mxu0 %v1993
    %2942 = vmatpush2.bf16.msra.mxu0 %v1992
    %2943 = vmatprep.subr.bf16.mxu0 %v1985
    %2944 = vmatpush2.bf16.msra.mxu0 %v1984
    %2945 = vmatprep.subr.bf16.mxu0 %v1977
    %2946 = vmatpush2.bf16.msra.mxu0 %v1976
    %2947 = vmatprep.subr.bf16.mxu0 %v1969
    %2948 = vmatpush2.bf16.msra.mxu0 %v1968
    %2949 = vmatprep.subr.bf16.mxu0 %v1961
    %2950 = vmatpush2.bf16.msra.mxu0 %v1960
    %2951 = vmatprep.subr.bf16.mxu0 %v1953
    %2952 = vmatpush2.bf16.msra.mxu0 %v1952
    %2953 = vmatprep.subr.bf16.mxu0 %v1945
    %2954 = vmatpush2.bf16.msra.mxu0 %v1944
    %2955 = vmatprep.mubr.bf16.mxu0 %v134
    %2956 = vmatmul.mubr.bf16.gmra.mxu0 %v133
    %v2957 = vpop.f32.mrf.mxu0
    %v2958 = vadd.f32 %v2915, %v2957
    %v2959 = vpop.f32.mrf.mxu0
    %v2960 = vadd.f32 %v2917, %v2959
    %v2961 = vpop.f32.mrf.mxu0
    %v2962 = vadd.f32 %v2919, %v2961
    %v2963 = vpop.f32.mrf.mxu0
    %v2964 = vadd.f32 %v2921, %v2963
    %2965 = vdwg.mxu0
    %2966 = vmatprep.subr.bf16.mxu0 %v2065
    %2967 = vmatpush1.bf16.msra.mxu0 %v2064
    %2968 = vmatprep.subr.bf16.mxu0 %v2057
    %2969 = vmatpush1.bf16.msra.mxu0 %v2056
    %2970 = vmatprep.subr.bf16.mxu0 %v2049
    %2971 = vmatpush1.bf16.msra.mxu0 %v2048
    %2972 = vmatprep.subr.bf16.mxu0 %v2041
    %2973 = vmatpush1.bf16.msra.mxu0 %v2040
    %2974 = vmatprep.subr.bf16.mxu0 %v2033
    %2975 = vmatpush1.bf16.msra.mxu0 %v2032
    %2976 = vmatprep.subr.bf16.mxu0 %v2025
    %2977 = vmatpush1.bf16.msra.mxu0 %v2024
    %2978 = vmatprep.subr.bf16.mxu0 %v2017
    %2979 = vmatpush1.bf16.msra.mxu0 %v2016
    %2980 = vmatprep.subr.bf16.mxu0 %v2009
    %2981 = vmatpush1.bf16.msra.mxu0 %v2008
    %2982 = vmatprep.subr.bf16.mxu0 %v2129
    %2983 = vmatpush2.bf16.msra.mxu0 %v2128
    %2984 = vmatprep.subr.bf16.mxu0 %v2121
    %2985 = vmatpush2.bf16.msra.mxu0 %v2120
    %2986 = vmatprep.subr.bf16.mxu0 %v2113
    %2987 = vmatpush2.bf16.msra.mxu0 %v2112
    %2988 = vmatprep.subr.bf16.mxu0 %v2105
    %2989 = vmatpush2.bf16.msra.mxu0 %v2104
    %2990 = vmatprep.subr.bf16.mxu0 %v2097
    %2991 = vmatpush2.bf16.msra.mxu0 %v2096
    %2992 = vmatprep.subr.bf16.mxu0 %v2089
    %2993 = vmatpush2.bf16.msra.mxu0 %v2088
    %2994 = vmatprep.subr.bf16.mxu0 %v2081
    %2995 = vmatpush2.bf16.msra.mxu0 %v2080
    %2996 = vmatprep.subr.bf16.mxu0 %v2073
    %2997 = vmatpush2.bf16.msra.mxu0 %v2072
    %2998 = vmatprep.mubr.bf16.mxu0 %v136
    %2999 = vmatmul.mubr.bf16.gmra.mxu0 %v135
    %v3000 = vpop.f32.mrf.mxu0
    %v3001 = vadd.f32 %v2958, %v3000
    %v3002 = vpop.f32.mrf.mxu0
    %v3003 = vadd.f32 %v2960, %v3002
    %v3004 = vpop.f32.mrf.mxu0
    %v3005 = vadd.f32 %v2962, %v3004
    %v3006 = vpop.f32.mrf.mxu0
    %v3007 = vadd.f32 %v2964, %v3006
    %3008 = vdwg.mxu0
    %3009 = vmatprep.subr.bf16.mxu0 0
    %3010 = vmatpush1.bf16.msra.mxu0 0
    %3011 = vmatprep.subr.bf16.mxu0 0
    %3012 = vmatpush1.bf16.msra.mxu0 0
    %3013 = vmatprep.subr.bf16.mxu0 0
    %3014 = vmatpush1.bf16.msra.mxu0 0
    %3015 = vmatprep.subr.bf16.mxu0 0
    %3016 = vmatpush1.bf16.msra.mxu0 0
    %3017 = vmatprep.subr.bf16.mxu0 0
    %3018 = vmatpush1.bf16.msra.mxu0 0
    %3019 = vmatprep.subr.bf16.mxu0 0
    %3020 = vmatpush1.bf16.msra.mxu0 0
    %3021 = vmatprep.subr.bf16.mxu0 0
    %3022 = vmatpush1.bf16.msra.mxu0 0
    %3023 = vmatprep.subr.bf16.mxu0 %v2137
    %3024 = vmatpush1.bf16.msra.mxu0 %v2136
    %3025 = vmatprep.subr.bf16.mxu0 0
    %3026 = vmatpush2.bf16.msra.mxu0 0
    %3027 = vmatprep.subr.bf16.mxu0 0
    %3028 = vmatpush2.bf16.msra.mxu0 0
    %3029 = vmatprep.subr.bf16.mxu0 0
    %3030 = vmatpush2.bf16.msra.mxu0 0
    %3031 = vmatprep.subr.bf16.mxu0 0
    %3032 = vmatpush2.bf16.msra.mxu0 0
    %3033 = vmatprep.subr.bf16.mxu0 0
    %3034 = vmatpush2.bf16.msra.mxu0 0
    %3035 = vmatprep.subr.bf16.mxu0 0
    %3036 = vmatpush2.bf16.msra.mxu0 0
    %3037 = vmatprep.subr.bf16.mxu0 0
    %3038 = vmatpush2.bf16.msra.mxu0 0
    %3039 = vmatprep.subr.bf16.mxu0 0
    %3040 = vmatpush2.bf16.msra.mxu0 0
    %3041 = vmatprep.mubr.bf16.mxu0 0
    %3042 = vmatmul.mubr.bf16.gmra.mxu0 %v2534
    %v3043 = vpop.f32.mrf.mxu0
    %v3044 = vadd.f32 %v3001, %v3043
    %v3045 = vpop.f32.mrf.mxu0
    %v3046 = vadd.f32 %v3003, %v3045
    %v3047 = vpop.f32.mrf.mxu0
    %v3048 = vadd.f32 %v3005, %v3047
    %v3049 = vpop.f32.mrf.mxu0
    %v3050 = vadd.f32 %v3007, %v3049
    %3051 = vdwg.mxu0
    %3052 = vmatprep.subr.bf16.mxu0 %v1811
    %3053 = vmatpush1.bf16.msra.mxu0 %v1810
    %3054 = vmatprep.subr.bf16.mxu0 %v1803
    %3055 = vmatpush1.bf16.msra.mxu0 %v1802
    %3056 = vmatprep.subr.bf16.mxu0 %v1795
    %3057 = vmatpush1.bf16.msra.mxu0 %v1794
    %3058 = vmatprep.subr.bf16.mxu0 %v1787
    %3059 = vmatpush1.bf16.msra.mxu0 %v1786
    %3060 = vmatprep.subr.bf16.mxu0 %v1779
    %3061 = vmatpush1.bf16.msra.mxu0 %v1778
    %3062 = vmatprep.subr.bf16.mxu0 %v1771
    %3063 = vmatpush1.bf16.msra.mxu0 %v1770
    %3064 = vmatprep.subr.bf16.mxu0 %v1763
    %3065 = vmatpush1.bf16.msra.mxu0 %v1762
    %3066 = vmatprep.subr.bf16.mxu0 %v1755
    %3067 = vmatpush1.bf16.msra.mxu0 %v1754
    %3068 = vmatprep.subr.bf16.mxu0 %v1875
    %3069 = vmatpush2.bf16.msra.mxu0 %v1874
    %3070 = vmatprep.subr.bf16.mxu0 %v1867
    %3071 = vmatpush2.bf16.msra.mxu0 %v1866
    %3072 = vmatprep.subr.bf16.mxu0 %v1859
    %3073 = vmatpush2.bf16.msra.mxu0 %v1858
    %3074 = vmatprep.subr.bf16.mxu0 %v1851
    %3075 = vmatpush2.bf16.msra.mxu0 %v1850
    %3076 = vmatprep.subr.bf16.mxu0 %v1843
    %3077 = vmatpush2.bf16.msra.mxu0 %v1842
    %3078 = vmatprep.subr.bf16.mxu0 %v1835
    %3079 = vmatpush2.bf16.msra.mxu0 %v1834
    %3080 = vmatprep.subr.bf16.mxu0 %v1827
    %3081 = vmatpush2.bf16.msra.mxu0 %v1826
    %3082 = vmatprep.subr.bf16.mxu0 %v1819
    %3083 = vmatpush2.bf16.msra.mxu0 %v1818
    %3084 = vmatprep.mubr.bf16.mxu0 %v132
    %3085 = vmatmul.mubr.bf16.gmra.mxu0 %v131
    %v3086 = vpop.f32.mrf.mxu0
    %v3087 = vadd.f32 %v559, %v3086
    %v3088 = vpop.f32.mrf.mxu0
    %v3089 = vadd.f32 %v563, %v3088
    %v3090 = vpop.f32.mrf.mxu0
    %v3091 = vadd.f32 %v559, %v3090
    %v3092 = vpop.f32.mrf.mxu0
    %v3093 = vadd.f32 %v563, %v3092
    %3094 = vdwg.mxu0
    %3095 = vmatprep.subr.bf16.mxu0 %v1939
    %3096 = vmatpush1.bf16.msra.mxu0 %v1938
    %3097 = vmatprep.subr.bf16.mxu0 %v1931
    %3098 = vmatpush1.bf16.msra.mxu0 %v1930
    %3099 = vmatprep.subr.bf16.mxu0 %v1923
    %3100 = vmatpush1.bf16.msra.mxu0 %v1922
    %3101 = vmatprep.subr.bf16.mxu0 %v1915
    %3102 = vmatpush1.bf16.msra.mxu0 %v1914
    %3103 = vmatprep.subr.bf16.mxu0 %v1907
    %3104 = vmatpush1.bf16.msra.mxu0 %v1906
    %3105 = vmatprep.subr.bf16.mxu0 %v1899
    %3106 = vmatpush1.bf16.msra.mxu0 %v1898
    %3107 = vmatprep.subr.bf16.mxu0 %v1891
    %3108 = vmatpush1.bf16.msra.mxu0 %v1890
    %3109 = vmatprep.subr.bf16.mxu0 %v1883
    %3110 = vmatpush1.bf16.msra.mxu0 %v1882
    %3111 = vmatprep.subr.bf16.mxu0 %v2003
    %3112 = vmatpush2.bf16.msra.mxu0 %v2002
    %3113 = vmatprep.subr.bf16.mxu0 %v1995
    %3114 = vmatpush2.bf16.msra.mxu0 %v1994
    %3115 = vmatprep.subr.bf16.mxu0 %v1987
    %3116 = vmatpush2.bf16.msra.mxu0 %v1986
    %3117 = vmatprep.subr.bf16.mxu0 %v1979
    %3118 = vmatpush2.bf16.msra.mxu0 %v1978
    %3119 = vmatprep.subr.bf16.mxu0 %v1971
    %3120 = vmatpush2.bf16.msra.mxu0 %v1970
    %3121 = vmatprep.subr.bf16.mxu0 %v1963
    %3122 = vmatpush2.bf16.msra.mxu0 %v1962
    %3123 = vmatprep.subr.bf16.mxu0 %v1955
    %3124 = vmatpush2.bf16.msra.mxu0 %v1954
    %3125 = vmatprep.subr.bf16.mxu0 %v1947
    %3126 = vmatpush2.bf16.msra.mxu0 %v1946
    %3127 = vmatprep.mubr.bf16.mxu0 %v134
    %3128 = vmatmul.mubr.bf16.gmra.mxu0 %v133
    %v3129 = vpop.f32.mrf.mxu0
    %v3130 = vadd.f32 %v3087, %v3129
    %v3131 = vpop.f32.mrf.mxu0
    %v3132 = vadd.f32 %v3089, %v3131
    %v3133 = vpop.f32.mrf.mxu0
    %v3134 = vadd.f32 %v3091, %v3133
    %v3135 = vpop.f32.mrf.mxu0
    %v3136 = vadd.f32 %v3093, %v3135
    %3137 = vdwg.mxu0
    %3138 = vmatprep.subr.bf16.mxu0 %v2067
    %3139 = vmatpush1.bf16.msra.mxu0 %v2066
    %3140 = vmatprep.subr.bf16.mxu0 %v2059
    %3141 = vmatpush1.bf16.msra.mxu0 %v2058
    %3142 = vmatprep.subr.bf16.mxu0 %v2051
    %3143 = vmatpush1.bf16.msra.mxu0 %v2050
    %3144 = vmatprep.subr.bf16.mxu0 %v2043
    %3145 = vmatpush1.bf16.msra.mxu0 %v2042
    %3146 = vmatprep.subr.bf16.mxu0 %v2035
    %3147 = vmatpush1.bf16.msra.mxu0 %v2034
    %3148 = vmatprep.subr.bf16.mxu0 %v2027
    %3149 = vmatpush1.bf16.msra.mxu0 %v2026
    %3150 = vmatprep.subr.bf16.mxu0 %v2019
    %3151 = vmatpush1.bf16.msra.mxu0 %v2018
    %3152 = vmatprep.subr.bf16.mxu0 %v2011
    %3153 = vmatpush1.bf16.msra.mxu0 %v2010
    %3154 = vmatprep.subr.bf16.mxu0 %v2131
    %3155 = vmatpush2.bf16.msra.mxu0 %v2130
    %3156 = vmatprep.subr.bf16.mxu0 %v2123
    %3157 = vmatpush2.bf16.msra.mxu0 %v2122
    %3158 = vmatprep.subr.bf16.mxu0 %v2115
    %3159 = vmatpush2.bf16.msra.mxu0 %v2114
    %3160 = vmatprep.subr.bf16.mxu0 %v2107
    %3161 = vmatpush2.bf16.msra.mxu0 %v2106
    %3162 = vmatprep.subr.bf16.mxu0 %v2099
    %3163 = vmatpush2.bf16.msra.mxu0 %v2098
    %3164 = vmatprep.subr.bf16.mxu0 %v2091
    %3165 = vmatpush2.bf16.msra.mxu0 %v2090
    %3166 = vmatprep.subr.bf16.mxu0 %v2083
    %3167 = vmatpush2.bf16.msra.mxu0 %v2082
    %3168 = vmatprep.subr.bf16.mxu0 %v2075
    %3169 = vmatpush2.bf16.msra.mxu0 %v2074
    %3170 = vmatprep.mubr.bf16.mxu0 %v136
    %3171 = vmatmul.mubr.bf16.gmra.mxu0 %v135
    %v3172 = vpop.f32.mrf.mxu0
    %v3173 = vadd.f32 %v3130, %v3172
    %v3174 = vpop.f32.mrf.mxu0
    %v3175 = vadd.f32 %v3132, %v3174
    %v3176 = vpop.f32.mrf.mxu0
    %v3177 = vadd.f32 %v3134, %v3176
    %v3178 = vpop.f32.mrf.mxu0
    %v3179 = vadd.f32 %v3136, %v3178
    %3180 = vdwg.mxu0
    %3181 = vmatprep.subr.bf16.mxu0 0
    %3182 = vmatpush1.bf16.msra.mxu0 0
    %3183 = vmatprep.subr.bf16.mxu0 0
    %3184 = vmatpush1.bf16.msra.mxu0 0
    %3185 = vmatprep.subr.bf16.mxu0 0
    %3186 = vmatpush1.bf16.msra.mxu0 0
    %3187 = vmatprep.subr.bf16.mxu0 0
    %3188 = vmatpush1.bf16.msra.mxu0 0
    %3189 = vmatprep.subr.bf16.mxu0 0
    %3190 = vmatpush1.bf16.msra.mxu0 0
    %3191 = vmatprep.subr.bf16.mxu0 0
    %3192 = vmatpush1.bf16.msra.mxu0 0
    %3193 = vmatprep.subr.bf16.mxu0 0
    %3194 = vmatpush1.bf16.msra.mxu0 0
    %3195 = vmatprep.subr.bf16.mxu0 %v2139
    %3196 = vmatpush1.bf16.msra.mxu0 %v2138
    %3197 = vmatprep.subr.bf16.mxu0 0
    %3198 = vmatpush2.bf16.msra.mxu0 0
    %3199 = vmatprep.subr.bf16.mxu0 0
    %3200 = vmatpush2.bf16.msra.mxu0 0
    %3201 = vmatprep.subr.bf16.mxu0 0
    %3202 = vmatpush2.bf16.msra.mxu0 0
    %3203 = vmatprep.subr.bf16.mxu0 0
    %3204 = vmatpush2.bf16.msra.mxu0 0
    %3205 = vmatprep.subr.bf16.mxu0 0
    %3206 = vmatpush2.bf16.msra.mxu0 0
    %3207 = vmatprep.subr.bf16.mxu0 0
    %3208 = vmatpush2.bf16.msra.mxu0 0
    %3209 = vmatprep.subr.bf16.mxu0 0
    %3210 = vmatpush2.bf16.msra.mxu0 0
    %3211 = vmatprep.subr.bf16.mxu0 0
    %3212 = vmatpush2.bf16.msra.mxu0 0
    %3213 = vmatprep.mubr.bf16.mxu0 0
    %3214 = vmatmul.mubr.bf16.gmra.mxu0 %v2534
    %v3215 = vpop.f32.mrf.mxu0
    %v3216 = vadd.f32 %v3173, %v3215
    %v3217 = vpop.f32.mrf.mxu0
    %v3218 = vadd.f32 %v3175, %v3217
    %v3219 = vpop.f32.mrf.mxu0
    %v3220 = vadd.f32 %v3177, %v3219
    %v3221 = vpop.f32.mrf.mxu0
    %v3222 = vadd.f32 %v3179, %v3221
    %3223 = vdwg.mxu0
    %v3224 = vmax.f32 %v2700, 0.0
    %v3225 = vmax.f32 %v2702, 0.0
    %v3226 = vmax.f32 %v2872, 0.0
    %v3227 = vmax.f32 %v2874, 0.0
    %v3228 = vmax.f32 %v3044, 0.0
    %v3229 = vmax.f32 %v3046, 0.0
    %v3230 = vmax.f32 %v3216, 0.0
    %v3231 = vmax.f32 %v3218, 0.0
    %v3232 = vmax.f32 %v2704, 0.0
    %v3233 = vmax.f32 %v2706, 0.0
    %v3234 = vmax.f32 %v2876, 0.0
    %v3235 = vmax.f32 %v2878, 0.0
    %v3236 = vmax.f32 %v3048, 0.0
    %v3237 = vmax.f32 %v3050, 0.0
    %v3238 = vmax.f32 %v3220, 0.0
    %v3239 = vmax.f32 %v3222, 0.0
    %v3240 = vpack.c.bf16 %v3232, %v3224
    %v3241 = vpack.c.bf16 %v3233, %v3225
    %v3242 = vpack.c.bf16 %v3234, %v3226
    %v3243 = vpack.c.bf16 %v3235, %v3227
    %v3244 = vpack.c.bf16 %v3236, %v3228
    %v3245 = vpack.c.bf16 %v3237, %v3229
    %v3246 = vpack.c.bf16 %v3238, %v3230
    %v3247 = vpack.c.bf16 %v3239, %v3231
    %v3248 = vld [vmem:[#allocation8] sm:$0xff]
    %v3249 = vld [vmem:[#allocation8 + $0x8] sm:$0xff]
    %v3250 = vld [vmem:[#allocation8 + $0x10] sm:$0xff]
    %v3251 = vld [vmem:[#allocation8 + $0x18] sm:$0xff]
    %v3252 = vld [vmem:[#allocation8 + $0x20] sm:$0xff]
    %v3253 = vld [vmem:[#allocation8 + $0x28] sm:$0xff]
    %v3254 = vld [vmem:[#allocation8 + $0x30] sm:$0xff]
    %v3255 = vld [vmem:[#allocation8 + $0x38] sm:$0xff]
    %v3256 = vld [vmem:[#allocation8 + $0x40] sm:$0xff]
    %v3257 = vld [vmem:[#allocation8 + $0x48] sm:$0xff]
    %v3258 = vld [vmem:[#allocation8 + $0x50] sm:$0xff]
    %v3259 = vld [vmem:[#allocation8 + $0x58] sm:$0xff]
    %v3260 = vld [vmem:[#allocation8 + $0x60] sm:$0xff]
    %v3261 = vld [vmem:[#allocation8 + $0x68] sm:$0xff]
    %v3262 = vld [vmem:[#allocation8 + $0x70] sm:$0xff]
    %v3263 = vld [vmem:[#allocation8 + $0x78] sm:$0xff]
    %v3264 = vld [vmem:[#allocation8 + $0x80] sm:$0xff]
    %v3265 = vld [vmem:[#allocation8 + $0x88] sm:$0xff]
    %v3266 = vld [vmem:[#allocation8 + $0x90] sm:$0xff]
    %v3267 = vld [vmem:[#allocation8 + $0x98] sm:$0xff]
    %v3268 = vld [vmem:[#allocation8 + $0xa0] sm:$0xff]
    %v3269 = vld [vmem:[#allocation8 + $0xa8] sm:$0xff]
    %v3270 = vld [vmem:[#allocation8 + $0xb0] sm:$0xff]
    %v3271 = vld [vmem:[#allocation8 + $0xb8] sm:$0xff]
    %v3272 = vld [vmem:[#allocation8 + $0xc0] sm:$0xff]
    %v3273 = vld [vmem:[#allocation8 + $0xc8] sm:$0xff]
    %v3274 = vld [vmem:[#allocation8 + $0xd0] sm:$0xff]
    %v3275 = vld [vmem:[#allocation8 + $0xd8] sm:$0xff]
    %v3276 = vld [vmem:[#allocation8 + $0xe0] sm:$0xff]
    %v3277 = vld [vmem:[#allocation8 + $0xe8] sm:$0xff]
    %v3278 = vld [vmem:[#allocation8 + $0xf0] sm:$0xff]
    %v3279 = vld [vmem:[#allocation8 + $0xf8] sm:$0xff]
    %v3280 = vld [vmem:[#allocation8 + $0x100] sm:$0xff]
    %v3281 = vld [vmem:[#allocation8 + $0x108] sm:$0xff]
    %v3282 = vld [vmem:[#allocation8 + $0x110] sm:$0xff]
    %v3283 = vld [vmem:[#allocation8 + $0x118] sm:$0xff]
    %v3284 = vld [vmem:[#allocation8 + $0x120] sm:$0xff]
    %v3285 = vld [vmem:[#allocation8 + $0x128] sm:$0xff]
    %v3286 = vld [vmem:[#allocation8 + $0x130] sm:$0xff]
    %v3287 = vld [vmem:[#allocation8 + $0x138] sm:$0xff]
    %v3288 = vld [vmem:[#allocation8 + $0x140] sm:$0xff]
    %v3289 = vld [vmem:[#allocation8 + $0x148] sm:$0xff]
    %v3290 = vld [vmem:[#allocation8 + $0x150] sm:$0xff]
    %v3291 = vld [vmem:[#allocation8 + $0x158] sm:$0xff]
    %v3292 = vld [vmem:[#allocation8 + $0x160] sm:$0xff]
    %v3293 = vld [vmem:[#allocation8 + $0x168] sm:$0xff]
    %v3294 = vld [vmem:[#allocation8 + $0x170] sm:$0xff]
    %v3295 = vld [vmem:[#allocation8 + $0x178] sm:$0xff]
    %v3296 = vld [vmem:[#allocation8 + $0x180] sm:$0xff]
    %v3297 = vld [vmem:[#allocation8 + $0x188] sm:$0xff]
    %v3298 = vld [vmem:[#allocation8 + $0x190] sm:$0xff]
    %v3299 = vld [vmem:[#allocation8 + $0x198] sm:$0xff]
    %v3300 = vld [vmem:[#allocation8 + $0x1a0] sm:$0xff]
    %v3301 = vld [vmem:[#allocation8 + $0x1a8] sm:$0xff]
    %v3302 = vld [vmem:[#allocation8 + $0x1b0] sm:$0xff]
    %v3303 = vld [vmem:[#allocation8 + $0x1b8] sm:$0xff]
    %v3304 = vld [vmem:[#allocation8 + $0x1c0] sm:$0xff]
    %v3305 = vld [vmem:[#allocation8 + $0x1c8] sm:$0xff]
    %v3306 = vld [vmem:[#allocation8 + $0x1d0] sm:$0xff]
    %v3307 = vld [vmem:[#allocation8 + $0x1d8] sm:$0xff]
    %v3308 = vld [vmem:[#allocation8 + $0x1e0] sm:$0xff]
    %v3309 = vld [vmem:[#allocation8 + $0x1e8] sm:$0xff]
    %v3310 = vld [vmem:[#allocation8 + $0x1f0] sm:$0xff]
    %v3311 = vld [vmem:[#allocation8 + $0x1f8] sm:$0xff]
    %v3312 = vld [vmem:[#allocation8 + $0x200] sm:$0xff]
    %v3313 = vld [vmem:[#allocation8 + $0x208] sm:$0xff]
    %v3314 = vld [vmem:[#allocation8 + $0x210] sm:$0xff]
    %v3315 = vld [vmem:[#allocation8 + $0x218] sm:$0xff]
    %v3316 = vld [vmem:[#allocation8 + $0x220] sm:$0xff]
    %v3317 = vld [vmem:[#allocation8 + $0x228] sm:$0xff]
    %v3318 = vld [vmem:[#allocation8 + $0x230] sm:$0xff]
    %v3319 = vld [vmem:[#allocation8 + $0x238] sm:$0xff]
    %v3320 = vld [vmem:[#allocation8 + $0x240] sm:$0xff]
    %v3321 = vld [vmem:[#allocation8 + $0x248] sm:$0xff]
    %v3322 = vld [vmem:[#allocation8 + $0x250] sm:$0xff]
    %v3323 = vld [vmem:[#allocation8 + $0x258] sm:$0xff]
    %v3324 = vld [vmem:[#allocation8 + $0x260] sm:$0xff]
    %v3325 = vld [vmem:[#allocation8 + $0x268] sm:$0xff]
    %v3326 = vld [vmem:[#allocation8 + $0x270] sm:$0xff]
    %v3327 = vld [vmem:[#allocation8 + $0x278] sm:$0xff]
    %v3328 = vld [vmem:[#allocation8 + $0x280] sm:$0xff]
    %v3329 = vld [vmem:[#allocation8 + $0x288] sm:$0xff]
    %v3330 = vld [vmem:[#allocation8 + $0x290] sm:$0xff]
    %v3331 = vld [vmem:[#allocation8 + $0x298] sm:$0xff]
    %v3332 = vld [vmem:[#allocation8 + $0x2a0] sm:$0xff]
    %v3333 = vld [vmem:[#allocation8 + $0x2a8] sm:$0xff]
    %v3334 = vld [vmem:[#allocation8 + $0x2b0] sm:$0xff]
    %v3335 = vld [vmem:[#allocation8 + $0x2b8] sm:$0xff]
    %v3336 = vld [vmem:[#allocation8 + $0x2c0] sm:$0xff]
    %v3337 = vld [vmem:[#allocation8 + $0x2c8] sm:$0xff]
    %v3338 = vld [vmem:[#allocation8 + $0x2d0] sm:$0xff]
    %v3339 = vld [vmem:[#allocation8 + $0x2d8] sm:$0xff]
    %v3340 = vld [vmem:[#allocation8 + $0x2e0] sm:$0xff]
    %v3341 = vld [vmem:[#allocation8 + $0x2e8] sm:$0xff]
    %v3342 = vld [vmem:[#allocation8 + $0x2f0] sm:$0xff]
    %v3343 = vld [vmem:[#allocation8 + $0x2f8] sm:$0xff]
    %v3344 = vld [vmem:[#allocation8 + $0x300] sm:$0xff]
    %v3345 = vld [vmem:[#allocation8 + $0x308] sm:$0xff]
    %v3346 = vld [vmem:[#allocation8 + $0x310] sm:$0xff]
    %v3347 = vld [vmem:[#allocation8 + $0x318] sm:$0xff]
    %v3348 = vld [vmem:[#allocation8 + $0x320] sm:$0xff]
    %v3349 = vld [vmem:[#allocation8 + $0x328] sm:$0xff]
    %v3350 = vld [vmem:[#allocation8 + $0x330] sm:$0xff]
    %v3351 = vld [vmem:[#allocation8 + $0x338] sm:$0xff]
    %v3352 = vld [vmem:[#allocation8 + $0x340] sm:$0xff]
    %v3353 = vld [vmem:[#allocation8 + $0x348] sm:$0xff]
    %v3354 = vld [vmem:[#allocation8 + $0x350] sm:$0xff]
    %v3355 = vld [vmem:[#allocation8 + $0x358] sm:$0xff]
    %v3356 = vld [vmem:[#allocation8 + $0x360] sm:$0xff]
    %v3357 = vld [vmem:[#allocation8 + $0x368] sm:$0xff]
    %v3358 = vld [vmem:[#allocation8 + $0x370] sm:$0xff]
    %v3359 = vld [vmem:[#allocation8 + $0x378] sm:$0xff]
    %v3360 = vld [vmem:[#allocation8 + $0x380] sm:$0xff]
    %v3361 = vld [vmem:[#allocation8 + $0x388] sm:$0xff]
    %v3362 = vld [vmem:[#allocation8 + $0x390] sm:$0xff]
    %v3363 = vld [vmem:[#allocation8 + $0x398] sm:$0xff]
    %v3364 = vld [vmem:[#allocation8 + $0x3a0] sm:$0xff]
    %v3365 = vld [vmem:[#allocation8 + $0x3a8] sm:$0xff]
    %v3366 = vld [vmem:[#allocation8 + $0x3b0] sm:$0xff]
    %v3367 = vld [vmem:[#allocation8 + $0x3b8] sm:$0xff]
    %v3368 = vld [vmem:[#allocation8 + $0x3c0] sm:$0xff]
    %v3369 = vld [vmem:[#allocation8 + $0x3c8] sm:$0xff]
    %v3370 = vld [vmem:[#allocation8 + $0x3d0] sm:$0xff]
    %v3371 = vld [vmem:[#allocation8 + $0x3d8] sm:$0xff]
    %v3372 = vld [vmem:[#allocation8 + $0x3e0] sm:$0xff]
    %v3373 = vld [vmem:[#allocation8 + $0x3e8] sm:$0xff]
    %v3374 = vld [vmem:[#allocation8 + $0x3f0] sm:$0xff]
    %v3375 = vld [vmem:[#allocation8 + $0x3f8] sm:$0xff]
    %v3376 = vld [vmem:[#allocation10] sm:$0x3]
    %v3378 = vlaneseq
    %v3379 = vshrl.u32 %v3378, 7
    %v3380 = vsub.s32 0, %v3379
    %v3381 = vrot.slane %v3376, %v3380
    %v3382 = vlaneseq
    %v3383 = vshrl.u32 %v3382, 7
    %v3384 = vsub.s32 1, %v3383
    %v3385 = vrot.slane %v3376, %v3384
    %v3516 = vunpack.c.l.b16 %v3248
    %v3517 = vunpack.c.h.b16 %v3248
    %v3518 = vunpack.c.l.b16 %v3249
    %v3519 = vunpack.c.h.b16 %v3249
    %v3520 = vunpack.c.l.b16 %v3250
    %v3521 = vunpack.c.h.b16 %v3250
    %v3522 = vunpack.c.l.b16 %v3251
    %v3523 = vunpack.c.h.b16 %v3251
    %v3524 = vunpack.c.l.b16 %v3252
    %v3525 = vunpack.c.h.b16 %v3252
    %v3526 = vunpack.c.l.b16 %v3253
    %v3527 = vunpack.c.h.b16 %v3253
    %v3528 = vunpack.c.l.b16 %v3254
    %v3529 = vunpack.c.h.b16 %v3254
    %v3530 = vunpack.c.l.b16 %v3255
    %v3531 = vunpack.c.h.b16 %v3255
    %v3532 = vunpack.c.l.b16 %v3256
    %v3533 = vunpack.c.h.b16 %v3256
    %v3534 = vunpack.c.l.b16 %v3257
    %v3535 = vunpack.c.h.b16 %v3257
    %v3536 = vunpack.c.l.b16 %v3258
    %v3537 = vunpack.c.h.b16 %v3258
    %v3538 = vunpack.c.l.b16 %v3259
    %v3539 = vunpack.c.h.b16 %v3259
    %v3540 = vunpack.c.l.b16 %v3260
    %v3541 = vunpack.c.h.b16 %v3260
    %v3542 = vunpack.c.l.b16 %v3261
    %v3543 = vunpack.c.h.b16 %v3261
    %v3544 = vunpack.c.l.b16 %v3262
    %v3545 = vunpack.c.h.b16 %v3262
    %v3546 = vunpack.c.l.b16 %v3263
    %v3547 = vunpack.c.h.b16 %v3263
    %v3548 = vunpack.c.l.b16 %v3264
    %v3549 = vunpack.c.h.b16 %v3264
    %v3550 = vunpack.c.l.b16 %v3265
    %v3551 = vunpack.c.h.b16 %v3265
    %v3552 = vunpack.c.l.b16 %v3266
    %v3553 = vunpack.c.h.b16 %v3266
    %v3554 = vunpack.c.l.b16 %v3267
    %v3555 = vunpack.c.h.b16 %v3267
    %v3556 = vunpack.c.l.b16 %v3268
    %v3557 = vunpack.c.h.b16 %v3268
    %v3558 = vunpack.c.l.b16 %v3269
    %v3559 = vunpack.c.h.b16 %v3269
    %v3560 = vunpack.c.l.b16 %v3270
    %v3561 = vunpack.c.h.b16 %v3270
    %v3562 = vunpack.c.l.b16 %v3271
    %v3563 = vunpack.c.h.b16 %v3271
    %v3564 = vunpack.c.l.b16 %v3272
    %v3565 = vunpack.c.h.b16 %v3272
    %v3566 = vunpack.c.l.b16 %v3273
    %v3567 = vunpack.c.h.b16 %v3273
    %v3568 = vunpack.c.l.b16 %v3274
    %v3569 = vunpack.c.h.b16 %v3274
    %v3570 = vunpack.c.l.b16 %v3275
    %v3571 = vunpack.c.h.b16 %v3275
    %v3572 = vunpack.c.l.b16 %v3276
    %v3573 = vunpack.c.h.b16 %v3276
    %v3574 = vunpack.c.l.b16 %v3277
    %v3575 = vunpack.c.h.b16 %v3277
    %v3576 = vunpack.c.l.b16 %v3278
    %v3577 = vunpack.c.h.b16 %v3278
    %v3578 = vunpack.c.l.b16 %v3279
    %v3579 = vunpack.c.h.b16 %v3279
    %v3580 = vunpack.c.l.b16 %v3280
    %v3581 = vunpack.c.h.b16 %v3280
    %v3582 = vunpack.c.l.b16 %v3281
    %v3583 = vunpack.c.h.b16 %v3281
    %v3584 = vunpack.c.l.b16 %v3282
    %v3585 = vunpack.c.h.b16 %v3282
    %v3586 = vunpack.c.l.b16 %v3283
    %v3587 = vunpack.c.h.b16 %v3283
    %v3588 = vunpack.c.l.b16 %v3284
    %v3589 = vunpack.c.h.b16 %v3284
    %v3590 = vunpack.c.l.b16 %v3285
    %v3591 = vunpack.c.h.b16 %v3285
    %v3592 = vunpack.c.l.b16 %v3286
    %v3593 = vunpack.c.h.b16 %v3286
    %v3594 = vunpack.c.l.b16 %v3287
    %v3595 = vunpack.c.h.b16 %v3287
    %v3596 = vunpack.c.l.b16 %v3288
    %v3597 = vunpack.c.h.b16 %v3288
    %v3598 = vunpack.c.l.b16 %v3289
    %v3599 = vunpack.c.h.b16 %v3289
    %v3600 = vunpack.c.l.b16 %v3290
    %v3601 = vunpack.c.h.b16 %v3290
    %v3602 = vunpack.c.l.b16 %v3291
    %v3603 = vunpack.c.h.b16 %v3291
    %v3604 = vunpack.c.l.b16 %v3292
    %v3605 = vunpack.c.h.b16 %v3292
    %v3606 = vunpack.c.l.b16 %v3293
    %v3607 = vunpack.c.h.b16 %v3293
    %v3608 = vunpack.c.l.b16 %v3294
    %v3609 = vunpack.c.h.b16 %v3294
    %v3610 = vunpack.c.l.b16 %v3295
    %v3611 = vunpack.c.h.b16 %v3295
    %v3612 = vunpack.c.l.b16 %v3296
    %v3613 = vunpack.c.h.b16 %v3296
    %v3614 = vunpack.c.l.b16 %v3297
    %v3615 = vunpack.c.h.b16 %v3297
    %v3616 = vunpack.c.l.b16 %v3298
    %v3617 = vunpack.c.h.b16 %v3298
    %v3618 = vunpack.c.l.b16 %v3299
    %v3619 = vunpack.c.h.b16 %v3299
    %v3620 = vunpack.c.l.b16 %v3300
    %v3621 = vunpack.c.h.b16 %v3300
    %v3622 = vunpack.c.l.b16 %v3301
    %v3623 = vunpack.c.h.b16 %v3301
    %v3624 = vunpack.c.l.b16 %v3302
    %v3625 = vunpack.c.h.b16 %v3302
    %v3626 = vunpack.c.l.b16 %v3303
    %v3627 = vunpack.c.h.b16 %v3303
    %v3628 = vunpack.c.l.b16 %v3304
    %v3629 = vunpack.c.h.b16 %v3304
    %v3630 = vunpack.c.l.b16 %v3305
    %v3631 = vunpack.c.h.b16 %v3305
    %v3632 = vunpack.c.l.b16 %v3306
    %v3633 = vunpack.c.h.b16 %v3306
    %v3634 = vunpack.c.l.b16 %v3307
    %v3635 = vunpack.c.h.b16 %v3307
    %v3636 = vunpack.c.l.b16 %v3308
    %v3637 = vunpack.c.h.b16 %v3308
    %v3638 = vunpack.c.l.b16 %v3309
    %v3639 = vunpack.c.h.b16 %v3309
    %v3640 = vunpack.c.l.b16 %v3310
    %v3641 = vunpack.c.h.b16 %v3310
    %v3642 = vunpack.c.l.b16 %v3311
    %v3643 = vunpack.c.h.b16 %v3311
    %v3644 = vunpack.c.l.b16 %v3312
    %v3645 = vunpack.c.h.b16 %v3312
    %v3646 = vunpack.c.l.b16 %v3313
    %v3647 = vunpack.c.h.b16 %v3313
    %v3648 = vunpack.c.l.b16 %v3314
    %v3649 = vunpack.c.h.b16 %v3314
    %v3650 = vunpack.c.l.b16 %v3315
    %v3651 = vunpack.c.h.b16 %v3315
    %v3652 = vunpack.c.l.b16 %v3316
    %v3653 = vunpack.c.h.b16 %v3316
    %v3654 = vunpack.c.l.b16 %v3317
    %v3655 = vunpack.c.h.b16 %v3317
    %v3656 = vunpack.c.l.b16 %v3318
    %v3657 = vunpack.c.h.b16 %v3318
    %v3658 = vunpack.c.l.b16 %v3319
    %v3659 = vunpack.c.h.b16 %v3319
    %v3660 = vunpack.c.l.b16 %v3320
    %v3661 = vunpack.c.h.b16 %v3320
    %v3662 = vunpack.c.l.b16 %v3321
    %v3663 = vunpack.c.h.b16 %v3321
    %v3664 = vunpack.c.l.b16 %v3322
    %v3665 = vunpack.c.h.b16 %v3322
    %v3666 = vunpack.c.l.b16 %v3323
    %v3667 = vunpack.c.h.b16 %v3323
    %v3668 = vunpack.c.l.b16 %v3324
    %v3669 = vunpack.c.h.b16 %v3324
    %v3670 = vunpack.c.l.b16 %v3325
    %v3671 = vunpack.c.h.b16 %v3325
    %v3672 = vunpack.c.l.b16 %v3326
    %v3673 = vunpack.c.h.b16 %v3326
    %v3674 = vunpack.c.l.b16 %v3327
    %v3675 = vunpack.c.h.b16 %v3327
    %v3676 = vunpack.c.l.b16 %v3328
    %v3677 = vunpack.c.h.b16 %v3328
    %v3678 = vunpack.c.l.b16 %v3329
    %v3679 = vunpack.c.h.b16 %v3329
    %v3680 = vunpack.c.l.b16 %v3330
    %v3681 = vunpack.c.h.b16 %v3330
    %v3682 = vunpack.c.l.b16 %v3331
    %v3683 = vunpack.c.h.b16 %v3331
    %v3684 = vunpack.c.l.b16 %v3332
    %v3685 = vunpack.c.h.b16 %v3332
    %v3686 = vunpack.c.l.b16 %v3333
    %v3687 = vunpack.c.h.b16 %v3333
    %v3688 = vunpack.c.l.b16 %v3334
    %v3689 = vunpack.c.h.b16 %v3334
    %v3690 = vunpack.c.l.b16 %v3335
    %v3691 = vunpack.c.h.b16 %v3335
    %v3692 = vunpack.c.l.b16 %v3336
    %v3693 = vunpack.c.h.b16 %v3336
    %v3694 = vunpack.c.l.b16 %v3337
    %v3695 = vunpack.c.h.b16 %v3337
    %v3696 = vunpack.c.l.b16 %v3338
    %v3697 = vunpack.c.h.b16 %v3338
    %v3698 = vunpack.c.l.b16 %v3339
    %v3699 = vunpack.c.h.b16 %v3339
    %v3700 = vunpack.c.l.b16 %v3340
    %v3701 = vunpack.c.h.b16 %v3340
    %v3702 = vunpack.c.l.b16 %v3341
    %v3703 = vunpack.c.h.b16 %v3341
    %v3704 = vunpack.c.l.b16 %v3342
    %v3705 = vunpack.c.h.b16 %v3342
    %v3706 = vunpack.c.l.b16 %v3343
    %v3707 = vunpack.c.h.b16 %v3343
    %v3708 = vunpack.c.l.b16 %v3344
    %v3709 = vunpack.c.h.b16 %v3344
    %v3710 = vunpack.c.l.b16 %v3345
    %v3711 = vunpack.c.h.b16 %v3345
    %v3712 = vunpack.c.l.b16 %v3346
    %v3713 = vunpack.c.h.b16 %v3346
    %v3714 = vunpack.c.l.b16 %v3347
    %v3715 = vunpack.c.h.b16 %v3347
    %v3716 = vunpack.c.l.b16 %v3348
    %v3717 = vunpack.c.h.b16 %v3348
    %v3718 = vunpack.c.l.b16 %v3349
    %v3719 = vunpack.c.h.b16 %v3349
    %v3720 = vunpack.c.l.b16 %v3350
    %v3721 = vunpack.c.h.b16 %v3350
    %v3722 = vunpack.c.l.b16 %v3351
    %v3723 = vunpack.c.h.b16 %v3351
    %v3724 = vunpack.c.l.b16 %v3352
    %v3725 = vunpack.c.h.b16 %v3352
    %v3726 = vunpack.c.l.b16 %v3353
    %v3727 = vunpack.c.h.b16 %v3353
    %v3728 = vunpack.c.l.b16 %v3354
    %v3729 = vunpack.c.h.b16 %v3354
    %v3730 = vunpack.c.l.b16 %v3355
    %v3731 = vunpack.c.h.b16 %v3355
    %v3732 = vunpack.c.l.b16 %v3356
    %v3733 = vunpack.c.h.b16 %v3356
    %v3734 = vunpack.c.l.b16 %v3357
    %v3735 = vunpack.c.h.b16 %v3357
    %v3736 = vunpack.c.l.b16 %v3358
    %v3737 = vunpack.c.h.b16 %v3358
    %v3738 = vunpack.c.l.b16 %v3359
    %v3739 = vunpack.c.h.b16 %v3359
    %v3740 = vunpack.c.l.b16 %v3360
    %v3741 = vunpack.c.h.b16 %v3360
    %v3742 = vunpack.c.l.b16 %v3361
    %v3743 = vunpack.c.h.b16 %v3361
    %v3744 = vunpack.c.l.b16 %v3362
    %v3745 = vunpack.c.h.b16 %v3362
    %v3746 = vunpack.c.l.b16 %v3363
    %v3747 = vunpack.c.h.b16 %v3363
    %v3748 = vunpack.c.l.b16 %v3364
    %v3749 = vunpack.c.h.b16 %v3364
    %v3750 = vunpack.c.l.b16 %v3365
    %v3751 = vunpack.c.h.b16 %v3365
    %v3752 = vunpack.c.l.b16 %v3366
    %v3753 = vunpack.c.h.b16 %v3366
    %v3754 = vunpack.c.l.b16 %v3367
    %v3755 = vunpack.c.h.b16 %v3367
    %v3756 = vunpack.c.l.b16 %v3368
    %v3757 = vunpack.c.h.b16 %v3368
    %v3758 = vunpack.c.l.b16 %v3369
    %v3759 = vunpack.c.h.b16 %v3369
    %v3760 = vunpack.c.l.b16 %v3370
    %v3761 = vunpack.c.h.b16 %v3370
    %v3762 = vunpack.c.l.b16 %v3371
    %v3763 = vunpack.c.h.b16 %v3371
    %v3764 = vunpack.c.l.b16 %v3372
    %v3765 = vunpack.c.h.b16 %v3372
    %v3766 = vunpack.c.l.b16 %v3373
    %v3767 = vunpack.c.h.b16 %v3373
    %v3768 = vunpack.c.l.b16 %v3374
    %v3769 = vunpack.c.h.b16 %v3374
    %v3770 = vunpack.c.l.b16 %v3375
    %v3771 = vunpack.c.h.b16 %v3375
    %v3772 = vpack.c.b16 %v3518, %v3516
    %v3773 = vpack.c.b16 %v3519, %v3517
    %v3774 = vpack.c.b16 %v3522, %v3520
    %v3775 = vpack.c.b16 %v3523, %v3521
    %v3776 = vpack.c.b16 %v3526, %v3524
    %v3777 = vpack.c.b16 %v3527, %v3525
    %v3778 = vpack.c.b16 %v3530, %v3528
    %v3779 = vpack.c.b16 %v3531, %v3529
    %v3780 = vpack.c.b16 %v3534, %v3532
    %v3781 = vpack.c.b16 %v3535, %v3533
    %v3782 = vpack.c.b16 %v3538, %v3536
    %v3783 = vpack.c.b16 %v3539, %v3537
    %v3784 = vpack.c.b16 %v3542, %v3540
    %v3785 = vpack.c.b16 %v3543, %v3541
    %v3786 = vpack.c.b16 %v3546, %v3544
    %v3787 = vpack.c.b16 %v3547, %v3545
    %v3788 = vpack.c.b16 %v3550, %v3548
    %v3789 = vpack.c.b16 %v3551, %v3549
    %v3790 = vpack.c.b16 %v3554, %v3552
    %v3791 = vpack.c.b16 %v3555, %v3553
    %v3792 = vpack.c.b16 %v3558, %v3556
    %v3793 = vpack.c.b16 %v3559, %v3557
    %v3794 = vpack.c.b16 %v3562, %v3560
    %v3795 = vpack.c.b16 %v3563, %v3561
    %v3796 = vpack.c.b16 %v3566, %v3564
    %v3797 = vpack.c.b16 %v3567, %v3565
    %v3798 = vpack.c.b16 %v3570, %v3568
    %v3799 = vpack.c.b16 %v3571, %v3569
    %v3800 = vpack.c.b16 %v3574, %v3572
    %v3801 = vpack.c.b16 %v3575, %v3573
    %v3802 = vpack.c.b16 %v3578, %v3576
    %v3803 = vpack.c.b16 %v3579, %v3577
    %v3804 = vpack.c.b16 %v3582, %v3580
    %v3805 = vpack.c.b16 %v3583, %v3581
    %v3806 = vpack.c.b16 %v3586, %v3584
    %v3807 = vpack.c.b16 %v3587, %v3585
    %v3808 = vpack.c.b16 %v3590, %v3588
    %v3809 = vpack.c.b16 %v3591, %v3589
    %v3810 = vpack.c.b16 %v3594, %v3592
    %v3811 = vpack.c.b16 %v3595, %v3593
    %v3812 = vpack.c.b16 %v3598, %v3596
    %v3813 = vpack.c.b16 %v3599, %v3597
    %v3814 = vpack.c.b16 %v3602, %v3600
    %v3815 = vpack.c.b16 %v3603, %v3601
    %v3816 = vpack.c.b16 %v3606, %v3604
    %v3817 = vpack.c.b16 %v3607, %v3605
    %v3818 = vpack.c.b16 %v3610, %v3608
    %v3819 = vpack.c.b16 %v3611, %v3609
    %v3820 = vpack.c.b16 %v3614, %v3612
    %v3821 = vpack.c.b16 %v3615, %v3613
    %v3822 = vpack.c.b16 %v3618, %v3616
    %v3823 = vpack.c.b16 %v3619, %v3617
    %v3824 = vpack.c.b16 %v3622, %v3620
    %v3825 = vpack.c.b16 %v3623, %v3621
    %v3826 = vpack.c.b16 %v3626, %v3624
    %v3827 = vpack.c.b16 %v3627, %v3625
    %v3828 = vpack.c.b16 %v3630, %v3628
    %v3829 = vpack.c.b16 %v3631, %v3629
    %v3830 = vpack.c.b16 %v3634, %v3632
    %v3831 = vpack.c.b16 %v3635, %v3633
    %v3832 = vpack.c.b16 %v3638, %v3636
    %v3833 = vpack.c.b16 %v3639, %v3637
    %v3834 = vpack.c.b16 %v3642, %v3640
    %v3835 = vpack.c.b16 %v3643, %v3641
    %v3836 = vpack.c.b16 %v3646, %v3644
    %v3837 = vpack.c.b16 %v3647, %v3645
    %v3838 = vpack.c.b16 %v3650, %v3648
    %v3839 = vpack.c.b16 %v3651, %v3649
    %v3840 = vpack.c.b16 %v3654, %v3652
    %v3841 = vpack.c.b16 %v3655, %v3653
    %v3842 = vpack.c.b16 %v3658, %v3656
    %v3843 = vpack.c.b16 %v3659, %v3657
    %v3844 = vpack.c.b16 %v3662, %v3660
    %v3845 = vpack.c.b16 %v3663, %v3661
    %v3846 = vpack.c.b16 %v3666, %v3664
    %v3847 = vpack.c.b16 %v3667, %v3665
    %v3848 = vpack.c.b16 %v3670, %v3668
    %v3849 = vpack.c.b16 %v3671, %v3669
    %v3850 = vpack.c.b16 %v3674, %v3672
    %v3851 = vpack.c.b16 %v3675, %v3673
    %v3852 = vpack.c.b16 %v3678, %v3676
    %v3853 = vpack.c.b16 %v3679, %v3677
    %v3854 = vpack.c.b16 %v3682, %v3680
    %v3855 = vpack.c.b16 %v3683, %v3681
    %v3856 = vpack.c.b16 %v3686, %v3684
    %v3857 = vpack.c.b16 %v3687, %v3685
    %v3858 = vpack.c.b16 %v3690, %v3688
    %v3859 = vpack.c.b16 %v3691, %v3689
    %v3860 = vpack.c.b16 %v3694, %v3692
    %v3861 = vpack.c.b16 %v3695, %v3693
    %v3862 = vpack.c.b16 %v3698, %v3696
    %v3863 = vpack.c.b16 %v3699, %v3697
    %v3864 = vpack.c.b16 %v3702, %v3700
    %v3865 = vpack.c.b16 %v3703, %v3701
    %v3866 = vpack.c.b16 %v3706, %v3704
    %v3867 = vpack.c.b16 %v3707, %v3705
    %v3868 = vpack.c.b16 %v3710, %v3708
    %v3869 = vpack.c.b16 %v3711, %v3709
    %v3870 = vpack.c.b16 %v3714, %v3712
    %v3871 = vpack.c.b16 %v3715, %v3713
    %v3872 = vpack.c.b16 %v3718, %v3716
    %v3873 = vpack.c.b16 %v3719, %v3717
    %v3874 = vpack.c.b16 %v3722, %v3720
    %v3875 = vpack.c.b16 %v3723, %v3721
    %v3876 = vpack.c.b16 %v3726, %v3724
    %v3877 = vpack.c.b16 %v3727, %v3725
    %v3878 = vpack.c.b16 %v3730, %v3728
    %v3879 = vpack.c.b16 %v3731, %v3729
    %v3880 = vpack.c.b16 %v3734, %v3732
    %v3881 = vpack.c.b16 %v3735, %v3733
    %v3882 = vpack.c.b16 %v3738, %v3736
    %v3883 = vpack.c.b16 %v3739, %v3737
    %v3884 = vpack.c.b16 %v3742, %v3740
    %v3885 = vpack.c.b16 %v3743, %v3741
    %v3886 = vpack.c.b16 %v3746, %v3744
    %v3887 = vpack.c.b16 %v3747, %v3745
    %v3888 = vpack.c.b16 %v3750, %v3748
    %v3889 = vpack.c.b16 %v3751, %v3749
    %v3890 = vpack.c.b16 %v3754, %v3752
    %v3891 = vpack.c.b16 %v3755, %v3753
    %v3892 = vpack.c.b16 %v3758, %v3756
    %v3893 = vpack.c.b16 %v3759, %v3757
    %v3894 = vpack.c.b16 %v3762, %v3760
    %v3895 = vpack.c.b16 %v3763, %v3761
    %v3896 = vpack.c.b16 %v3766, %v3764
    %v3897 = vpack.c.b16 %v3767, %v3765
    %v3898 = vpack.c.b16 %v3770, %v3768
    %v3899 = vpack.c.b16 %v3771, %v3769
    %4028 = vmatprep.subr.bf16.mxu0 %v3787
    %4029 = vmatpush1.bf16.msra.mxu0 %v3786
    %4030 = vmatprep.subr.bf16.mxu0 %v3785
    %4031 = vmatpush1.bf16.msra.mxu0 %v3784
    %4032 = vmatprep.subr.bf16.mxu0 %v3783
    %4033 = vmatpush1.bf16.msra.mxu0 %v3782
    %4034 = vmatprep.subr.bf16.mxu0 %v3781
    %4035 = vmatpush1.bf16.msra.mxu0 %v3780
    %4036 = vmatprep.subr.bf16.mxu0 %v3779
    %4037 = vmatpush1.bf16.msra.mxu0 %v3778
    %4038 = vmatprep.subr.bf16.mxu0 %v3777
    %4039 = vmatpush1.bf16.msra.mxu0 %v3776
    %4040 = vmatprep.subr.bf16.mxu0 %v3775
    %4041 = vmatpush1.bf16.msra.mxu0 %v3774
    %4042 = vmatprep.subr.bf16.mxu0 %v3773
    %4043 = vmatpush1.bf16.msra.mxu0 %v3772
    %4044 = vmatprep.subr.bf16.mxu0 %v3803
    %4045 = vmatpush2.bf16.msra.mxu0 %v3802
    %4046 = vmatprep.subr.bf16.mxu0 %v3801
    %4047 = vmatpush2.bf16.msra.mxu0 %v3800
    %4048 = vmatprep.subr.bf16.mxu0 %v3799
    %4049 = vmatpush2.bf16.msra.mxu0 %v3798
    %4050 = vmatprep.subr.bf16.mxu0 %v3797
    %4051 = vmatpush2.bf16.msra.mxu0 %v3796
    %4052 = vmatprep.subr.bf16.mxu0 %v3795
    %4053 = vmatpush2.bf16.msra.mxu0 %v3794
    %4054 = vmatprep.subr.bf16.mxu0 %v3793
    %4055 = vmatpush2.bf16.msra.mxu0 %v3792
    %4056 = vmatprep.subr.bf16.mxu0 %v3791
    %4057 = vmatpush2.bf16.msra.mxu0 %v3790
    %4058 = vmatprep.subr.bf16.mxu0 %v3789
    %4059 = vmatpush2.bf16.msra.mxu0 %v3788
    %4060 = vmatprep.mubr.bf16.mxu0 %v3241
    %4061 = vmatmul.mubr.bf16.gmra.mxu0 %v3240
    %v4062 = vpop.f32.mrf.mxu0
    %v4063 = vadd.f32 %v3381, %v4062
    %v4064 = vpop.f32.mrf.mxu0
    %v4065 = vadd.f32 %v3385, %v4064
    %v4066 = vpop.f32.mrf.mxu0
    %v4067 = vadd.f32 %v3381, %v4066
    %v4068 = vpop.f32.mrf.mxu0
    %v4069 = vadd.f32 %v3385, %v4068
    %4070 = vdwg.mxu0
    %4071 = vmatprep.subr.bf16.mxu0 %v3819
    %4072 = vmatpush1.bf16.msra.mxu0 %v3818
    %4073 = vmatprep.subr.bf16.mxu0 %v3817
    %4074 = vmatpush1.bf16.msra.mxu0 %v3816
    %4075 = vmatprep.subr.bf16.mxu0 %v3815
    %4076 = vmatpush1.bf16.msra.mxu0 %v3814
    %4077 = vmatprep.subr.bf16.mxu0 %v3813
    %4078 = vmatpush1.bf16.msra.mxu0 %v3812
    %4079 = vmatprep.subr.bf16.mxu0 %v3811
    %4080 = vmatpush1.bf16.msra.mxu0 %v3810
    %4081 = vmatprep.subr.bf16.mxu0 %v3809
    %4082 = vmatpush1.bf16.msra.mxu0 %v3808
    %4083 = vmatprep.subr.bf16.mxu0 %v3807
    %4084 = vmatpush1.bf16.msra.mxu0 %v3806
    %4085 = vmatprep.subr.bf16.mxu0 %v3805
    %4086 = vmatpush1.bf16.msra.mxu0 %v3804
    %4087 = vmatprep.subr.bf16.mxu0 %v3835
    %4088 = vmatpush2.bf16.msra.mxu0 %v3834
    %4089 = vmatprep.subr.bf16.mxu0 %v3833
    %4090 = vmatpush2.bf16.msra.mxu0 %v3832
    %4091 = vmatprep.subr.bf16.mxu0 %v3831
    %4092 = vmatpush2.bf16.msra.mxu0 %v3830
    %4093 = vmatprep.subr.bf16.mxu0 %v3829
    %4094 = vmatpush2.bf16.msra.mxu0 %v3828
    %4095 = vmatprep.subr.bf16.mxu0 %v3827
    %4096 = vmatpush2.bf16.msra.mxu0 %v3826
    %4097 = vmatprep.subr.bf16.mxu0 %v3825
    %4098 = vmatpush2.bf16.msra.mxu0 %v3824
    %4099 = vmatprep.subr.bf16.mxu0 %v3823
    %4100 = vmatpush2.bf16.msra.mxu0 %v3822
    %4101 = vmatprep.subr.bf16.mxu0 %v3821
    %4102 = vmatpush2.bf16.msra.mxu0 %v3820
    %4103 = vmatprep.mubr.bf16.mxu0 %v3243
    %4104 = vmatmul.mubr.bf16.gmra.mxu0 %v3242
    %v4105 = vpop.f32.mrf.mxu0
    %v4106 = vadd.f32 %v4063, %v4105
    %v4107 = vpop.f32.mrf.mxu0
    %v4108 = vadd.f32 %v4065, %v4107
    %v4109 = vpop.f32.mrf.mxu0
    %v4110 = vadd.f32 %v4067, %v4109
    %v4111 = vpop.f32.mrf.mxu0
    %v4112 = vadd.f32 %v4069, %v4111
    %4113 = vdwg.mxu0
    %4114 = vmatprep.subr.bf16.mxu0 %v3851
    %4115 = vmatpush1.bf16.msra.mxu0 %v3850
    %4116 = vmatprep.subr.bf16.mxu0 %v3849
    %4117 = vmatpush1.bf16.msra.mxu0 %v3848
    %4118 = vmatprep.subr.bf16.mxu0 %v3847
    %4119 = vmatpush1.bf16.msra.mxu0 %v3846
    %4120 = vmatprep.subr.bf16.mxu0 %v3845
    %4121 = vmatpush1.bf16.msra.mxu0 %v3844
    %4122 = vmatprep.subr.bf16.mxu0 %v3843
    %4123 = vmatpush1.bf16.msra.mxu0 %v3842
    %4124 = vmatprep.subr.bf16.mxu0 %v3841
    %4125 = vmatpush1.bf16.msra.mxu0 %v3840
    %4126 = vmatprep.subr.bf16.mxu0 %v3839
    %4127 = vmatpush1.bf16.msra.mxu0 %v3838
    %4128 = vmatprep.subr.bf16.mxu0 %v3837
    %4129 = vmatpush1.bf16.msra.mxu0 %v3836
    %4130 = vmatprep.subr.bf16.mxu0 %v3867
    %4131 = vmatpush2.bf16.msra.mxu0 %v3866
    %4132 = vmatprep.subr.bf16.mxu0 %v3865
    %4133 = vmatpush2.bf16.msra.mxu0 %v3864
    %4134 = vmatprep.subr.bf16.mxu0 %v3863
    %4135 = vmatpush2.bf16.msra.mxu0 %v3862
    %4136 = vmatprep.subr.bf16.mxu0 %v3861
    %4137 = vmatpush2.bf16.msra.mxu0 %v3860
    %4138 = vmatprep.subr.bf16.mxu0 %v3859
    %4139 = vmatpush2.bf16.msra.mxu0 %v3858
    %4140 = vmatprep.subr.bf16.mxu0 %v3857
    %4141 = vmatpush2.bf16.msra.mxu0 %v3856
    %4142 = vmatprep.subr.bf16.mxu0 %v3855
    %4143 = vmatpush2.bf16.msra.mxu0 %v3854
    %4144 = vmatprep.subr.bf16.mxu0 %v3853
    %4145 = vmatpush2.bf16.msra.mxu0 %v3852
    %4146 = vmatprep.mubr.bf16.mxu0 %v3245
    %4147 = vmatmul.mubr.bf16.gmra.mxu0 %v3244
    %v4148 = vpop.f32.mrf.mxu0
    %v4149 = vadd.f32 %v4106, %v4148
    %v4150 = vpop.f32.mrf.mxu0
    %v4151 = vadd.f32 %v4108, %v4150
    %v4152 = vpop.f32.mrf.mxu0
    %v4153 = vadd.f32 %v4110, %v4152
    %v4154 = vpop.f32.mrf.mxu0
    %v4155 = vadd.f32 %v4112, %v4154
    %4156 = vdwg.mxu0
    %4157 = vmatprep.subr.bf16.mxu0 %v3883
    %4158 = vmatpush1.bf16.msra.mxu0 %v3882
    %4159 = vmatprep.subr.bf16.mxu0 %v3881
    %4160 = vmatpush1.bf16.msra.mxu0 %v3880
    %4161 = vmatprep.subr.bf16.mxu0 %v3879
    %4162 = vmatpush1.bf16.msra.mxu0 %v3878
    %4163 = vmatprep.subr.bf16.mxu0 %v3877
    %4164 = vmatpush1.bf16.msra.mxu0 %v3876
    %4165 = vmatprep.subr.bf16.mxu0 %v3875
    %4166 = vmatpush1.bf16.msra.mxu0 %v3874
    %4167 = vmatprep.subr.bf16.mxu0 %v3873
    %4168 = vmatpush1.bf16.msra.mxu0 %v3872
    %4169 = vmatprep.subr.bf16.mxu0 %v3871
    %4170 = vmatpush1.bf16.msra.mxu0 %v3870
    %4171 = vmatprep.subr.bf16.mxu0 %v3869
    %4172 = vmatpush1.bf16.msra.mxu0 %v3868
    %4173 = vmatprep.subr.bf16.mxu0 %v3899
    %4174 = vmatpush2.bf16.msra.mxu0 %v3898
    %4175 = vmatprep.subr.bf16.mxu0 %v3897
    %4176 = vmatpush2.bf16.msra.mxu0 %v3896
    %4177 = vmatprep.subr.bf16.mxu0 %v3895
    %4178 = vmatpush2.bf16.msra.mxu0 %v3894
    %4179 = vmatprep.subr.bf16.mxu0 %v3893
    %4180 = vmatpush2.bf16.msra.mxu0 %v3892
    %4181 = vmatprep.subr.bf16.mxu0 %v3891
    %4182 = vmatpush2.bf16.msra.mxu0 %v3890
    %4183 = vmatprep.subr.bf16.mxu0 %v3889
    %4184 = vmatpush2.bf16.msra.mxu0 %v3888
    %4185 = vmatprep.subr.bf16.mxu0 %v3887
    %4186 = vmatpush2.bf16.msra.mxu0 %v3886
    %4187 = vmatprep.subr.bf16.mxu0 %v3885
    %4188 = vmatpush2.bf16.msra.mxu0 %v3884
    %4189 = vmatprep.mubr.bf16.mxu0 %v3247
    %4190 = vmatmul.mubr.bf16.gmra.mxu0 %v3246
    %v4191 = vpop.f32.mrf.mxu0
    %v4192 = vadd.f32 %v4149, %v4191
    %v4193 = vpop.f32.mrf.mxu0
    %v4194 = vadd.f32 %v4151, %v4193
    %v4195 = vpop.f32.mrf.mxu0
    %v4196 = vadd.f32 %v4153, %v4195
    %v4197 = vpop.f32.mrf.mxu0
    %v4198 = vadd.f32 %v4155, %v4197
    %4199 = vdwg.mxu0
    %v4200 = vmax.f32 %v4192, 0.0
    %v4201 = vmax.f32 %v4194, 0.0
    %v4202 = vmax.f32 %v4196, 0.0
    %v4203 = vmax.f32 %v4198, 0.0
    %v4204 = vpack.c.bf16 %v4202, %v4200
    %v4205 = vpack.c.bf16 %v4203, %v4201
    %v4206 = vld [vmem:[#allocation11] sm:$0xf]
    %v4207 = vld [vmem:[#allocation11 + $0x4] sm:$0xf]
    %v4208 = vld [vmem:[#allocation11 + $0x8] sm:$0xf]
    %v4209 = vld [vmem:[#allocation11 + $0xc] sm:$0xf]
    %v4210 = vld [vmem:[#allocation11 + $0x10] sm:$0xf]
    %v4211 = vld [vmem:[#allocation11 + $0x14] sm:$0xf]
    %v4212 = vld [vmem:[#allocation11 + $0x18] sm:$0xf]
    %v4213 = vld [vmem:[#allocation11 + $0x1c] sm:$0xf]
    %v4214 = vld [vmem:[#allocation11 + $0x20] sm:$0xf]
    %v4215 = vld [vmem:[#allocation11 + $0x24] sm:$0xf]
    %v4216 = vld [vmem:[#allocation11 + $0x28] sm:$0xf]
    %v4217 = vld [vmem:[#allocation11 + $0x2c] sm:$0xf]
    %v4218 = vld [vmem:[#allocation11 + $0x30] sm:$0xf]
    %v4219 = vld [vmem:[#allocation11 + $0x34] sm:$0xf]
    %v4220 = vld [vmem:[#allocation11 + $0x38] sm:$0xf]
    %v4221 = vld [vmem:[#allocation11 + $0x3c] sm:$0xf]
    %v4222 = vld [vmem:[#allocation11 + $0x40] sm:$0xf]
    %v4223 = vld [vmem:[#allocation11 + $0x44] sm:$0xf]
    %v4224 = vld [vmem:[#allocation11 + $0x48] sm:$0xf]
    %v4225 = vld [vmem:[#allocation11 + $0x4c] sm:$0xf]
    %v4226 = vld [vmem:[#allocation11 + $0x50] sm:$0xf]
    %v4227 = vld [vmem:[#allocation11 + $0x54] sm:$0xf]
    %v4228 = vld [vmem:[#allocation11 + $0x58] sm:$0xf]
    %v4229 = vld [vmem:[#allocation11 + $0x5c] sm:$0xf]
    %v4230 = vld [vmem:[#allocation11 + $0x60] sm:$0xf]
    %v4231 = vld [vmem:[#allocation11 + $0x64] sm:$0xf]
    %v4232 = vld [vmem:[#allocation11 + $0x68] sm:$0xf]
    %v4233 = vld [vmem:[#allocation11 + $0x6c] sm:$0xf]
    %v4234 = vld [vmem:[#allocation11 + $0x70] sm:$0xf]
    %v4235 = vld [vmem:[#allocation11 + $0x74] sm:$0xf]
    %v4236 = vld [vmem:[#allocation11 + $0x78] sm:$0xf]
    %v4237 = vld [vmem:[#allocation11 + $0x7c] sm:$0xf]
    %v4238 = vld [vmem:[#allocation13] sm:$0x1]
    %v4240 = vlaneseq
    %v4241 = vshrl.u32 %v4240, 7
    %v4242 = vsub.s32 0, %v4241
    %v4243 = vrot.slane %v4238, %v4242
    %v4277 = vunpack.c.l.b16 %v4206
    %v4278 = vunpack.c.l.b16 %v4207
    %v4279 = vunpack.c.l.b16 %v4208
    %v4280 = vunpack.c.l.b16 %v4209
    %v4281 = vunpack.c.l.b16 %v4210
    %v4282 = vunpack.c.l.b16 %v4211
    %v4283 = vunpack.c.l.b16 %v4212
    %v4284 = vunpack.c.l.b16 %v4213
    %v4285 = vunpack.c.l.b16 %v4214
    %v4286 = vunpack.c.l.b16 %v4215
    %v4287 = vunpack.c.l.b16 %v4216
    %v4288 = vunpack.c.l.b16 %v4217
    %v4289 = vunpack.c.l.b16 %v4218
    %v4290 = vunpack.c.l.b16 %v4219
    %v4291 = vunpack.c.l.b16 %v4220
    %v4292 = vunpack.c.l.b16 %v4221
    %v4293 = vunpack.c.l.b16 %v4222
    %v4294 = vunpack.c.l.b16 %v4223
    %v4295 = vunpack.c.l.b16 %v4224
    %v4296 = vunpack.c.l.b16 %v4225
    %v4297 = vunpack.c.l.b16 %v4226
    %v4298 = vunpack.c.l.b16 %v4227
    %v4299 = vunpack.c.l.b16 %v4228
    %v4300 = vunpack.c.l.b16 %v4229
    %v4301 = vunpack.c.l.b16 %v4230
    %v4302 = vunpack.c.l.b16 %v4231
    %v4303 = vunpack.c.l.b16 %v4232
    %v4304 = vunpack.c.l.b16 %v4233
    %v4305 = vunpack.c.l.b16 %v4234
    %v4306 = vunpack.c.l.b16 %v4235
    %v4307 = vunpack.c.l.b16 %v4236
    %v4308 = vunpack.c.l.b16 %v4237
    %v4309 = vpack.c.b16 %v4278, %v4277
    %v4310 = vpack.c.b16 %v4280, %v4279
    %v4311 = vpack.c.b16 %v4282, %v4281
    %v4312 = vpack.c.b16 %v4284, %v4283
    %v4313 = vpack.c.b16 %v4286, %v4285
    %v4314 = vpack.c.b16 %v4288, %v4287
    %v4315 = vpack.c.b16 %v4290, %v4289
    %v4316 = vpack.c.b16 %v4292, %v4291
    %v4317 = vpack.c.b16 %v4294, %v4293
    %v4318 = vpack.c.b16 %v4296, %v4295
    %v4319 = vpack.c.b16 %v4298, %v4297
    %v4320 = vpack.c.b16 %v4300, %v4299
    %v4321 = vpack.c.b16 %v4302, %v4301
    %v4322 = vpack.c.b16 %v4304, %v4303
    %v4323 = vpack.c.b16 %v4306, %v4305
    %v4324 = vpack.c.b16 %v4308, %v4307
    %4341 = vmatprep.subr.bf16.mxu0 0
    %4342 = vmatpush1.bf16.msra.mxu0 %v4316
    %4343 = vmatprep.subr.bf16.mxu0 0
    %4344 = vmatpush1.bf16.msra.mxu0 %v4315
    %4345 = vmatprep.subr.bf16.mxu0 0
    %4346 = vmatpush1.bf16.msra.mxu0 %v4314
    %4347 = vmatprep.subr.bf16.mxu0 0
    %4348 = vmatpush1.bf16.msra.mxu0 %v4313
    %4349 = vmatprep.subr.bf16.mxu0 0
    %4350 = vmatpush1.bf16.msra.mxu0 %v4312
    %4351 = vmatprep.subr.bf16.mxu0 0
    %4352 = vmatpush1.bf16.msra.mxu0 %v4311
    %4353 = vmatprep.subr.bf16.mxu0 0
    %4354 = vmatpush1.bf16.msra.mxu0 %v4310
    %4355 = vmatprep.subr.bf16.mxu0 0
    %4356 = vmatpush1.bf16.msra.mxu0 %v4309
    %4357 = vmatprep.subr.bf16.mxu0 0
    %4358 = vmatpush2.bf16.msra.mxu0 %v4324
    %4359 = vmatprep.subr.bf16.mxu0 0
    %4360 = vmatpush2.bf16.msra.mxu0 %v4323
    %4361 = vmatprep.subr.bf16.mxu0 0
    %4362 = vmatpush2.bf16.msra.mxu0 %v4322
    %4363 = vmatprep.subr.bf16.mxu0 0
    %4364 = vmatpush2.bf16.msra.mxu0 %v4321
    %4365 = vmatprep.subr.bf16.mxu0 0
    %4366 = vmatpush2.bf16.msra.mxu0 %v4320
    %4367 = vmatprep.subr.bf16.mxu0 0
    %4368 = vmatpush2.bf16.msra.mxu0 %v4319
    %4369 = vmatprep.subr.bf16.mxu0 0
    %4370 = vmatpush2.bf16.msra.mxu0 %v4318
    %4371 = vmatprep.subr.bf16.mxu0 0
    %4372 = vmatpush2.bf16.msra.mxu0 %v4317
    %4373 = vmatprep.mubr.bf16.mxu0 %v4205
    %4374 = vmatmul.mubr.bf16.gmra.mxu0 %v4204
    %v4375 = vpop.f32.mrf.mxu0
    %v4376 = vadd.f32 %v4243, %v4375
    %v4377 = vpop.f32.mrf.mxu0
    %v4378 = vpop.f32.mrf.mxu0
    %v4379 = vadd.f32 %v4243, %v4378
    %v4380 = vpop.f32.mrf.mxu0
    %4381 = vdwg.mxu0
    %4382 = vst [vmem:[#allocation14] sm:$0xff] %v4376
    %4383 = vst [vmem:[#allocation14 + $0x8] sm:$0xff] %v4379
    // Predicated region
    $region58: #{tpu_custom_call.1} parent=1 // pred_check
      _
    $region59: #{tpu_custom_call.1} parent=1 // pred_check_branch
      %4385 = sbr.rel (0) target = $region61
    $region60: #{tpu_custom_call.1} parent=1 // pred_region
      %s4387 = ssub.s32 256, 256
      %4388 = vsyncadd [#allocation4], %s4387
      %s4389 = sshll.u32 [#allocation14], 4
      %s4390 = int_to_ptr.vmem [resolvable:$true] %s4389
      %4395 = dma.vmem_to_hbm [thread:$0]  %s4390, 256, %s7, [#allocation4], 128, 128, 8
    $region61: #{tpu_custom_call.1} parent=1 // pred_fallthru
      _
    // Predicated region
    $region62: #{tpu_custom_call.1} parent=1 // pred_check
      _
    $region63: #{tpu_custom_call.1} parent=1 // pred_check_branch
      %4397 = sbr.rel (0) target = $region65
    $region64: #{tpu_custom_call.1} parent=1 // pred_region
      %4398 = dma.done [#allocation4], 256
    $region65: #{tpu_custom_call.1} parent=1 // pred_fallthru
      _
    %4399 = vsyncpa [#allocation3], 1
    %4400 = vsyncpa [#allocation6], 1
    %4401 = vsyncpa [#allocation9], 1
    %4402 = vsyncpa [#allocation12], 1
    %4403 = vsyncpa [#allocation4], 1

</llo_original>
